<compile_context>
chip_gen: v7x
topology: tpu7x:2x2x1
jax: 0.10.0
libtpu: 0.0.40
codegen_flags: <defaults>
</compile_context>

<pallas_src>
import functools

import jax
import jax.numpy as jnp
from jax import lax
from jax.experimental import pallas as pl
from jax.experimental.pallas import tpu as pltpu


def _fps_knn_kernel(xt_ref, out_ref, *, npoint, knn):
    """xt_ref: (BT, D, N) point features, N on lanes (coords are rows 0..2).
    out_ref: (BT, D, knn*npoint); column k*npoint + s = k-th NN of sample s."""
    BT, D, N = xt_ref.shape
    M = knn * npoint
    f32 = jnp.float32

    iota_lane = lax.broadcasted_iota(jnp.int32, (1, N), 1)   # point index n' (lanes)
    iota_sub = lax.broadcasted_iota(jnp.int32, (N, 1), 0)    # point index n  (sublanes)

    # Whole per-batch feature tiles kept as values (tiny: D x N fp32).
    xts = [xt_ref[bb].astype(f32) for bb in range(BT)]       # each (D, N)

    def stack_rows(rows):
        """Stack a list of (1, N) rows into (len(rows), N) with masked selects
        (pure VPU; avoids relying on sublane-concat support)."""
        P = len(rows)
        sub = lax.broadcasted_iota(jnp.int32, (P, 1), 0)
        acc = jnp.zeros((P, N), f32)
        for r, piece in enumerate(rows):
            acc = jnp.where(sub == r, piece, acc)
        return acc

    if BT == 1:
        xx, yy, zz = xts[0][0:1, :], xts[0][1:2, :], xts[0][2:3, :]   # (1, N)
    else:
        xx = stack_rows([t[0:1, :] for t in xts])                     # (BT, N)
        yy = stack_rows([t[1:2, :] for t in xts])
        zz = stack_rows([t[2:3, :] for t in xts])

    # ---------------- farthest point sampling (VPU + lane reduces only) ----------------
    # npoint/knn are small here -> static unrolling; at large trip counts switch
    # to lax.fori_loop(..., unroll=2-4) with scratch carriers.
    # TODO(synk): torch picks a random start index per batch (torch.randint);
    # here the start index is deterministically 0.
    distance = jnp.full((BT, N), 1e10, dtype=f32)
    farthest = jnp.zeros((BT, 1), dtype=jnp.int32)
    dist_rows = []                                  # npoint x (BT, N) fp32, vreg-resident
    for _ in range(npoint):
        sel = iota_lane == farthest                                         # (BT, N)
        cx = jnp.sum(jnp.where(sel, xx, 0.0), axis=1, keepdims=True)        # (BT, 1)
        cy = jnp.sum(jnp.where(sel, yy, 0.0), axis=1, keepdims=True)
        cz = jnp.sum(jnp.where(sel, zz, 0.0), axis=1, keepdims=True)
        d = (xx - cx) ** 2 + (yy - cy) ** 2 + (zz - cz) ** 2                # (BT, N) pure VPU
        dist_rows.append(d)
        distance = jnp.minimum(distance, d)
        mx = jnp.max(distance, axis=1, keepdims=True)                       # (BT, 1)
        farthest = jnp.min(jnp.where(distance == mx, iota_lane, jnp.int32(N)),
                           axis=1, keepdims=True)                           # first-occurrence argmax

    # ---------------- kNN via rank selection (independent compare blocks) ----------------
    eye = (iota_sub == iota_lane).astype(f32)                               # (N, N) identity
    # Exact transpose of the stacked distance rows through the MXU
    # (one-hot lhs at HIGHEST precision reproduces the fp32 rhs bit-exactly).
    d_stack = stack_rows([dist_rows[s][bb:bb + 1, :]
                          for s in range(npoint) for bb in range(BT)])      # (npoint*BT, N)
    d_t = lax.dot_general(eye, d_stack, (((1,), (1,)), ((), ())),
                          precision=lax.Precision.HIGHEST,
                          preferred_element_type=f32)                       # (N, npoint*BT)

    not_diag = iota_lane != iota_sub                                        # (N, N)
    tie_lower = iota_lane < iota_sub                                        # (N, N)

    # Column -> (k, s) maps of the (N, M) one-hot, built without integer div.
    iota_m = lax.broadcasted_iota(jnp.int32, (1, M), 1)
    k_col = jnp.zeros((1, M), jnp.int32)
    for k in range(1, knn):
        k_col = k_col + (iota_m >= k * npoint).astype(jnp.int32)            # m // npoint
    s_col = iota_m - npoint * k_col                                         # m %  npoint
    k_col_f = k_col.astype(f32)

    for bb in range(BT):
        # rank_rep[n, m] = rank of point n in the distance ordering of sample s_col[m].
        rank_rep = jnp.zeros((N, M), f32)
        for s in range(npoint):
            row = dist_rows[s][bb:bb + 1, :]                                # (1, N): d[s, n']
            col = d_t[:, s * BT + bb:s * BT + bb + 1]                       # (N, 1): d[s, n]
            # Stable order: strictly closer, or equal distance with smaller index.
            closer = not_diag & ((row < col) | ((row == col) & tie_lower))  # (N, N)
            rank_s = jnp.sum(closer.astype(f32), axis=1, keepdims=True)     # (N, 1)
            rank_rep = jnp.where(s_col == s, rank_s, rank_rep)
        onehot_t = (rank_rep == k_col_f).astype(f32)                        # (N, M) 0/1
        # Lane-dense exact gather: (D, N) @ (N, M) -> (D, M); one unmasked store.
        res = jnp.dot(xts[bb], onehot_t,
                      precision=lax.Precision.HIGHEST,
                      preferred_element_type=f32)                           # (D, M)
        out_ref[bb] = res.astype(out_ref.dtype)


def fps_knn_grouper(x, npoint, knn, *, batch_tile=1):
    """x: [B, N, 3+c] float -> grouped points [B, npoint, knn, 3+c]."""
    B, N, D = x.shape
    assert D >= 3 and knn <= N and npoint <= N
    assert B % batch_tile == 0
    M = knn * npoint
    # Single kernel input: features with N on the lane axis (coords = rows 0..2).
    x_t = jnp.transpose(x, (0, 2, 1))                                       # (B, D, N)
    kernel = functools.partial(_fps_knn_kernel, npoint=npoint, knn=knn)
    out = pl.pallas_call(
        kernel,
        out_shape=jax.ShapeDtypeStruct((B, D, M), x.dtype),
        grid_spec=pltpu.PrefetchScalarGridSpec(
            num_scalar_prefetch=0,
            grid=(B // batch_tile,),
            in_specs=[pl.BlockSpec((batch_tile, D, N), lambda b: (b, 0, 0))],
            out_specs=pl.BlockSpec((batch_tile, D, M), lambda b: (b, 0, 0)),
        ),
        compiler_params=pltpu.CompilerParams(
            dimension_semantics=("parallel",)),
    )(x_t)
    # Kernel columns are ordered k*npoint + s -> (B, D, knn, npoint) -> PyTorch
    # layout (B, npoint, knn, D).  Tiny output; plain-JAX glue.
    return jnp.transpose(out.reshape(B, D, knn, npoint), (0, 3, 2, 1))


def _reference(x, npoint, knn):
    """Pure-JAX reference of the same algorithm (FPS start index fixed to 0)."""
    B, N, _ = x.shape
    xyz = x[:, :, :3]

    def fps_one(xyz_b):
        distance = jnp.full((N,), 1e10, dtype=jnp.float32)
        farthest = jnp.int32(0)
        idxs = []
        for _ in range(npoint):
            idxs.append(farthest)
            centroid = xyz_b[farthest]
            d = jnp.sum((xyz_b - centroid) ** 2, axis=-1)
            distance = jnp.minimum(distance, d)
            farthest = jnp.argmax(distance).astype(jnp.int32)
        return jnp.stack(idxs)

    cent_idx = jax.vmap(fps_one)(xyz)                                    # (B, npoint)
    sampled = xyz[jnp.arange(B)[:, None], cent_idx]                      # (B, npoint, 3)
    d = jnp.sum((sampled[:, :, None, :] - xyz[:, None, :, :]) ** 2, -1)  # (B, npoint, N)
    knn_idx = jnp.argsort(d, axis=-1)[:, :, :knn]                        # (B, npoint, knn)
    return x[jnp.arange(B)[:, None, None], knn_idx]                      # (B, npoint, knn, D)


if __name__ == "__main__":
    B, N, C_EXTRA = 2, 64, 4          # x: [B, N, 3 + c]
    NPOINT, KNN = 8, 16               # FPSKNNGrouper(points=8, knn=16)

    key = jax.random.PRNGKey(0)
    x = jax.random.normal(key, (B, N, 3 + C_EXTRA), dtype=jnp.float32)

    grouped = jax.block_until_ready(fps_knn_grouper(x, NPOINT, KNN))

    assert grouped.shape == (B, NPOINT, KNN, 3 + C_EXTRA), grouped.shape
    assert bool(jnp.all(jnp.isfinite(grouped)))

    # Sanity 1: the first neighbour of each group is the sampled point itself,
    # i.e. a gathered row of x.
    first = grouped[:, :, 0, :]                                          # (B, NPOINT, D)
    diffs = jnp.min(
        jnp.max(jnp.abs(first[:, :, None, :] - x[:, None, :, :]), axis=-1), axis=-1)
    assert float(jnp.max(diffs)) < 1e-5, float(jnp.max(diffs))

    # Sanity 2: matches a pure-JAX implementation of the same algorithm.
    ref = _reference(x, NPOINT, KNN)
    assert float(jnp.max(jnp.abs(grouped - ref))) < 1e-5

    print("KERNEL_OK")
</pallas_src>

<mosaic_0001>
module attributes {stable_mosaic.version = 11 : i64} {
  func.func @_fps_knn_kernel(%arg0: i32, %arg1: memref<1x7x64xf32, #tpu.memory_space<vmem>>, %arg2: memref<1x7x128xf32, #tpu.memory_space<vmem>>) attributes {dimension_semantics = [#tpu.dimension_semantics<parallel>], iteration_bounds = array<i64: 2>, scalar_prefetch = 0 : i64, scratch_operands = 0 : i64, tpu.core_type = #tpu.core_type<tc>, window_params = [{transform_indices = @transform_0, window_bounds = array<i64: 1, 7, 64>}, {transform_indices = @transform_1, window_bounds = array<i64: 1, 7, 128>}]} {
    %0 = tpu.iota {dimensions = array<i32: 1>} : vector<1x64xi32>
    %1 = tpu.iota {dimensions = array<i32: 0>} : vector<64x1xi32>
    %c0 = arith.constant 0 : index
    %c0_0 = arith.constant 0 : index
    %c0_1 = arith.constant 0 : index
    %2 = vector.load %arg1[%c0, %c0_0, %c0_1] : memref<1x7x64xf32, #tpu.memory_space<vmem>>, vector<1x7x64xf32>
    %3 = vector.shape_cast %2 : vector<1x7x64xf32> to vector<7x64xf32>
    %4 = vector.extract_strided_slice %3 {offsets = [0, 0], sizes = [1, 64], strides = [1, 1]} : vector<7x64xf32> to vector<1x64xf32>
    %5 = vector.extract_strided_slice %3 {offsets = [1, 0], sizes = [1, 64], strides = [1, 1]} : vector<7x64xf32> to vector<1x64xf32>
    %6 = vector.extract_strided_slice %3 {offsets = [2, 0], sizes = [1, 64], strides = [1, 1]} : vector<7x64xf32> to vector<1x64xf32>
    %cst = arith.constant 1.000000e+10 : f32
    %7 = vector.broadcast %cst : f32 to vector<1x64xf32>
    %c0_i32 = arith.constant 0 : i32
    %8 = vector.broadcast %c0_i32 : i32 to vector<1x1xi32>
    %9 = vector.broadcast %8 : vector<1x1xi32> to vector<1x64xi32>
    %10 = arith.cmpi eq, %0, %9 : vector<1x64xi32>
    %cst_2 = arith.constant 0.000000e+00 : f32
    %11 = vector.broadcast %cst_2 : f32 to vector<1x64xf32>
    %12 = arith.select %10, %4, %11 : vector<1x64xi1>, vector<1x64xf32>
    %cst_3 = arith.constant dense<0.000000e+00> : vector<1xf32>
    %13 = vector.multi_reduction <add>, %12, %cst_3 [1] : vector<1x64xf32> to vector<1xf32>
    %14 = vector.shape_cast %13 : vector<1xf32> to vector<1x1xf32>
    %cst_4 = arith.constant 0.000000e+00 : f32
    %15 = vector.broadcast %cst_4 : f32 to vector<1x64xf32>
    %16 = arith.select %10, %5, %15 : vector<1x64xi1>, vector<1x64xf32>
    %cst_5 = arith.constant dense<0.000000e+00> : vector<1xf32>
    %17 = vector.multi_reduction <add>, %16, %cst_5 [1] : vector<1x64xf32> to vector<1xf32>
    %18 = vector.shape_cast %17 : vector<1xf32> to vector<1x1xf32>
    %cst_6 = arith.constant 0.000000e+00 : f32
    %19 = vector.broadcast %cst_6 : f32 to vector<1x64xf32>
    %20 = arith.select %10, %6, %19 : vector<1x64xi1>, vector<1x64xf32>
    %cst_7 = arith.constant dense<0.000000e+00> : vector<1xf32>
    %21 = vector.multi_reduction <add>, %20, %cst_7 [1] : vector<1x64xf32> to vector<1xf32>
    %22 = vector.shape_cast %21 : vector<1xf32> to vector<1x1xf32>
    %23 = vector.broadcast %14 : vector<1x1xf32> to vector<1x64xf32>
    %24 = arith.subf %4, %23 : vector<1x64xf32>
    %25 = arith.mulf %24, %24 : vector<1x64xf32>
    %26 = vector.broadcast %18 : vector<1x1xf32> to vector<1x64xf32>
    %27 = arith.subf %5, %26 : vector<1x64xf32>
    %28 = arith.mulf %27, %27 : vector<1x64xf32>
    %29 = arith.addf %25, %28 : vector<1x64xf32>
    %30 = vector.broadcast %22 : vector<1x1xf32> to vector<1x64xf32>
    %31 = arith.subf %6, %30 : vector<1x64xf32>
    %32 = arith.mulf %31, %31 : vector<1x64xf32>
    %33 = arith.addf %29, %32 : vector<1x64xf32>
    %34 = arith.minimumf %7, %33 : vector<1x64xf32>
    %cst_8 = arith.constant dense<0xFF800000> : vector<1xf32>
    %35 = vector.multi_reduction <maximumf>, %34, %cst_8 [1] : vector<1x64xf32> to vector<1xf32>
    %36 = vector.shape_cast %35 : vector<1xf32> to vector<1x1xf32>
    %37 = vector.broadcast %36 : vector<1x1xf32> to vector<1x64xf32>
    %38 = arith.cmpf oeq, %34, %37 : vector<1x64xf32>
    %c64_i32 = arith.constant 64 : i32
    %39 = vector.broadcast %c64_i32 : i32 to vector<1x64xi32>
    %40 = arith.select %38, %0, %39 : vector<1x64xi1>, vector<1x64xi32>
    %cst_9 = arith.constant dense<2147483647> : vector<1xi32>
    %41 = vector.multi_reduction <minsi>, %40, %cst_9 [1] : vector<1x64xi32> to vector<1xi32>
    %42 = vector.shape_cast %41 : vector<1xi32> to vector<1x1xi32>
    %43 = vector.broadcast %42 : vector<1x1xi32> to vector<1x64xi32>
    %44 = arith.cmpi eq, %0, %43 : vector<1x64xi32>
    %cst_10 = arith.constant 0.000000e+00 : f32
    %45 = vector.broadcast %cst_10 : f32 to vector<1x64xf32>
    %46 = arith.select %44, %4, %45 : vector<1x64xi1>, vector<1x64xf32>
    %cst_11 = arith.constant dense<0.000000e+00> : vector<1xf32>
    %47 = vector.multi_reduction <add>, %46, %cst_11 [1] : vector<1x64xf32> to vector<1xf32>
    %48 = vector.shape_cast %47 : vector<1xf32> to vector<1x1xf32>
    %cst_12 = arith.constant 0.000000e+00 : f32
    %49 = vector.broadcast %cst_12 : f32 to vector<1x64xf32>
    %50 = arith.select %44, %5, %49 : vector<1x64xi1>, vector<1x64xf32>
    %cst_13 = arith.constant dense<0.000000e+00> : vector<1xf32>
    %51 = vector.multi_reduction <add>, %50, %cst_13 [1] : vector<1x64xf32> to vector<1xf32>
    %52 = vector.shape_cast %51 : vector<1xf32> to vector<1x1xf32>
    %cst_14 = arith.constant 0.000000e+00 : f32
    %53 = vector.broadcast %cst_14 : f32 to vector<1x64xf32>
    %54 = arith.select %44, %6, %53 : vector<1x64xi1>, vector<1x64xf32>
    %cst_15 = arith.constant dense<0.000000e+00> : vector<1xf32>
    %55 = vector.multi_reduction <add>, %54, %cst_15 [1] : vector<1x64xf32> to vector<1xf32>
    %56 = vector.shape_cast %55 : vector<1xf32> to vector<1x1xf32>
    %57 = vector.broadcast %48 : vector<1x1xf32> to vector<1x64xf32>
    %58 = arith.subf %4, %57 : vector<1x64xf32>
    %59 = arith.mulf %58, %58 : vector<1x64xf32>
    %60 = vector.broadcast %52 : vector<1x1xf32> to vector<1x64xf32>
    %61 = arith.subf %5, %60 : vector<1x64xf32>
    %62 = arith.mulf %61, %61 : vector<1x64xf32>
    %63 = arith.addf %59, %62 : vector<1x64xf32>
    %64 = vector.broadcast %56 : vector<1x1xf32> to vector<1x64xf32>
    %65 = arith.subf %6, %64 : vector<1x64xf32>
    %66 = arith.mulf %65, %65 : vector<1x64xf32>
    %67 = arith.addf %63, %66 : vector<1x64xf32>
    %68 = arith.minimumf %34, %67 : vector<1x64xf32>
    %cst_16 = arith.constant dense<0xFF800000> : vector<1xf32>
    %69 = vector.multi_reduction <maximumf>, %68, %cst_16 [1] : vector<1x64xf32> to vector<1xf32>
    %70 = vector.shape_cast %69 : vector<1xf32> to vector<1x1xf32>
    %71 = vector.broadcast %70 : vector<1x1xf32> to vector<1x64xf32>
    %72 = arith.cmpf oeq, %68, %71 : vector<1x64xf32>
    %c64_i32_17 = arith.constant 64 : i32
    %73 = vector.broadcast %c64_i32_17 : i32 to vector<1x64xi32>
    %74 = arith.select %72, %0, %73 : vector<1x64xi1>, vector<1x64xi32>
    %cst_18 = arith.constant dense<2147483647> : vector<1xi32>
    %75 = vector.multi_reduction <minsi>, %74, %cst_18 [1] : vector<1x64xi32> to vector<1xi32>
    %76 = vector.shape_cast %75 : vector<1xi32> to vector<1x1xi32>
    %77 = vector.broadcast %76 : vector<1x1xi32> to vector<1x64xi32>
    %78 = arith.cmpi eq, %0, %77 : vector<1x64xi32>
    %cst_19 = arith.constant 0.000000e+00 : f32
    %79 = vector.broadcast %cst_19 : f32 to vector<1x64xf32>
    %80 = arith.select %78, %4, %79 : vector<1x64xi1>, vector<1x64xf32>
    %cst_20 = arith.constant dense<0.000000e+00> : vector<1xf32>
    %81 = vector.multi_reduction <add>, %80, %cst_20 [1] : vector<1x64xf32> to vector<1xf32>
    %82 = vector.shape_cast %81 : vector<1xf32> to vector<1x1xf32>
    %cst_21 = arith.constant 0.000000e+00 : f32
    %83 = vector.broadcast %cst_21 : f32 to vector<1x64xf32>
    %84 = arith.select %78, %5, %83 : vector<1x64xi1>, vector<1x64xf32>
    %cst_22 = arith.constant dense<0.000000e+00> : vector<1xf32>
    %85 = vector.multi_reduction <add>, %84, %cst_22 [1] : vector<1x64xf32> to vector<1xf32>
    %86 = vector.shape_cast %85 : vector<1xf32> to vector<1x1xf32>
    %cst_23 = arith.constant 0.000000e+00 : f32
    %87 = vector.broadcast %cst_23 : f32 to vector<1x64xf32>
    %88 = arith.select %78, %6, %87 : vector<1x64xi1>, vector<1x64xf32>
    %cst_24 = arith.constant dense<0.000000e+00> : vector<1xf32>
    %89 = vector.multi_reduction <add>, %88, %cst_24 [1] : vector<1x64xf32> to vector<1xf32>
    %90 = vector.shape_cast %89 : vector<1xf32> to vector<1x1xf32>
    %91 = vector.broadcast %82 : vector<1x1xf32> to vector<1x64xf32>
    %92 = arith.subf %4, %91 : vector<1x64xf32>
    %93 = arith.mulf %92, %92 : vector<1x64xf32>
    %94 = vector.broadcast %86 : vector<1x1xf32> to vector<1x64xf32>
    %95 = arith.subf %5, %94 : vector<1x64xf32>
    %96 = arith.mulf %95, %95 : vector<1x64xf32>
    %97 = arith.addf %93, %96 : vector<1x64xf32>
    %98 = vector.broadcast %90 : vector<1x1xf32> to vector<1x64xf32>
    %99 = arith.subf %6, %98 : vector<1x64xf32>
    %100 = arith.mulf %99, %99 : vector<1x64xf32>
    %101 = arith.addf %97, %100 : vector<1x64xf32>
    %102 = arith.minimumf %68, %101 : vector<1x64xf32>
    %cst_25 = arith.constant dense<0xFF800000> : vector<1xf32>
    %103 = vector.multi_reduction <maximumf>, %102, %cst_25 [1] : vector<1x64xf32> to vector<1xf32>
    %104 = vector.shape_cast %103 : vector<1xf32> to vector<1x1xf32>
    %105 = vector.broadcast %104 : vector<1x1xf32> to vector<1x64xf32>
    %106 = arith.cmpf oeq, %102, %105 : vector<1x64xf32>
    %c64_i32_26 = arith.constant 64 : i32
    %107 = vector.broadcast %c64_i32_26 : i32 to vector<1x64xi32>
    %108 = arith.select %106, %0, %107 : vector<1x64xi1>, vector<1x64xi32>
    %cst_27 = arith.constant dense<2147483647> : vector<1xi32>
    %109 = vector.multi_reduction <minsi>, %108, %cst_27 [1] : vector<1x64xi32> to vector<1xi32>
    %110 = vector.shape_cast %109 : vector<1xi32> to vector<1x1xi32>
    %111 = vector.broadcast %110 : vector<1x1xi32> to vector<1x64xi32>
    %112 = arith.cmpi eq, %0, %111 : vector<1x64xi32>
    %cst_28 = arith.constant 0.000000e+00 : f32
    %113 = vector.broadcast %cst_28 : f32 to vector<1x64xf32>
    %114 = arith.select %112, %4, %113 : vector<1x64xi1>, vector<1x64xf32>
    %cst_29 = arith.constant dense<0.000000e+00> : vector<1xf32>
    %115 = vector.multi_reduction <add>, %114, %cst_29 [1] : vector<1x64xf32> to vector<1xf32>
    %116 = vector.shape_cast %115 : vector<1xf32> to vector<1x1xf32>
    %cst_30 = arith.constant 0.000000e+00 : f32
    %117 = vector.broadcast %cst_30 : f32 to vector<1x64xf32>
    %118 = arith.select %112, %5, %117 : vector<1x64xi1>, vector<1x64xf32>
    %cst_31 = arith.constant dense<0.000000e+00> : vector<1xf32>
    %119 = vector.multi_reduction <add>, %118, %cst_31 [1] : vector<1x64xf32> to vector<1xf32>
    %120 = vector.shape_cast %119 : vector<1xf32> to vector<1x1xf32>
    %cst_32 = arith.constant 0.000000e+00 : f32
    %121 = vector.broadcast %cst_32 : f32 to vector<1x64xf32>
    %122 = arith.select %112, %6, %121 : vector<1x64xi1>, vector<1x64xf32>
    %cst_33 = arith.constant dense<0.000000e+00> : vector<1xf32>
    %123 = vector.multi_reduction <add>, %122, %cst_33 [1] : vector<1x64xf32> to vector<1xf32>
    %124 = vector.shape_cast %123 : vector<1xf32> to vector<1x1xf32>
    %125 = vector.broadcast %116 : vector<1x1xf32> to vector<1x64xf32>
    %126 = arith.subf %4, %125 : vector<1x64xf32>
    %127 = arith.mulf %126, %126 : vector<1x64xf32>
    %128 = vector.broadcast %120 : vector<1x1xf32> to vector<1x64xf32>
    %129 = arith.subf %5, %128 : vector<1x64xf32>
    %130 = arith.mulf %129, %129 : vector<1x64xf32>
    %131 = arith.addf %127, %130 : vector<1x64xf32>
    %132 = vector.broadcast %124 : vector<1x1xf32> to vector<1x64xf32>
    %133 = arith.subf %6, %132 : vector<1x64xf32>
    %134 = arith.mulf %133, %133 : vector<1x64xf32>
    %135 = arith.addf %131, %134 : vector<1x64xf32>
    %136 = arith.minimumf %102, %135 : vector<1x64xf32>
    %cst_34 = arith.constant dense<0xFF800000> : vector<1xf32>
    %137 = vector.multi_reduction <maximumf>, %136, %cst_34 [1] : vector<1x64xf32> to vector<1xf32>
    %138 = vector.shape_cast %137 : vector<1xf32> to vector<1x1xf32>
    %139 = vector.broadcast %138 : vector<1x1xf32> to vector<1x64xf32>
    %140 = arith.cmpf oeq, %136, %139 : vector<1x64xf32>
    %c64_i32_35 = arith.constant 64 : i32
    %141 = vector.broadcast %c64_i32_35 : i32 to vector<1x64xi32>
    %142 = arith.select %140, %0, %141 : vector<1x64xi1>, vector<1x64xi32>
    %cst_36 = arith.constant dense<2147483647> : vector<1xi32>
    %143 = vector.multi_reduction <minsi>, %142, %cst_36 [1] : vector<1x64xi32> to vector<1xi32>
    %144 = vector.shape_cast %143 : vector<1xi32> to vector<1x1xi32>
    %145 = vector.broadcast %144 : vector<1x1xi32> to vector<1x64xi32>
    %146 = arith.cmpi eq, %0, %145 : vector<1x64xi32>
    %cst_37 = arith.constant 0.000000e+00 : f32
    %147 = vector.broadcast %cst_37 : f32 to vector<1x64xf32>
    %148 = arith.select %146, %4, %147 : vector<1x64xi1>, vector<1x64xf32>
    %cst_38 = arith.constant dense<0.000000e+00> : vector<1xf32>
    %149 = vector.multi_reduction <add>, %148, %cst_38 [1] : vector<1x64xf32> to vector<1xf32>
    %150 = vector.shape_cast %149 : vector<1xf32> to vector<1x1xf32>
    %cst_39 = arith.constant 0.000000e+00 : f32
    %151 = vector.broadcast %cst_39 : f32 to vector<1x64xf32>
    %152 = arith.select %146, %5, %151 : vector<1x64xi1>, vector<1x64xf32>
    %cst_40 = arith.constant dense<0.000000e+00> : vector<1xf32>
    %153 = vector.multi_reduction <add>, %152, %cst_40 [1] : vector<1x64xf32> to vector<1xf32>
    %154 = vector.shape_cast %153 : vector<1xf32> to vector<1x1xf32>
    %cst_41 = arith.constant 0.000000e+00 : f32
    %155 = vector.broadcast %cst_41 : f32 to vector<1x64xf32>
    %156 = arith.select %146, %6, %155 : vector<1x64xi1>, vector<1x64xf32>
    %cst_42 = arith.constant dense<0.000000e+00> : vector<1xf32>
    %157 = vector.multi_reduction <add>, %156, %cst_42 [1] : vector<1x64xf32> to vector<1xf32>
    %158 = vector.shape_cast %157 : vector<1xf32> to vector<1x1xf32>
    %159 = vector.broadcast %150 : vector<1x1xf32> to vector<1x64xf32>
    %160 = arith.subf %4, %159 : vector<1x64xf32>
    %161 = arith.mulf %160, %160 : vector<1x64xf32>
    %162 = vector.broadcast %154 : vector<1x1xf32> to vector<1x64xf32>
    %163 = arith.subf %5, %162 : vector<1x64xf32>
    %164 = arith.mulf %163, %163 : vector<1x64xf32>
    %165 = arith.addf %161, %164 : vector<1x64xf32>
    %166 = vector.broadcast %158 : vector<1x1xf32> to vector<1x64xf32>
    %167 = arith.subf %6, %166 : vector<1x64xf32>
    %168 = arith.mulf %167, %167 : vector<1x64xf32>
    %169 = arith.addf %165, %168 : vector<1x64xf32>
    %170 = arith.minimumf %136, %169 : vector<1x64xf32>
    %cst_43 = arith.constant dense<0xFF800000> : vector<1xf32>
    %171 = vector.multi_reduction <maximumf>, %170, %cst_43 [1] : vector<1x64xf32> to vector<1xf32>
    %172 = vector.shape_cast %171 : vector<1xf32> to vector<1x1xf32>
    %173 = vector.broadcast %172 : vector<1x1xf32> to vector<1x64xf32>
    %174 = arith.cmpf oeq, %170, %173 : vector<1x64xf32>
    %c64_i32_44 = arith.constant 64 : i32
    %175 = vector.broadcast %c64_i32_44 : i32 to vector<1x64xi32>
    %176 = arith.select %174, %0, %175 : vector<1x64xi1>, vector<1x64xi32>
    %cst_45 = arith.constant dense<2147483647> : vector<1xi32>
    %177 = vector.multi_reduction <minsi>, %176, %cst_45 [1] : vector<1x64xi32> to vector<1xi32>
    %178 = vector.shape_cast %177 : vector<1xi32> to vector<1x1xi32>
    %179 = vector.broadcast %178 : vector<1x1xi32> to vector<1x64xi32>
    %180 = arith.cmpi eq, %0, %179 : vector<1x64xi32>
    %cst_46 = arith.constant 0.000000e+00 : f32
    %181 = vector.broadcast %cst_46 : f32 to vector<1x64xf32>
    %182 = arith.select %180, %4, %181 : vector<1x64xi1>, vector<1x64xf32>
    %cst_47 = arith.constant dense<0.000000e+00> : vector<1xf32>
    %183 = vector.multi_reduction <add>, %182, %cst_47 [1] : vector<1x64xf32> to vector<1xf32>
    %184 = vector.shape_cast %183 : vector<1xf32> to vector<1x1xf32>
    %cst_48 = arith.constant 0.000000e+00 : f32
    %185 = vector.broadcast %cst_48 : f32 to vector<1x64xf32>
    %186 = arith.select %180, %5, %185 : vector<1x64xi1>, vector<1x64xf32>
    %cst_49 = arith.constant dense<0.000000e+00> : vector<1xf32>
    %187 = vector.multi_reduction <add>, %186, %cst_49 [1] : vector<1x64xf32> to vector<1xf32>
    %188 = vector.shape_cast %187 : vector<1xf32> to vector<1x1xf32>
    %cst_50 = arith.constant 0.000000e+00 : f32
    %189 = vector.broadcast %cst_50 : f32 to vector<1x64xf32>
    %190 = arith.select %180, %6, %189 : vector<1x64xi1>, vector<1x64xf32>
    %cst_51 = arith.constant dense<0.000000e+00> : vector<1xf32>
    %191 = vector.multi_reduction <add>, %190, %cst_51 [1] : vector<1x64xf32> to vector<1xf32>
    %192 = vector.shape_cast %191 : vector<1xf32> to vector<1x1xf32>
    %193 = vector.broadcast %184 : vector<1x1xf32> to vector<1x64xf32>
    %194 = arith.subf %4, %193 : vector<1x64xf32>
    %195 = arith.mulf %194, %194 : vector<1x64xf32>
    %196 = vector.broadcast %188 : vector<1x1xf32> to vector<1x64xf32>
    %197 = arith.subf %5, %196 : vector<1x64xf32>
    %198 = arith.mulf %197, %197 : vector<1x64xf32>
    %199 = arith.addf %195, %198 : vector<1x64xf32>
    %200 = vector.broadcast %192 : vector<1x1xf32> to vector<1x64xf32>
    %201 = arith.subf %6, %200 : vector<1x64xf32>
    %202 = arith.mulf %201, %201 : vector<1x64xf32>
    %203 = arith.addf %199, %202 : vector<1x64xf32>
    %204 = arith.minimumf %170, %203 : vector<1x64xf32>
    %cst_52 = arith.constant dense<0xFF800000> : vector<1xf32>
    %205 = vector.multi_reduction <maximumf>, %204, %cst_52 [1] : vector<1x64xf32> to vector<1xf32>
    %206 = vector.shape_cast %205 : vector<1xf32> to vector<1x1xf32>
    %207 = vector.broadcast %206 : vector<1x1xf32> to vector<1x64xf32>
    %208 = arith.cmpf oeq, %204, %207 : vector<1x64xf32>
    %c64_i32_53 = arith.constant 64 : i32
    %209 = vector.broadcast %c64_i32_53 : i32 to vector<1x64xi32>
    %210 = arith.select %208, %0, %209 : vector<1x64xi1>, vector<1x64xi32>
    %cst_54 = arith.constant dense<2147483647> : vector<1xi32>
    %211 = vector.multi_reduction <minsi>, %210, %cst_54 [1] : vector<1x64xi32> to vector<1xi32>
    %212 = vector.shape_cast %211 : vector<1xi32> to vector<1x1xi32>
    %213 = vector.broadcast %212 : vector<1x1xi32> to vector<1x64xi32>
    %214 = arith.cmpi eq, %0, %213 : vector<1x64xi32>
    %cst_55 = arith.constant 0.000000e+00 : f32
    %215 = vector.broadcast %cst_55 : f32 to vector<1x64xf32>
    %216 = arith.select %214, %4, %215 : vector<1x64xi1>, vector<1x64xf32>
    %cst_56 = arith.constant dense<0.000000e+00> : vector<1xf32>
    %217 = vector.multi_reduction <add>, %216, %cst_56 [1] : vector<1x64xf32> to vector<1xf32>
    %218 = vector.shape_cast %217 : vector<1xf32> to vector<1x1xf32>
    %cst_57 = arith.constant 0.000000e+00 : f32
    %219 = vector.broadcast %cst_57 : f32 to vector<1x64xf32>
    %220 = arith.select %214, %5, %219 : vector<1x64xi1>, vector<1x64xf32>
    %cst_58 = arith.constant dense<0.000000e+00> : vector<1xf32>
    %221 = vector.multi_reduction <add>, %220, %cst_58 [1] : vector<1x64xf32> to vector<1xf32>
    %222 = vector.shape_cast %221 : vector<1xf32> to vector<1x1xf32>
    %cst_59 = arith.constant 0.000000e+00 : f32
    %223 = vector.broadcast %cst_59 : f32 to vector<1x64xf32>
    %224 = arith.select %214, %6, %223 : vector<1x64xi1>, vector<1x64xf32>
    %cst_60 = arith.constant dense<0.000000e+00> : vector<1xf32>
    %225 = vector.multi_reduction <add>, %224, %cst_60 [1] : vector<1x64xf32> to vector<1xf32>
    %226 = vector.shape_cast %225 : vector<1xf32> to vector<1x1xf32>
    %227 = vector.broadcast %218 : vector<1x1xf32> to vector<1x64xf32>
    %228 = arith.subf %4, %227 : vector<1x64xf32>
    %229 = arith.mulf %228, %228 : vector<1x64xf32>
    %230 = vector.broadcast %222 : vector<1x1xf32> to vector<1x64xf32>
    %231 = arith.subf %5, %230 : vector<1x64xf32>
    %232 = arith.mulf %231, %231 : vector<1x64xf32>
    %233 = arith.addf %229, %232 : vector<1x64xf32>
    %234 = vector.broadcast %226 : vector<1x1xf32> to vector<1x64xf32>
    %235 = arith.subf %6, %234 : vector<1x64xf32>
    %236 = arith.mulf %235, %235 : vector<1x64xf32>
    %237 = arith.addf %233, %236 : vector<1x64xf32>
    %238 = arith.minimumf %204, %237 : vector<1x64xf32>
    %cst_61 = arith.constant dense<0xFF800000> : vector<1xf32>
    %239 = vector.multi_reduction <maximumf>, %238, %cst_61 [1] : vector<1x64xf32> to vector<1xf32>
    %240 = vector.shape_cast %239 : vector<1xf32> to vector<1x1xf32>
    %241 = vector.broadcast %240 : vector<1x1xf32> to vector<1x64xf32>
    %242 = arith.cmpf oeq, %238, %241 : vector<1x64xf32>
    %c64_i32_62 = arith.constant 64 : i32
    %243 = vector.broadcast %c64_i32_62 : i32 to vector<1x64xi32>
    %244 = arith.select %242, %0, %243 : vector<1x64xi1>, vector<1x64xi32>
    %cst_63 = arith.constant dense<2147483647> : vector<1xi32>
    %245 = vector.multi_reduction <minsi>, %244, %cst_63 [1] : vector<1x64xi32> to vector<1xi32>
    %246 = vector.shape_cast %245 : vector<1xi32> to vector<1x1xi32>
    %247 = vector.broadcast %246 : vector<1x1xi32> to vector<1x64xi32>
    %248 = arith.cmpi eq, %0, %247 : vector<1x64xi32>
    %cst_64 = arith.constant 0.000000e+00 : f32
    %249 = vector.broadcast %cst_64 : f32 to vector<1x64xf32>
    %250 = arith.select %248, %4, %249 : vector<1x64xi1>, vector<1x64xf32>
    %cst_65 = arith.constant dense<0.000000e+00> : vector<1xf32>
    %251 = vector.multi_reduction <add>, %250, %cst_65 [1] : vector<1x64xf32> to vector<1xf32>
    %252 = vector.shape_cast %251 : vector<1xf32> to vector<1x1xf32>
    %cst_66 = arith.constant 0.000000e+00 : f32
    %253 = vector.broadcast %cst_66 : f32 to vector<1x64xf32>
    %254 = arith.select %248, %5, %253 : vector<1x64xi1>, vector<1x64xf32>
    %cst_67 = arith.constant dense<0.000000e+00> : vector<1xf32>
    %255 = vector.multi_reduction <add>, %254, %cst_67 [1] : vector<1x64xf32> to vector<1xf32>
    %256 = vector.shape_cast %255 : vector<1xf32> to vector<1x1xf32>
    %cst_68 = arith.constant 0.000000e+00 : f32
    %257 = vector.broadcast %cst_68 : f32 to vector<1x64xf32>
    %258 = arith.select %248, %6, %257 : vector<1x64xi1>, vector<1x64xf32>
    %cst_69 = arith.constant dense<0.000000e+00> : vector<1xf32>
    %259 = vector.multi_reduction <add>, %258, %cst_69 [1] : vector<1x64xf32> to vector<1xf32>
    %260 = vector.shape_cast %259 : vector<1xf32> to vector<1x1xf32>
    %261 = vector.broadcast %252 : vector<1x1xf32> to vector<1x64xf32>
    %262 = arith.subf %4, %261 : vector<1x64xf32>
    %263 = arith.mulf %262, %262 : vector<1x64xf32>
    %264 = vector.broadcast %256 : vector<1x1xf32> to vector<1x64xf32>
    %265 = arith.subf %5, %264 : vector<1x64xf32>
    %266 = arith.mulf %265, %265 : vector<1x64xf32>
    %267 = arith.addf %263, %266 : vector<1x64xf32>
    %268 = vector.broadcast %260 : vector<1x1xf32> to vector<1x64xf32>
    %269 = arith.subf %6, %268 : vector<1x64xf32>
    %270 = arith.mulf %269, %269 : vector<1x64xf32>
    %271 = arith.addf %267, %270 : vector<1x64xf32>
    %272 = vector.broadcast %1 : vector<64x1xi32> to vector<64x64xi32>
    %273 = vector.broadcast %0 : vector<1x64xi32> to vector<64x64xi32>
    %274 = arith.cmpi eq, %272, %273 : vector<64x64xi32>
    %275 = arith.extui %274 : vector<64x64xi1> to vector<64x64xi32>
    %276 = arith.sitofp %275 : vector<64x64xi32> to vector<64x64xf32>
    %277 = tpu.iota {dimensions = array<i32: 0>} : vector<8x1xi32>
    %cst_70 = arith.constant 0.000000e+00 : f32
    %278 = vector.broadcast %cst_70 : f32 to vector<8x64xf32>
    %c0_i32_71 = arith.constant 0 : i32
    %279 = vector.broadcast %c0_i32_71 : i32 to vector<8x1xi32>
    %280 = arith.cmpi eq, %277, %279 : vector<8x1xi32>
    %281 = vector.shape_cast %280 : vector<8x1xi1> to vector<8x1xi1>
    %282 = vector.broadcast %281 : vector<8x1xi1> to vector<8x64xi1>
    %283 = vector.shape_cast %33 : vector<1x64xf32> to vector<1x64xf32>
    %284 = vector.broadcast %283 : vector<1x64xf32> to vector<8x64xf32>
    %285 = arith.select %282, %284, %278 : vector<8x64xi1>, vector<8x64xf32>
    %c1_i32 = arith.constant 1 : i32
    %286 = vector.broadcast %c1_i32 : i32 to vector<8x1xi32>
    %287 = arith.cmpi eq, %277, %286 : vector<8x1xi32>
    %288 = vector.shape_cast %287 : vector<8x1xi1> to vector<8x1xi1>
    %289 = vector.broadcast %288 : vector<8x1xi1> to vector<8x64xi1>
    %290 = vector.shape_cast %67 : vector<1x64xf32> to vector<1x64xf32>
    %291 = vector.broadcast %290 : vector<1x64xf32> to vector<8x64xf32>
    %292 = arith.select %289, %291, %285 : vector<8x64xi1>, vector<8x64xf32>
    %c2_i32 = arith.constant 2 : i32
    %293 = vector.broadcast %c2_i32 : i32 to vector<8x1xi32>
    %294 = arith.cmpi eq, %277, %293 : vector<8x1xi32>
    %295 = vector.shape_cast %294 : vector<8x1xi1> to vector<8x1xi1>
    %296 = vector.broadcast %295 : vector<8x1xi1> to vector<8x64xi1>
    %297 = vector.shape_cast %101 : vector<1x64xf32> to vector<1x64xf32>
    %298 = vector.broadcast %297 : vector<1x64xf32> to vector<8x64xf32>
    %299 = arith.select %296, %298, %292 : vector<8x64xi1>, vector<8x64xf32>
    %c3_i32 = arith.constant 3 : i32
    %300 = vector.broadcast %c3_i32 : i32 to vector<8x1xi32>
    %301 = arith.cmpi eq, %277, %300 : vector<8x1xi32>
    %302 = vector.shape_cast %301 : vector<8x1xi1> to vector<8x1xi1>
    %303 = vector.broadcast %302 : vector<8x1xi1> to vector<8x64xi1>
    %304 = vector.shape_cast %135 : vector<1x64xf32> to vector<1x64xf32>
    %305 = vector.broadcast %304 : vector<1x64xf32> to vector<8x64xf32>
    %306 = arith.select %303, %305, %299 : vector<8x64xi1>, vector<8x64xf32>
    %c4_i32 = arith.constant 4 : i32
    %307 = vector.broadcast %c4_i32 : i32 to vector<8x1xi32>
    %308 = arith.cmpi eq, %277, %307 : vector<8x1xi32>
    %309 = vector.shape_cast %308 : vector<8x1xi1> to vector<8x1xi1>
    %310 = vector.broadcast %309 : vector<8x1xi1> to vector<8x64xi1>
    %311 = vector.shape_cast %169 : vector<1x64xf32> to vector<1x64xf32>
    %312 = vector.broadcast %311 : vector<1x64xf32> to vector<8x64xf32>
    %313 = arith.select %310, %312, %306 : vector<8x64xi1>, vector<8x64xf32>
    %c5_i32 = arith.constant 5 : i32
    %314 = vector.broadcast %c5_i32 : i32 to vector<8x1xi32>
    %315 = arith.cmpi eq, %277, %314 : vector<8x1xi32>
    %316 = vector.shape_cast %315 : vector<8x1xi1> to vector<8x1xi1>
    %317 = vector.broadcast %316 : vector<8x1xi1> to vector<8x64xi1>
    %318 = vector.shape_cast %203 : vector<1x64xf32> to vector<1x64xf32>
    %319 = vector.broadcast %318 : vector<1x64xf32> to vector<8x64xf32>
    %320 = arith.select %317, %319, %313 : vector<8x64xi1>, vector<8x64xf32>
    %c6_i32 = arith.constant 6 : i32
    %321 = vector.broadcast %c6_i32 : i32 to vector<8x1xi32>
    %322 = arith.cmpi eq, %277, %321 : vector<8x1xi32>
    %323 = vector.shape_cast %322 : vector<8x1xi1> to vector<8x1xi1>
    %324 = vector.broadcast %323 : vector<8x1xi1> to vector<8x64xi1>
    %325 = vector.shape_cast %237 : vector<1x64xf32> to vector<1x64xf32>
    %326 = vector.broadcast %325 : vector<1x64xf32> to vector<8x64xf32>
    %327 = arith.select %324, %326, %320 : vector<8x64xi1>, vector<8x64xf32>
    %c7_i32 = arith.constant 7 : i32
    %328 = vector.broadcast %c7_i32 : i32 to vector<8x1xi32>
    %329 = arith.cmpi eq, %277, %328 : vector<8x1xi32>
    %330 = vector.shape_cast %329 : vector<8x1xi1> to vector<8x1xi1>
    %331 = vector.broadcast %330 : vector<8x1xi1> to vector<8x64xi1>
    %332 = vector.shape_cast %271 : vector<1x64xf32> to vector<1x64xf32>
    %333 = vector.broadcast %332 : vector<1x64xf32> to vector<8x64xf32>
    %334 = arith.select %331, %333, %327 : vector<8x64xi1>, vector<8x64xf32>
    %cst_72 = arith.constant dense<0.000000e+00> : vector<64x8xf32>
    %335 = tpu.matmul %276, %334, %cst_72 {dimension_numbers = #tpu.dot_dimension_numbers<[1], [1], [0], [0], [0, 0, 1, 0], [], []>, precision = #tpu.contract_precision<fp32>} : vector<64x64xf32>, vector<8x64xf32>, vector<64x8xf32> -> vector<64x8xf32>
    %336 = vector.broadcast %0 : vector<1x64xi32> to vector<64x64xi32>
    %337 = vector.broadcast %1 : vector<64x1xi32> to vector<64x64xi32>
    %338 = arith.cmpi ne, %336, %337 : vector<64x64xi32>
    %339 = vector.broadcast %0 : vector<1x64xi32> to vector<64x64xi32>
    %340 = vector.broadcast %1 : vector<64x1xi32> to vector<64x64xi32>
    %341 = arith.cmpi slt, %339, %340 : vector<64x64xi32>
    %342 = tpu.iota {dimensions = array<i32: 1>} : vector<1x128xi32>
    %c0_i32_73 = arith.constant 0 : i32
    %343 = vector.broadcast %c0_i32_73 : i32 to vector<1x128xi32>
    %c8_i32 = arith.constant 8 : i32
    %344 = vector.broadcast %c8_i32 : i32 to vector<1x128xi32>
    %345 = arith.cmpi sge, %342, %344 : vector<1x128xi32>
    %346 = arith.extui %345 : vector<1x128xi1> to vector<1x128xi32>
    %347 = arith.addi %343, %346 : vector<1x128xi32>
    %c16_i32 = arith.constant 16 : i32
    %348 = vector.broadcast %c16_i32 : i32 to vector<1x128xi32>
    %349 = arith.cmpi sge, %342, %348 : vector<1x128xi32>
    %350 = arith.extui %349 : vector<1x128xi1> to vector<1x128xi32>
    %351 = arith.addi %347, %350 : vector<1x128xi32>
    %c24_i32 = arith.constant 24 : i32
    %352 = vector.broadcast %c24_i32 : i32 to vector<1x128xi32>
    %353 = arith.cmpi sge, %342, %352 : vector<1x128xi32>
    %354 = arith.extui %353 : vector<1x128xi1> to vector<1x128xi32>
    %355 = arith.addi %351, %354 : vector<1x128xi32>
    %c32_i32 = arith.constant 32 : i32
    %356 = vector.broadcast %c32_i32 : i32 to vector<1x128xi32>
    %357 = arith.cmpi sge, %342, %356 : vector<1x128xi32>
    %358 = arith.extui %357 : vector<1x128xi1> to vector<1x128xi32>
    %359 = arith.addi %355, %358 : vector<1x128xi32>
    %c40_i32 = arith.constant 40 : i32
    %360 = vector.broadcast %c40_i32 : i32 to vector<1x128xi32>
    %361 = arith.cmpi sge, %342, %360 : vector<1x128xi32>
    %362 = arith.extui %361 : vector<1x128xi1> to vector<1x128xi32>
    %363 = arith.addi %359, %362 : vector<1x128xi32>
    %c48_i32 = arith.constant 48 : i32
    %364 = vector.broadcast %c48_i32 : i32 to vector<1x128xi32>
    %365 = arith.cmpi sge, %342, %364 : vector<1x128xi32>
    %366 = arith.extui %365 : vector<1x128xi1> to vector<1x128xi32>
    %367 = arith.addi %363, %366 : vector<1x128xi32>
    %c56_i32 = arith.constant 56 : i32
    %368 = vector.broadcast %c56_i32 : i32 to vector<1x128xi32>
    %369 = arith.cmpi sge, %342, %368 : vector<1x128xi32>
    %370 = arith.extui %369 : vector<1x128xi1> to vector<1x128xi32>
    %371 = arith.addi %367, %370 : vector<1x128xi32>
    %c64_i32_74 = arith.constant 64 : i32
    %372 = vector.broadcast %c64_i32_74 : i32 to vector<1x128xi32>
    %373 = arith.cmpi sge, %342, %372 : vector<1x128xi32>
    %374 = arith.extui %373 : vector<1x128xi1> to vector<1x128xi32>
    %375 = arith.addi %371, %374 : vector<1x128xi32>
    %c72_i32 = arith.constant 72 : i32
    %376 = vector.broadcast %c72_i32 : i32 to vector<1x128xi32>
    %377 = arith.cmpi sge, %342, %376 : vector<1x128xi32>
    %378 = arith.extui %377 : vector<1x128xi1> to vector<1x128xi32>
    %379 = arith.addi %375, %378 : vector<1x128xi32>
    %c80_i32 = arith.constant 80 : i32
    %380 = vector.broadcast %c80_i32 : i32 to vector<1x128xi32>
    %381 = arith.cmpi sge, %342, %380 : vector<1x128xi32>
    %382 = arith.extui %381 : vector<1x128xi1> to vector<1x128xi32>
    %383 = arith.addi %379, %382 : vector<1x128xi32>
    %c88_i32 = arith.constant 88 : i32
    %384 = vector.broadcast %c88_i32 : i32 to vector<1x128xi32>
    %385 = arith.cmpi sge, %342, %384 : vector<1x128xi32>
    %386 = arith.extui %385 : vector<1x128xi1> to vector<1x128xi32>
    %387 = arith.addi %383, %386 : vector<1x128xi32>
    %c96_i32 = arith.constant 96 : i32
    %388 = vector.broadcast %c96_i32 : i32 to vector<1x128xi32>
    %389 = arith.cmpi sge, %342, %388 : vector<1x128xi32>
    %390 = arith.extui %389 : vector<1x128xi1> to vector<1x128xi32>
    %391 = arith.addi %387, %390 : vector<1x128xi32>
    %c104_i32 = arith.constant 104 : i32
    %392 = vector.broadcast %c104_i32 : i32 to vector<1x128xi32>
    %393 = arith.cmpi sge, %342, %392 : vector<1x128xi32>
    %394 = arith.extui %393 : vector<1x128xi1> to vector<1x128xi32>
    %395 = arith.addi %391, %394 : vector<1x128xi32>
    %c112_i32 = arith.constant 112 : i32
    %396 = vector.broadcast %c112_i32 : i32 to vector<1x128xi32>
    %397 = arith.cmpi sge, %342, %396 : vector<1x128xi32>
    %398 = arith.extui %397 : vector<1x128xi1> to vector<1x128xi32>
    %399 = arith.addi %395, %398 : vector<1x128xi32>
    %c120_i32 = arith.constant 120 : i32
    %400 = vector.broadcast %c120_i32 : i32 to vector<1x128xi32>
    %401 = arith.cmpi sge, %342, %400 : vector<1x128xi32>
    %402 = arith.extui %401 : vector<1x128xi1> to vector<1x128xi32>
    %403 = arith.addi %399, %402 : vector<1x128xi32>
    %c8_i32_75 = arith.constant 8 : i32
    %404 = vector.broadcast %c8_i32_75 : i32 to vector<1x128xi32>
    %405 = arith.muli %404, %403 : vector<1x128xi32>
    %406 = arith.subi %342, %405 : vector<1x128xi32>
    %407 = arith.sitofp %403 : vector<1x128xi32> to vector<1x128xf32>
    %cst_76 = arith.constant 0.000000e+00 : f32
    %408 = vector.broadcast %cst_76 : f32 to vector<64x128xf32>
    %409 = vector.extract_strided_slice %335 {offsets = [0, 0], sizes = [64, 1], strides = [1, 1]} : vector<64x8xf32> to vector<64x1xf32>
    %410 = vector.broadcast %33 : vector<1x64xf32> to vector<64x64xf32>
    %411 = vector.broadcast %409 : vector<64x1xf32> to vector<64x64xf32>
    %412 = arith.cmpf olt, %410, %411 : vector<64x64xf32>
    %413 = vector.broadcast %33 : vector<1x64xf32> to vector<64x64xf32>
    %414 = vector.broadcast %409 : vector<64x1xf32> to vector<64x64xf32>
    %415 = arith.cmpf oeq, %413, %414 : vector<64x64xf32>
    %416 = arith.andi %415, %341 : vector<64x64xi1>
    %417 = arith.ori %412, %416 : vector<64x64xi1>
    %418 = arith.andi %338, %417 : vector<64x64xi1>
    %419 = arith.extui %418 : vector<64x64xi1> to vector<64x64xi32>
    %420 = arith.sitofp %419 : vector<64x64xi32> to vector<64x64xf32>
    %cst_77 = arith.constant dense<0.000000e+00> : vector<64xf32>
    %421 = vector.multi_reduction <add>, %420, %cst_77 [1] : vector<64x64xf32> to vector<64xf32>
    %422 = vector.shape_cast %421 : vector<64xf32> to vector<64x1xf32>
    %c0_i32_78 = arith.constant 0 : i32
    %423 = vector.broadcast %c0_i32_78 : i32 to vector<1x128xi32>
    %424 = arith.cmpi eq, %406, %423 : vector<1x128xi32>
    %425 = vector.shape_cast %424 : vector<1x128xi1> to vector<1x128xi1>
    %426 = vector.broadcast %425 : vector<1x128xi1> to vector<64x128xi1>
    %427 = vector.shape_cast %422 : vector<64x1xf32> to vector<64x1xf32>
    %428 = vector.broadcast %427 : vector<64x1xf32> to vector<64x128xf32>
    %429 = arith.select %426, %428, %408 : vector<64x128xi1>, vector<64x128xf32>
    %430 = vector.extract_strided_slice %335 {offsets = [0, 1], sizes = [64, 1], strides = [1, 1]} : vector<64x8xf32> to vector<64x1xf32>
    %431 = vector.broadcast %67 : vector<1x64xf32> to vector<64x64xf32>
    %432 = vector.broadcast %430 : vector<64x1xf32> to vector<64x64xf32>
    %433 = arith.cmpf olt, %431, %432 : vector<64x64xf32>
    %434 = vector.broadcast %67 : vector<1x64xf32> to vector<64x64xf32>
    %435 = vector.broadcast %430 : vector<64x1xf32> to vector<64x64xf32>
    %436 = arith.cmpf oeq, %434, %435 : vector<64x64xf32>
    %437 = arith.andi %436, %341 : vector<64x64xi1>
    %438 = arith.ori %433, %437 : vector<64x64xi1>
    %439 = arith.andi %338, %438 : vector<64x64xi1>
    %440 = arith.extui %439 : vector<64x64xi1> to vector<64x64xi32>
    %441 = arith.sitofp %440 : vector<64x64xi32> to vector<64x64xf32>
    %cst_79 = arith.constant dense<0.000000e+00> : vector<64xf32>
    %442 = vector.multi_reduction <add>, %441, %cst_79 [1] : vector<64x64xf32> to vector<64xf32>
    %443 = vector.shape_cast %442 : vector<64xf32> to vector<64x1xf32>
    %c1_i32_80 = arith.constant 1 : i32
    %444 = vector.broadcast %c1_i32_80 : i32 to vector<1x128xi32>
    %445 = arith.cmpi eq, %406, %444 : vector<1x128xi32>
    %446 = vector.shape_cast %445 : vector<1x128xi1> to vector<1x128xi1>
    %447 = vector.broadcast %446 : vector<1x128xi1> to vector<64x128xi1>
    %448 = vector.shape_cast %443 : vector<64x1xf32> to vector<64x1xf32>
    %449 = vector.broadcast %448 : vector<64x1xf32> to vector<64x128xf32>
    %450 = arith.select %447, %449, %429 : vector<64x128xi1>, vector<64x128xf32>
    %451 = vector.extract_strided_slice %335 {offsets = [0, 2], sizes = [64, 1], strides = [1, 1]} : vector<64x8xf32> to vector<64x1xf32>
    %452 = vector.broadcast %101 : vector<1x64xf32> to vector<64x64xf32>
    %453 = vector.broadcast %451 : vector<64x1xf32> to vector<64x64xf32>
    %454 = arith.cmpf olt, %452, %453 : vector<64x64xf32>
    %455 = vector.broadcast %101 : vector<1x64xf32> to vector<64x64xf32>
    %456 = vector.broadcast %451 : vector<64x1xf32> to vector<64x64xf32>
    %457 = arith.cmpf oeq, %455, %456 : vector<64x64xf32>
    %458 = arith.andi %457, %341 : vector<64x64xi1>
    %459 = arith.ori %454, %458 : vector<64x64xi1>
    %460 = arith.andi %338, %459 : vector<64x64xi1>
    %461 = arith.extui %460 : vector<64x64xi1> to vector<64x64xi32>
    %462 = arith.sitofp %461 : vector<64x64xi32> to vector<64x64xf32>
    %cst_81 = arith.constant dense<0.000000e+00> : vector<64xf32>
    %463 = vector.multi_reduction <add>, %462, %cst_81 [1] : vector<64x64xf32> to vector<64xf32>
    %464 = vector.shape_cast %463 : vector<64xf32> to vector<64x1xf32>
    %c2_i32_82 = arith.constant 2 : i32
    %465 = vector.broadcast %c2_i32_82 : i32 to vector<1x128xi32>
    %466 = arith.cmpi eq, %406, %465 : vector<1x128xi32>
    %467 = vector.shape_cast %466 : vector<1x128xi1> to vector<1x128xi1>
    %468 = vector.broadcast %467 : vector<1x128xi1> to vector<64x128xi1>
    %469 = vector.shape_cast %464 : vector<64x1xf32> to vector<64x1xf32>
    %470 = vector.broadcast %469 : vector<64x1xf32> to vector<64x128xf32>
    %471 = arith.select %468, %470, %450 : vector<64x128xi1>, vector<64x128xf32>
    %472 = vector.extract_strided_slice %335 {offsets = [0, 3], sizes = [64, 1], strides = [1, 1]} : vector<64x8xf32> to vector<64x1xf32>
    %473 = vector.broadcast %135 : vector<1x64xf32> to vector<64x64xf32>
    %474 = vector.broadcast %472 : vector<64x1xf32> to vector<64x64xf32>
    %475 = arith.cmpf olt, %473, %474 : vector<64x64xf32>
    %476 = vector.broadcast %135 : vector<1x64xf32> to vector<64x64xf32>
    %477 = vector.broadcast %472 : vector<64x1xf32> to vector<64x64xf32>
    %478 = arith.cmpf oeq, %476, %477 : vector<64x64xf32>
    %479 = arith.andi %478, %341 : vector<64x64xi1>
    %480 = arith.ori %475, %479 : vector<64x64xi1>
    %481 = arith.andi %338, %480 : vector<64x64xi1>
    %482 = arith.extui %481 : vector<64x64xi1> to vector<64x64xi32>
    %483 = arith.sitofp %482 : vector<64x64xi32> to vector<64x64xf32>
    %cst_83 = arith.constant dense<0.000000e+00> : vector<64xf32>
    %484 = vector.multi_reduction <add>, %483, %cst_83 [1] : vector<64x64xf32> to vector<64xf32>
    %485 = vector.shape_cast %484 : vector<64xf32> to vector<64x1xf32>
    %c3_i32_84 = arith.constant 3 : i32
    %486 = vector.broadcast %c3_i32_84 : i32 to vector<1x128xi32>
    %487 = arith.cmpi eq, %406, %486 : vector<1x128xi32>
    %488 = vector.shape_cast %487 : vector<1x128xi1> to vector<1x128xi1>
    %489 = vector.broadcast %488 : vector<1x128xi1> to vector<64x128xi1>
    %490 = vector.shape_cast %485 : vector<64x1xf32> to vector<64x1xf32>
    %491 = vector.broadcast %490 : vector<64x1xf32> to vector<64x128xf32>
    %492 = arith.select %489, %491, %471 : vector<64x128xi1>, vector<64x128xf32>
    %493 = vector.extract_strided_slice %335 {offsets = [0, 4], sizes = [64, 1], strides = [1, 1]} : vector<64x8xf32> to vector<64x1xf32>
    %494 = vector.broadcast %169 : vector<1x64xf32> to vector<64x64xf32>
    %495 = vector.broadcast %493 : vector<64x1xf32> to vector<64x64xf32>
    %496 = arith.cmpf olt, %494, %495 : vector<64x64xf32>
    %497 = vector.broadcast %169 : vector<1x64xf32> to vector<64x64xf32>
    %498 = vector.broadcast %493 : vector<64x1xf32> to vector<64x64xf32>
    %499 = arith.cmpf oeq, %497, %498 : vector<64x64xf32>
    %500 = arith.andi %499, %341 : vector<64x64xi1>
    %501 = arith.ori %496, %500 : vector<64x64xi1>
    %502 = arith.andi %338, %501 : vector<64x64xi1>
    %503 = arith.extui %502 : vector<64x64xi1> to vector<64x64xi32>
    %504 = arith.sitofp %503 : vector<64x64xi32> to vector<64x64xf32>
    %cst_85 = arith.constant dense<0.000000e+00> : vector<64xf32>
    %505 = vector.multi_reduction <add>, %504, %cst_85 [1] : vector<64x64xf32> to vector<64xf32>
    %506 = vector.shape_cast %505 : vector<64xf32> to vector<64x1xf32>
    %c4_i32_86 = arith.constant 4 : i32
    %507 = vector.broadcast %c4_i32_86 : i32 to vector<1x128xi32>
    %508 = arith.cmpi eq, %406, %507 : vector<1x128xi32>
    %509 = vector.shape_cast %508 : vector<1x128xi1> to vector<1x128xi1>
    %510 = vector.broadcast %509 : vector<1x128xi1> to vector<64x128xi1>
    %511 = vector.shape_cast %506 : vector<64x1xf32> to vector<64x1xf32>
    %512 = vector.broadcast %511 : vector<64x1xf32> to vector<64x128xf32>
    %513 = arith.select %510, %512, %492 : vector<64x128xi1>, vector<64x128xf32>
    %514 = vector.extract_strided_slice %335 {offsets = [0, 5], sizes = [64, 1], strides = [1, 1]} : vector<64x8xf32> to vector<64x1xf32>
    %515 = vector.broadcast %203 : vector<1x64xf32> to vector<64x64xf32>
    %516 = vector.broadcast %514 : vector<64x1xf32> to vector<64x64xf32>
    %517 = arith.cmpf olt, %515, %516 : vector<64x64xf32>
    %518 = vector.broadcast %203 : vector<1x64xf32> to vector<64x64xf32>
    %519 = vector.broadcast %514 : vector<64x1xf32> to vector<64x64xf32>
    %520 = arith.cmpf oeq, %518, %519 : vector<64x64xf32>
    %521 = arith.andi %520, %341 : vector<64x64xi1>
    %522 = arith.ori %517, %521 : vector<64x64xi1>
    %523 = arith.andi %338, %522 : vector<64x64xi1>
    %524 = arith.extui %523 : vector<64x64xi1> to vector<64x64xi32>
    %525 = arith.sitofp %524 : vector<64x64xi32> to vector<64x64xf32>
    %cst_87 = arith.constant dense<0.000000e+00> : vector<64xf32>
    %526 = vector.multi_reduction <add>, %525, %cst_87 [1] : vector<64x64xf32> to vector<64xf32>
    %527 = vector.shape_cast %526 : vector<64xf32> to vector<64x1xf32>
    %c5_i32_88 = arith.constant 5 : i32
    %528 = vector.broadcast %c5_i32_88 : i32 to vector<1x128xi32>
    %529 = arith.cmpi eq, %406, %528 : vector<1x128xi32>
    %530 = vector.shape_cast %529 : vector<1x128xi1> to vector<1x128xi1>
    %531 = vector.broadcast %530 : vector<1x128xi1> to vector<64x128xi1>
    %532 = vector.shape_cast %527 : vector<64x1xf32> to vector<64x1xf32>
    %533 = vector.broadcast %532 : vector<64x1xf32> to vector<64x128xf32>
    %534 = arith.select %531, %533, %513 : vector<64x128xi1>, vector<64x128xf32>
    %535 = vector.extract_strided_slice %335 {offsets = [0, 6], sizes = [64, 1], strides = [1, 1]} : vector<64x8xf32> to vector<64x1xf32>
    %536 = vector.broadcast %237 : vector<1x64xf32> to vector<64x64xf32>
    %537 = vector.broadcast %535 : vector<64x1xf32> to vector<64x64xf32>
    %538 = arith.cmpf olt, %536, %537 : vector<64x64xf32>
    %539 = vector.broadcast %237 : vector<1x64xf32> to vector<64x64xf32>
    %540 = vector.broadcast %535 : vector<64x1xf32> to vector<64x64xf32>
    %541 = arith.cmpf oeq, %539, %540 : vector<64x64xf32>
    %542 = arith.andi %541, %341 : vector<64x64xi1>
    %543 = arith.ori %538, %542 : vector<64x64xi1>
    %544 = arith.andi %338, %543 : vector<64x64xi1>
    %545 = arith.extui %544 : vector<64x64xi1> to vector<64x64xi32>
    %546 = arith.sitofp %545 : vector<64x64xi32> to vector<64x64xf32>
    %cst_89 = arith.constant dense<0.000000e+00> : vector<64xf32>
    %547 = vector.multi_reduction <add>, %546, %cst_89 [1] : vector<64x64xf32> to vector<64xf32>
    %548 = vector.shape_cast %547 : vector<64xf32> to vector<64x1xf32>
    %c6_i32_90 = arith.constant 6 : i32
    %549 = vector.broadcast %c6_i32_90 : i32 to vector<1x128xi32>
    %550 = arith.cmpi eq, %406, %549 : vector<1x128xi32>
    %551 = vector.shape_cast %550 : vector<1x128xi1> to vector<1x128xi1>
    %552 = vector.broadcast %551 : vector<1x128xi1> to vector<64x128xi1>
    %553 = vector.shape_cast %548 : vector<64x1xf32> to vector<64x1xf32>
    %554 = vector.broadcast %553 : vector<64x1xf32> to vector<64x128xf32>
    %555 = arith.select %552, %554, %534 : vector<64x128xi1>, vector<64x128xf32>
    %556 = vector.extract_strided_slice %335 {offsets = [0, 7], sizes = [64, 1], strides = [1, 1]} : vector<64x8xf32> to vector<64x1xf32>
    %557 = vector.broadcast %271 : vector<1x64xf32> to vector<64x64xf32>
    %558 = vector.broadcast %556 : vector<64x1xf32> to vector<64x64xf32>
    %559 = arith.cmpf olt, %557, %558 : vector<64x64xf32>
    %560 = vector.broadcast %271 : vector<1x64xf32> to vector<64x64xf32>
    %561 = vector.broadcast %556 : vector<64x1xf32> to vector<64x64xf32>
    %562 = arith.cmpf oeq, %560, %561 : vector<64x64xf32>
    %563 = arith.andi %562, %341 : vector<64x64xi1>
    %564 = arith.ori %559, %563 : vector<64x64xi1>
    %565 = arith.andi %338, %564 : vector<64x64xi1>
    %566 = arith.extui %565 : vector<64x64xi1> to vector<64x64xi32>
    %567 = arith.sitofp %566 : vector<64x64xi32> to vector<64x64xf32>
    %cst_91 = arith.constant dense<0.000000e+00> : vector<64xf32>
    %568 = vector.multi_reduction <add>, %567, %cst_91 [1] : vector<64x64xf32> to vector<64xf32>
    %569 = vector.shape_cast %568 : vector<64xf32> to vector<64x1xf32>
    %c7_i32_92 = arith.constant 7 : i32
    %570 = vector.broadcast %c7_i32_92 : i32 to vector<1x128xi32>
    %571 = arith.cmpi eq, %406, %570 : vector<1x128xi32>
    %572 = vector.shape_cast %571 : vector<1x128xi1> to vector<1x128xi1>
    %573 = vector.broadcast %572 : vector<1x128xi1> to vector<64x128xi1>
    %574 = vector.shape_cast %569 : vector<64x1xf32> to vector<64x1xf32>
    %575 = vector.broadcast %574 : vector<64x1xf32> to vector<64x128xf32>
    %576 = arith.select %573, %575, %555 : vector<64x128xi1>, vector<64x128xf32>
    %577 = vector.broadcast %407 : vector<1x128xf32> to vector<64x128xf32>
    %578 = arith.cmpf oeq, %576, %577 : vector<64x128xf32>
    %579 = arith.extui %578 : vector<64x128xi1> to vector<64x128xi32>
    %580 = arith.sitofp %579 : vector<64x128xi32> to vector<64x128xf32>
    %cst_93 = arith.constant dense<0.000000e+00> : vector<7x128xf32>
    %581 = tpu.matmul %3, %580, %cst_93 {dimension_numbers = #tpu.dot_dimension_numbers<[1], [0], [0], [1], [0, 0, 1, 1], [], []>, precision = #tpu.contract_precision<fp32>} : vector<7x64xf32>, vector<64x128xf32>, vector<7x128xf32> -> vector<7x128xf32>
    %c0_94 = arith.constant 0 : index
    %c0_95 = arith.constant 0 : index
    %c0_96 = arith.constant 0 : index
    %582 = vector.load %arg2[%c0_94, %c0_95, %c0_96] : memref<1x7x128xf32, #tpu.memory_space<vmem>>, vector<1x7x128xf32>
    %583 = vector.shape_cast %582 : vector<1x7x128xf32> to vector<7x128xf32>
    %584 = vector.shape_cast %581 : vector<7x128xf32> to vector<1x7x128xf32>
    tpu.vector_store %arg2[%c0_94, %c0_95, %c0_96], %584 {strides = array<i32>} : memref<1x7x128xf32, #tpu.memory_space<vmem>>, vector<1x7x128xf32>,
    return
  }
  func.func @transform_0(%arg0: i32) -> (i32, i32, i32) {
    %c0_i32 = arith.constant 0 : i32
    %c0_i32_0 = arith.constant 0 : i32
    %c0_i32_1 = arith.constant 0 : i32
    return %arg0, %c0_i32, %c0_i32_0 : i32, i32, i32
  }
  func.func @transform_1(%arg0: i32) -> (i32, i32, i32) {
    %c0_i32 = arith.constant 0 : i32
    %c0_i32_0 = arith.constant 0 : i32
    %c0_i32_1 = arith.constant 0 : i32
    return %arg0, %c0_i32, %c0_i32_0 : i32, i32, i32
  }
}

</mosaic_0001>

<llo_original>
// kernel: tpu_custom_call.1
$region0: #{tpu_custom_call.1}
  #allocation0 [shape = 'u32[]', space=smem, size = 0x4, offset = 0x4, fixed_abs, tag = 'smem constant byte address 0x4 - core index']
  #allocation1 [shape = 'u32[144,128]{1,0:T(1,128)}', space=vmem, size = 0x12000, scoped, tag = 'internal scratch']
  %s0 = inlined_call_operand.vmem [shape: f32[2,7,64], index: 0, kind: input, shape index: {}]
  %s1 = inlined_call_operand.vmem [shape: f32[2,7,128], index: 1, kind: output, shape index: {}]
  %s2 = sld [smem:[#allocation0]]
  $region37: #{tpu_custom_call.1} parent=0
    _
  %s4 = ssub.s32 1, %s2
  %s5 = scalar_select 0, %s4, %s2
  loop: start=0, step=1, limit=4
  $region2: #{tpu_custom_call.1} parent=0 // loop_pre_header
    _
  $region3: #{tpu_custom_call.1} parent=0 // loop_header
    %s7 = sphi 0, %s11
    %p8 = scmp.ge.s32.totalorder %s7, 4
    %s17 = sphi 0, %s19
    %s20 = sphi 0, %s17
    %s21 = sphi 0, %s20
    %s37 = sphi 0, %s21
    %s43 = sphi 0, %s45
    %s46 = sphi 0, %s43
    %s47 = sphi 0, %s46
    %s63 = sphi 0, %s47
  $region4: #{tpu_custom_call.1} parent=0 // loop_header_branch
    %10 = sbr.rel (%p8) target = $region8
  $region5: #{tpu_custom_call.1} parent=0 // loop_body
    %s12 = ssub.s32 %s7, 1
    %s13 = ssub.s32 %s7, 2
    %s14 = sadd.s32 %s7, 1
    %s15 = ssub.s32 %s7, %s14
    %p16 = scmp.eq.s32.totalorder %s15, 0
    %s18 = sadd.s32 %s17, 1
    %s19 = scalar_select %p16, %s17, %s18
    %p22 = pneg %p16
    %p23 = scmp.eq.s32.totalorder %s7, 1
    %p24 = por %p22, %p23
    %p25 = scmp.ne.s32.totalorder %s17, %s20
    %p26 = scmp.eq.s32.totalorder %s7, 0
    %p27 = por %p25, %p26
    %p28 = scmp.ne.s32.totalorder %s17, %s20
    %p29 = scmp.eq.s32.totalorder %s12, 1
    %p30 = por %p28, %p29
    %p31 = scmp.ne.s32.totalorder %s20, %s21
    %p32 = scmp.eq.s32.totalorder %s12, 0
    %p33 = por %p31, %p32
    %p34 = scmp.ne.s32.totalorder %s20, %s21
    %p35 = scmp.eq.s32.totalorder %s13, 1
    %p36 = por %p34, %p35
    %p38 = scmp.ne.s32.totalorder %s21, %s37
    %p39 = scmp.eq.s32.totalorder %s13, 0
    %p40 = por %p38, %p39
    %s41 = ssub.s32 %s7, %s14
    %p42 = scmp.eq.s32.totalorder %s41, 0
    %s44 = sadd.s32 %s43, 1
    %s45 = scalar_select %p42, %s43, %s44
    %p48 = pneg %p42
    %p49 = scmp.eq.s32.totalorder %s7, 1
    %p50 = por %p48, %p49
    %p51 = scmp.ne.s32.totalorder %s43, %s46
    %p52 = scmp.eq.s32.totalorder %s7, 0
    %p53 = por %p51, %p52
    %p54 = scmp.ne.s32.totalorder %s43, %s46
    %p55 = scmp.eq.s32.totalorder %s12, 1
    %p56 = por %p54, %p55
    %p57 = scmp.ne.s32.totalorder %s46, %s47
    %p58 = scmp.eq.s32.totalorder %s12, 0
    %p59 = por %p57, %p58
    %p60 = scmp.ne.s32.totalorder %s46, %s47
    %p61 = scmp.eq.s32.totalorder %s13, 1
    %p62 = por %p60, %p61
    %p64 = scmp.ne.s32.totalorder %s47, %s63
    %p65 = scmp.eq.s32.totalorder %s13, 0
    %p66 = por %p64, %p65
    %p67 = scmp.le.s32.totalorder 1, %s7
    %p68 = scmp.lt.s32.totalorder %s7, 3
    %p69 = pnand %p67, %p68
    %p70 = pneg %p69
    // Predicated region
    $region9: #{tpu_custom_call.1} parent=5 // pred_check
      _
    $region10: #{tpu_custom_call.1} parent=5 // pred_check_branch
      %72 = sbr.rel (%p69) target = $region12
    $region11: #{tpu_custom_call.1} parent=5 // pred_region
      %s73 = ssub.s32 %s7, 1
    $region12: #{tpu_custom_call.1} parent=5 // pred_fallthru
      _
    %p74 = scmp.lt.s32.totalorder %s7, 2
    // Predicated region
    $region13: #{tpu_custom_call.1} parent=5 // pred_check
      %p75 = pneg %p74
    $region14: #{tpu_custom_call.1} parent=5 // pred_check_branch
      %77 = sbr.rel (%p75) target = $region16
    $region15: #{tpu_custom_call.1} parent=5 // pred_region
      // Predicated region
      $region17: #{tpu_custom_call.1} parent=15 // pred_check
        %p78 = pneg %p27
      $region18: #{tpu_custom_call.1} parent=15 // pred_check_branch
        %80 = sbr.rel (%p78) target = $region20
      $region19: #{tpu_custom_call.1} parent=15 // pred_region
        %p81 = scmp.lt.s32.totalorder %s7, 1
        %s82 = scalar_select %p81, %s7, 1
        %s83 = smul.addr %s82, 8
        %s84 = scalar_lea.vmem %s0, %s83
      $region20: #{tpu_custom_call.1} parent=15 // pred_fallthru
        _
    $region16: #{tpu_custom_call.1} parent=5 // pred_fallthru
      _
    %p85 = scmp.le.s32.totalorder 1, %s7
    %p86 = scmp.lt.s32.totalorder %s7, 3
    %p87 = pnand %p85, %p86
    %p88 = pneg %p87
    // Predicated region
    $region21: #{tpu_custom_call.1} parent=5 // pred_check
      _
    $region22: #{tpu_custom_call.1} parent=5 // pred_check_branch
      %90 = sbr.rel (%p87) target = $region24
    $region23: #{tpu_custom_call.1} parent=5 // pred_region
      %s91 = ssub.s32 %s7, 1
      %p92 = scmp.lt.s32.totalorder %s12, 1
      %s93 = scalar_select %p92, %s12, 1
      %s94 = smul.addr %s93, 8
      %s95 = scalar_lea.vmem %s0, %s94
      %p96 = pneg %p33
      %p97 = pneg %p30
      %p98 = pneg %p59
      %p99 = pneg %p56
      %p100 = scmp.lt.s32.totalorder %s12, 1
      %s101 = scalar_select %p100, %s12, 1
      %s102 = smul.addr %s101, 8
      %s103 = scalar_lea.vmem %s1, %s102
      %p104 = scmp.lt.s32.totalorder %s12, 1
      %s105 = scalar_select %p104, %s12, 1
      %s106 = smul.addr %s105, 8
      %s107 = scalar_lea.vmem %s0, %s106
      %p108 = scmp.lt.s32.totalorder %s12, 1
      %s109 = scalar_select %p108, %s12, 1
      %s110 = smul.addr %s109, 8
      %s111 = scalar_lea.vmem %s1, %s110
      %v112 = vlaneseq
      %v113 = vand.u32 %v112, 127
      %v114 = vlaneseq
      %v115 = vshrl.u32 %v114, 7
      %v116 = vadd.s32 %v115, 8
      %v117 = vadd.s32 %v115, 16
      %v118 = vadd.s32 %v115, 24
      %v119 = vadd.s32 %v115, 32
      %v120 = vadd.s32 %v115, 40
      %v121 = vadd.s32 %v115, 48
      %v122 = vadd.s32 %v115, 56
      %v123 = vld [vmem:[%s107] sm:$0x7f]
      %vm124 = vcmp.eq.s32.totalorder %v113, 0
      %v125 = vsel %vm124, %v123, 0.0
      %vm126 = vcmask 516096
      %v127 = vsel %vm126, %v125, 0.0
      %128 = vadd.xlane.f32.xlu0 %v127
      %v129 = vpop.xlane.xlu0 %128
      %vm130 = vcmask 517121
      %v131 = vsel %vm130, %v125, 0.0
      %132 = vadd.xlane.f32.xlu0 %v131
      %v133 = vpop.xlane.xlu0 %132
      %vm134 = vcmask 518146
      %v135 = vsel %vm134, %v125, 0.0
      %136 = vadd.xlane.f32.xlu0 %v135
      %v137 = vpop.xlane.xlu0 %136
      %v138 = vsub.f32 %v123, %v129
      %v139 = vmul.f32 %v138, %v138
      %v140 = vsub.f32 %v123, %v133
      %v141 = vmul.f32 %v140, %v140
      %v143 = vrot.slane %v141, 1
      %v145 = vadd.f32 %v139, %v143
      %v146 = vsub.f32 %v123, %v137
      %v147 = vmul.f32 %v146, %v146
      %v149 = vrot.slane %v147, 2
      %v151 = vadd.f32 %v145, %v149
      %v152 = vmin.f32 %v151, 1e+10
      %v153 = vsel %vm126, %v152, -inf
      %154 = vmax.xlane.f32.xlu0 %v153
      %v155 = vpop.xlane.xlu0 %154
      %vm156 = vcmp.eq.f32.partialorder %v152, %v155
      %v157 = vsel %vm156, %v113, 64
      %v158 = vsel %vm126, %v157, 2147483647
      %v159 = vand.u32 %v158, 65535
      %v160 = vshra.s32 %v158, 16
      %v161 = vcvt.s32.f32 %v159
      %v162 = vcvt.s32.f32 %v160
      %163 = vmin.xlane.f32.xlu0 %v162
      %v164 = vpop.xlane.xlu0 %163
      %vm165 = vcmp.eq.f32.partialorder %v162, %v164
      %v166 = vsel %vm165, %v161, inf
      %167 = vmin.xlane.f32.xlu0 %v166
      %v168 = vpop.xlane.xlu0 %167
      %v169 = vcvt.f32.s32 %v168
      %v170 = vcvt.f32.s32 %v164
      %v171 = vshll.u32 %v170, 16
      %v172 = vadd.s32 %v171, %v169
      %vm173 = vcmp.eq.s32.totalorder %v113, %v172
      %v174 = vsel %vm173, %v123, 0.0
      %v175 = vsel %vm126, %v174, 0.0
      %176 = vadd.xlane.f32.xlu0 %v175
      %v177 = vpop.xlane.xlu0 %176
      %v179 = vrot.slane %v123, 1
      %v181 = vsel %vm173, %v179, 0.0
      %v182 = vsel %vm126, %v181, 0.0
      %183 = vadd.xlane.f32.xlu0 %v182
      %v184 = vpop.xlane.xlu0 %183
      %v185 = vrot.slane %v123, 2
      %v187 = vsel %vm173, %v185, 0.0
      %v188 = vsel %vm126, %v187, 0.0
      %189 = vadd.xlane.f32.xlu0 %v188
      %v190 = vpop.xlane.xlu0 %189
      %v191 = vsub.f32 %v123, %v177
      %v192 = vmul.f32 %v191, %v191
      %v194 = vrot.slane %v184, 7
      %v196 = vsub.f32 %v123, %v194
      %v197 = vmul.f32 %v196, %v196
      %v199 = vrot.slane %v197, 1
      %v201 = vadd.f32 %v192, %v199
      %v203 = vrot.slane %v190, 6
      %v205 = vsub.f32 %v123, %v203
      %v206 = vmul.f32 %v205, %v205
      %v208 = vrot.slane %v206, 2
      %v210 = vadd.f32 %v201, %v208
      %v211 = vmin.f32 %v152, %v210
      %v212 = vsel %vm126, %v211, -inf
      %213 = vmax.xlane.f32.xlu0 %v212
      %v214 = vpop.xlane.xlu0 %213
      %vm215 = vcmp.eq.f32.partialorder %v211, %v214
      %v216 = vsel %vm215, %v113, 64
      %v217 = vsel %vm126, %v216, 2147483647
      %v218 = vand.u32 %v217, 65535
      %v219 = vshra.s32 %v217, 16
      %v220 = vcvt.s32.f32 %v218
      %v221 = vcvt.s32.f32 %v219
      %222 = vmin.xlane.f32.xlu0 %v221
      %v223 = vpop.xlane.xlu0 %222
      %vm224 = vcmp.eq.f32.partialorder %v221, %v223
      %v225 = vsel %vm224, %v220, inf
      %226 = vmin.xlane.f32.xlu0 %v225
      %v227 = vpop.xlane.xlu0 %226
      %v228 = vcvt.f32.s32 %v227
      %v229 = vcvt.f32.s32 %v223
      %v230 = vshll.u32 %v229, 16
      %v231 = vadd.s32 %v230, %v228
      %vm232 = vcmp.eq.s32.totalorder %v113, %v231
      %v233 = vsel %vm232, %v123, 0.0
      %v234 = vsel %vm126, %v233, 0.0
      %235 = vadd.xlane.f32.xlu0 %v234
      %v236 = vpop.xlane.xlu0 %235
      %v237 = vsel %vm232, %v179, 0.0
      %v238 = vsel %vm126, %v237, 0.0
      %239 = vadd.xlane.f32.xlu0 %v238
      %v240 = vpop.xlane.xlu0 %239
      %v241 = vsel %vm232, %v185, 0.0
      %v242 = vsel %vm126, %v241, 0.0
      %243 = vadd.xlane.f32.xlu0 %v242
      %v244 = vpop.xlane.xlu0 %243
      %v245 = vsub.f32 %v123, %v236
      %v246 = vmul.f32 %v245, %v245
      %v248 = vrot.slane %v240, 7
      %v250 = vsub.f32 %v123, %v248
      %v251 = vmul.f32 %v250, %v250
      %v253 = vrot.slane %v251, 1
      %v255 = vadd.f32 %v246, %v253
      %v257 = vrot.slane %v244, 6
      %v259 = vsub.f32 %v123, %v257
      %v260 = vmul.f32 %v259, %v259
      %v262 = vrot.slane %v260, 2
      %v264 = vadd.f32 %v255, %v262
      %v265 = vmin.f32 %v211, %v264
      %v266 = vsel %vm126, %v265, -inf
      %267 = vmax.xlane.f32.xlu0 %v266
      %v268 = vpop.xlane.xlu0 %267
      %vm269 = vcmp.eq.f32.partialorder %v265, %v268
      %v270 = vsel %vm269, %v113, 64
      %v271 = vsel %vm126, %v270, 2147483647
      %v272 = vand.u32 %v271, 65535
      %v273 = vshra.s32 %v271, 16
      %v274 = vcvt.s32.f32 %v272
      %v275 = vcvt.s32.f32 %v273
      %276 = vmin.xlane.f32.xlu0 %v275
      %v277 = vpop.xlane.xlu0 %276
      %vm278 = vcmp.eq.f32.partialorder %v275, %v277
      %v279 = vsel %vm278, %v274, inf
      %280 = vmin.xlane.f32.xlu0 %v279
      %v281 = vpop.xlane.xlu0 %280
      %v282 = vcvt.f32.s32 %v281
      %v283 = vcvt.f32.s32 %v277
      %v284 = vshll.u32 %v283, 16
      %v285 = vadd.s32 %v284, %v282
      %vm286 = vcmp.eq.s32.totalorder %v113, %v285
      %v287 = vsel %vm286, %v123, 0.0
      %v288 = vsel %vm126, %v287, 0.0
      %289 = vadd.xlane.f32.xlu0 %v288
      %v290 = vpop.xlane.xlu0 %289
      %v291 = vsel %vm286, %v179, 0.0
      %v292 = vsel %vm126, %v291, 0.0
      %293 = vadd.xlane.f32.xlu0 %v292
      %v294 = vpop.xlane.xlu0 %293
      %v295 = vsel %vm286, %v185, 0.0
      %v296 = vsel %vm126, %v295, 0.0
      %297 = vadd.xlane.f32.xlu0 %v296
      %v298 = vpop.xlane.xlu0 %297
      %v299 = vsub.f32 %v123, %v290
      %v300 = vmul.f32 %v299, %v299
      %v302 = vrot.slane %v294, 7
      %v304 = vsub.f32 %v123, %v302
      %v305 = vmul.f32 %v304, %v304
      %v307 = vrot.slane %v305, 1
      %v309 = vadd.f32 %v300, %v307
      %v311 = vrot.slane %v298, 6
      %v313 = vsub.f32 %v123, %v311
      %v314 = vmul.f32 %v313, %v313
      %v316 = vrot.slane %v314, 2
      %v318 = vadd.f32 %v309, %v316
      %v319 = vmin.f32 %v265, %v318
      %v320 = vsel %vm126, %v319, -inf
      %321 = vmax.xlane.f32.xlu0 %v320
      %v322 = vpop.xlane.xlu0 %321
      %vm323 = vcmp.eq.f32.partialorder %v319, %v322
      %v324 = vsel %vm323, %v113, 64
      %v325 = vsel %vm126, %v324, 2147483647
      %v326 = vand.u32 %v325, 65535
      %v327 = vshra.s32 %v325, 16
      %v328 = vcvt.s32.f32 %v326
      %v329 = vcvt.s32.f32 %v327
      %330 = vmin.xlane.f32.xlu0 %v329
      %v331 = vpop.xlane.xlu0 %330
      %vm332 = vcmp.eq.f32.partialorder %v329, %v331
      %v333 = vsel %vm332, %v328, inf
      %334 = vmin.xlane.f32.xlu0 %v333
      %v335 = vpop.xlane.xlu0 %334
      %v336 = vcvt.f32.s32 %v335
      %v337 = vcvt.f32.s32 %v331
      %v338 = vshll.u32 %v337, 16
      %v339 = vadd.s32 %v338, %v336
      %vm340 = vcmp.eq.s32.totalorder %v113, %v339
      %v341 = vsel %vm340, %v123, 0.0
      %v342 = vsel %vm126, %v341, 0.0
      %343 = vadd.xlane.f32.xlu0 %v342
      %v344 = vpop.xlane.xlu0 %343
      %v345 = vsel %vm340, %v179, 0.0
      %v346 = vsel %vm126, %v345, 0.0
      %347 = vadd.xlane.f32.xlu0 %v346
      %v348 = vpop.xlane.xlu0 %347
      %v349 = vsel %vm340, %v185, 0.0
      %v350 = vsel %vm126, %v349, 0.0
      %351 = vadd.xlane.f32.xlu0 %v350
      %v352 = vpop.xlane.xlu0 %351
      %v353 = vsub.f32 %v123, %v344
      %v354 = vmul.f32 %v353, %v353
      %v356 = vrot.slane %v348, 7
      %v358 = vsub.f32 %v123, %v356
      %v359 = vmul.f32 %v358, %v358
      %v361 = vrot.slane %v359, 1
      %v363 = vadd.f32 %v354, %v361
      %v365 = vrot.slane %v352, 6
      %v367 = vsub.f32 %v123, %v365
      %v368 = vmul.f32 %v367, %v367
      %v370 = vrot.slane %v368, 2
      %v372 = vadd.f32 %v363, %v370
      %v373 = vmin.f32 %v319, %v372
      %v374 = vsel %vm126, %v373, -inf
      %375 = vmax.xlane.f32.xlu0 %v374
      %v376 = vpop.xlane.xlu0 %375
      %vm377 = vcmp.eq.f32.partialorder %v373, %v376
      %v378 = vsel %vm377, %v113, 64
      %v379 = vsel %vm126, %v378, 2147483647
      %v380 = vand.u32 %v379, 65535
      %v381 = vshra.s32 %v379, 16
      %v382 = vcvt.s32.f32 %v380
      %v383 = vcvt.s32.f32 %v381
      %384 = vmin.xlane.f32.xlu0 %v383
      %v385 = vpop.xlane.xlu0 %384
      %vm386 = vcmp.eq.f32.partialorder %v383, %v385
      %v387 = vsel %vm386, %v382, inf
      %388 = vmin.xlane.f32.xlu0 %v387
      %v389 = vpop.xlane.xlu0 %388
      %v390 = vcvt.f32.s32 %v389
      %v391 = vcvt.f32.s32 %v385
      %v392 = vshll.u32 %v391, 16
      %v393 = vadd.s32 %v392, %v390
      %vm394 = vcmp.eq.s32.totalorder %v113, %v393
      %v395 = vsel %vm394, %v123, 0.0
      %v396 = vsel %vm126, %v395, 0.0
      %397 = vadd.xlane.f32.xlu0 %v396
      %v398 = vpop.xlane.xlu0 %397
      %v399 = vsel %vm394, %v179, 0.0
      %v400 = vsel %vm126, %v399, 0.0
      %401 = vadd.xlane.f32.xlu0 %v400
      %v402 = vpop.xlane.xlu0 %401
      %v403 = vsel %vm394, %v185, 0.0
      %v404 = vsel %vm126, %v403, 0.0
      %405 = vadd.xlane.f32.xlu0 %v404
      %v406 = vpop.xlane.xlu0 %405
      %v407 = vsub.f32 %v123, %v398
      %v408 = vmul.f32 %v407, %v407
      %v410 = vrot.slane %v402, 7
      %v412 = vsub.f32 %v123, %v410
      %v413 = vmul.f32 %v412, %v412
      %v415 = vrot.slane %v413, 1
      %v417 = vadd.f32 %v408, %v415
      %v419 = vrot.slane %v406, 6
      %v421 = vsub.f32 %v123, %v419
      %v422 = vmul.f32 %v421, %v421
      %v424 = vrot.slane %v422, 2
      %v426 = vadd.f32 %v417, %v424
      %v427 = vmin.f32 %v373, %v426
      %v428 = vsel %vm126, %v427, -inf
      %429 = vmax.xlane.f32.xlu0 %v428
      %v430 = vpop.xlane.xlu0 %429
      %vm431 = vcmp.eq.f32.partialorder %v427, %v430
      %v432 = vsel %vm431, %v113, 64
      %v433 = vsel %vm126, %v432, 2147483647
      %v434 = vand.u32 %v433, 65535
      %v435 = vshra.s32 %v433, 16
      %v436 = vcvt.s32.f32 %v434
      %v437 = vcvt.s32.f32 %v435
      %438 = vmin.xlane.f32.xlu0 %v437
      %v439 = vpop.xlane.xlu0 %438
      %vm440 = vcmp.eq.f32.partialorder %v437, %v439
      %v441 = vsel %vm440, %v436, inf
      %442 = vmin.xlane.f32.xlu0 %v441
      %v443 = vpop.xlane.xlu0 %442
      %v444 = vcvt.f32.s32 %v443
      %v445 = vcvt.f32.s32 %v439
      %v446 = vshll.u32 %v445, 16
      %v447 = vadd.s32 %v446, %v444
      %vm448 = vcmp.eq.s32.totalorder %v113, %v447
      %v449 = vsel %vm448, %v123, 0.0
      %v450 = vsel %vm126, %v449, 0.0
      %451 = vadd.xlane.f32.xlu0 %v450
      %v452 = vpop.xlane.xlu0 %451
      %v453 = vsel %vm448, %v179, 0.0
      %v454 = vsel %vm126, %v453, 0.0
      %455 = vadd.xlane.f32.xlu0 %v454
      %v456 = vpop.xlane.xlu0 %455
      %v457 = vsel %vm448, %v185, 0.0
      %v458 = vsel %vm126, %v457, 0.0
      %459 = vadd.xlane.f32.xlu0 %v458
      %v460 = vpop.xlane.xlu0 %459
      %v461 = vsub.f32 %v123, %v452
      %v462 = vmul.f32 %v461, %v461
      %v464 = vrot.slane %v456, 7
      %v466 = vsub.f32 %v123, %v464
      %v467 = vmul.f32 %v466, %v466
      %v469 = vrot.slane %v467, 1
      %v471 = vadd.f32 %v462, %v469
      %v473 = vrot.slane %v460, 6
      %v475 = vsub.f32 %v123, %v473
      %v476 = vmul.f32 %v475, %v475
      %v478 = vrot.slane %v476, 2
      %v480 = vadd.f32 %v471, %v478
      %v481 = vmin.f32 %v427, %v480
      %v482 = vsel %vm126, %v481, -inf
      %483 = vmax.xlane.f32.xlu0 %v482
      %v484 = vpop.xlane.xlu0 %483
      %vm485 = vcmp.eq.f32.partialorder %v481, %v484
      %v486 = vsel %vm485, %v113, 64
      %v487 = vsel %vm126, %v486, 2147483647
      %v488 = vand.u32 %v487, 65535
      %v489 = vshra.s32 %v487, 16
      %v490 = vcvt.s32.f32 %v488
      %v491 = vcvt.s32.f32 %v489
      %492 = vmin.xlane.f32.xlu0 %v491
      %v493 = vpop.xlane.xlu0 %492
      %vm494 = vcmp.eq.f32.partialorder %v491, %v493
      %v495 = vsel %vm494, %v490, inf
      %496 = vmin.xlane.f32.xlu0 %v495
      %v497 = vpop.xlane.xlu0 %496
      %v498 = vcvt.f32.s32 %v497
      %v499 = vcvt.f32.s32 %v493
      %v500 = vshll.u32 %v499, 16
      %v501 = vadd.s32 %v500, %v498
      %vm502 = vcmp.eq.s32.totalorder %v113, %v501
      %v503 = vsel %vm502, %v123, 0.0
      %v504 = vsel %vm126, %v503, 0.0
      %505 = vadd.xlane.f32.xlu0 %v504
      %v506 = vpop.xlane.xlu0 %505
      %v507 = vsel %vm502, %v179, 0.0
      %v508 = vsel %vm126, %v507, 0.0
      %509 = vadd.xlane.f32.xlu0 %v508
      %v510 = vpop.xlane.xlu0 %509
      %v511 = vsel %vm502, %v185, 0.0
      %v512 = vsel %vm126, %v511, 0.0
      %513 = vadd.xlane.f32.xlu0 %v512
      %v514 = vpop.xlane.xlu0 %513
      %v515 = vsub.f32 %v123, %v506
      %v516 = vmul.f32 %v515, %v515
      %v518 = vrot.slane %v510, 7
      %v520 = vsub.f32 %v123, %v518
      %v521 = vmul.f32 %v520, %v520
      %v523 = vrot.slane %v521, 1
      %v525 = vadd.f32 %v516, %v523
      %v527 = vrot.slane %v514, 6
      %v529 = vsub.f32 %v123, %v527
      %v530 = vmul.f32 %v529, %v529
      %v532 = vrot.slane %v530, 2
      %v534 = vadd.f32 %v525, %v532
      %vm535 = vcmp.eq.s32.totalorder %v115, %v113
      %vm536 = vcmp.eq.s32.totalorder %v116, %v113
      %vm537 = vcmp.eq.s32.totalorder %v117, %v113
      %vm538 = vcmp.eq.s32.totalorder %v118, %v113
      %vm539 = vcmp.eq.s32.totalorder %v119, %v113
      %vm540 = vcmp.eq.s32.totalorder %v120, %v113
      %vm541 = vcmp.eq.s32.totalorder %v121, %v113
      %vm542 = vcmp.eq.s32.totalorder %v122, %v113
      %v543 = vsel %vm535, 1, 0
      %v544 = vsel %vm536, 1, 0
      %v545 = vsel %vm537, 1, 0
      %v546 = vsel %vm538, 1, 0
      %v547 = vsel %vm539, 1, 0
      %v548 = vsel %vm540, 1, 0
      %v549 = vsel %vm541, 1, 0
      %v550 = vsel %vm542, 1, 0
      %v551 = vcvt.s32.f32 %v543
      %v552 = vcvt.s32.f32 %v544
      %v553 = vcvt.s32.f32 %v545
      %v554 = vcvt.s32.f32 %v546
      %v555 = vcvt.s32.f32 %v547
      %v556 = vcvt.s32.f32 %v548
      %v557 = vcvt.s32.f32 %v549
      %v558 = vcvt.s32.f32 %v550
      %vm559 = vcmp.eq.s32.totalorder %v115, 0
      %v560 = vsel %vm559, 1, 0
      %vm561 = vcmp.eq.s32.totalorder %v560, 1
      %v562 = vlaneseq
      %v563 = vshrl.u32 %v562, 7
      %v564 = vsub.s32 0, %v563
      %v565 = vrot.slane %v151, %v564
      %v566 = vsel %vm561, %v565, 0.0
      %vm567 = vcmp.eq.s32.totalorder %v115, 1
      %v568 = vsel %vm567, 1, 0
      %vm569 = vcmp.eq.s32.totalorder %v568, 1
      %v570 = vlaneseq
      %v571 = vshrl.u32 %v570, 7
      %v572 = vsub.s32 0, %v571
      %v573 = vrot.slane %v210, %v572
      %v574 = vsel %vm569, %v573, %v566
      %vm575 = vcmp.eq.s32.totalorder %v115, 2
      %v576 = vsel %vm575, 1, 0
      %vm577 = vcmp.eq.s32.totalorder %v576, 1
      %v578 = vlaneseq
      %v579 = vshrl.u32 %v578, 7
      %v580 = vsub.s32 0, %v579
      %v581 = vrot.slane %v264, %v580
      %v582 = vsel %vm577, %v581, %v574
      %vm583 = vcmp.eq.s32.totalorder %v115, 3
      %v584 = vsel %vm583, 1, 0
      %vm585 = vcmp.eq.s32.totalorder %v584, 1
      %v586 = vlaneseq
      %v587 = vshrl.u32 %v586, 7
      %v588 = vsub.s32 0, %v587
      %v589 = vrot.slane %v318, %v588
      %v590 = vsel %vm585, %v589, %v582
      %vm591 = vcmp.eq.s32.totalorder %v115, 4
      %v592 = vsel %vm591, 1, 0
      %vm593 = vcmp.eq.s32.totalorder %v592, 1
      %v594 = vlaneseq
      %v595 = vshrl.u32 %v594, 7
      %v596 = vsub.s32 0, %v595
      %v597 = vrot.slane %v372, %v596
      %v598 = vsel %vm593, %v597, %v590
      %vm599 = vcmp.eq.s32.totalorder %v115, 5
      %v600 = vsel %vm599, 1, 0
      %vm601 = vcmp.eq.s32.totalorder %v600, 1
      %v602 = vlaneseq
      %v603 = vshrl.u32 %v602, 7
      %v604 = vsub.s32 0, %v603
      %v605 = vrot.slane %v426, %v604
      %v606 = vsel %vm601, %v605, %v598
      %vm607 = vcmp.eq.s32.totalorder %v115, 6
      %v608 = vsel %vm607, 1, 0
      %vm609 = vcmp.eq.s32.totalorder %v608, 1
      %v610 = vlaneseq
      %v611 = vshrl.u32 %v610, 7
      %v612 = vsub.s32 0, %v611
      %v613 = vrot.slane %v480, %v612
      %v614 = vsel %vm609, %v613, %v606
      %vm615 = vcmp.eq.s32.totalorder %v115, 7
      %v616 = vsel %vm615, 1, 0
      %vm617 = vcmp.eq.s32.totalorder %v616, 1
      %v618 = vlaneseq
      %v619 = vshrl.u32 %v618, 7
      %v620 = vsub.s32 0, %v619
      %v621 = vrot.slane %v534, %v620
      %v622 = vsel %vm617, %v621, %v614
      %vm623 = vcmask 523264
      %v625 = vsel %vm623, %v551, 0
      %v628 = vsel %vm623, %v552, 0
      %v631 = vsel %vm623, %v553, 0
      %v634 = vsel %vm623, %v554, 0
      %v637 = vsel %vm623, %v555, 0
      %v640 = vsel %vm623, %v556, 0
      %v643 = vsel %vm623, %v557, 0
      %v646 = vsel %vm623, %v558, 0
      %v649 = vsel %vm623, %v622, 0
      %651 = vmatprep.subr.mxu0 0.0
      %v652 = vand.u32 %v649, 4294901760
      %653 = vmatpush1.xpose.msra.mxu0 %v652
      %654 = vmatprep.subr.mxu0 0.0
      %655 = vmatpush1.xpose.msra.mxu0 0.0
      %656 = vmatprep.subr.mxu0 0.0
      %657 = vmatpush1.xpose.msra.mxu0 0.0
      %658 = vmatprep.subr.mxu0 0.0
      %659 = vmatpush1.xpose.msra.mxu0 0.0
      %660 = vmatprep.subr.mxu0 0.0
      %661 = vmatpush1.xpose.msra.mxu0 0.0
      %662 = vmatprep.subr.mxu0 0.0
      %663 = vmatpush1.xpose.msra.mxu0 0.0
      %664 = vmatprep.subr.mxu0 0.0
      %665 = vmatpush1.xpose.msra.mxu0 0.0
      %666 = vmatprep.subr.mxu0 0.0
      %667 = vmatpush1.xpose.msra.mxu0 0.0
      %668 = vmatprep.subr.mxu0 0.0
      %669 = vmatpush1.xpose.msra.mxu0 0.0
      %670 = vmatprep.subr.mxu0 0.0
      %671 = vmatpush1.xpose.msra.mxu0 0.0
      %672 = vmatprep.subr.mxu0 0.0
      %673 = vmatpush1.xpose.msra.mxu0 0.0
      %674 = vmatprep.subr.mxu0 0.0
      %675 = vmatpush1.xpose.msra.mxu0 0.0
      %676 = vmatprep.subr.mxu0 0.0
      %677 = vmatpush1.xpose.msra.mxu0 0.0
      %678 = vmatprep.subr.mxu0 0.0
      %679 = vmatpush1.xpose.msra.mxu0 0.0
      %680 = vmatprep.subr.mxu0 0.0
      %681 = vmatpush1.xpose.msra.mxu0 0.0
      %682 = vmatprep.subr.mxu0 0.0
      %683 = vmatpush1.xpose.msra.mxu0 0.0
      %684 = vmatprep.subr.mxu0 0.0
      %685 = vmatpush1.xpose.msra.mxu0 0.0
      %686 = vmatprep.subr.mxu0 0.0
      %687 = vmatpush1.xpose.msra.mxu0 0.0
      %688 = vmatprep.subr.mxu0 0.0
      %689 = vmatpush1.xpose.msra.mxu0 0.0
      %690 = vmatprep.subr.mxu0 0.0
      %691 = vmatpush1.xpose.msra.mxu0 0.0
      %692 = vmatprep.subr.mxu0 0.0
      %693 = vmatpush1.xpose.msra.mxu0 0.0
      %694 = vmatprep.subr.mxu0 0.0
      %695 = vmatpush1.xpose.msra.mxu0 0.0
      %696 = vmatprep.subr.mxu0 0.0
      %697 = vmatpush1.xpose.msra.mxu0 0.0
      %698 = vmatprep.subr.mxu0 0.0
      %699 = vmatpush1.xpose.msra.mxu0 0.0
      %700 = vmatprep.subr.mxu0 0.0
      %701 = vmatpush1.xpose.msra.mxu0 0.0
      %702 = vmatprep.subr.mxu0 0.0
      %703 = vmatpush1.xpose.msra.mxu0 0.0
      %704 = vmatprep.subr.mxu0 0.0
      %705 = vmatpush1.xpose.msra.mxu0 0.0
      %706 = vmatprep.subr.mxu0 0.0
      %707 = vmatpush1.xpose.msra.mxu0 0.0
      %708 = vmatprep.subr.mxu0 0.0
      %709 = vmatpush1.xpose.msra.mxu0 0.0
      %710 = vmatprep.subr.mxu0 0.0
      %711 = vmatpush1.xpose.msra.mxu0 0.0
      %712 = vmatprep.subr.mxu0 0.0
      %713 = vmatpush1.xpose.msra.mxu0 0.0
      %714 = vmatprep.subr.mxu0 0.0
      %715 = vmatpush1.xpose.msra.mxu0 0.0
      %716 = vmatprep.mubr.f32.mxu0 0.0
      %v717 = vand.u32 %v625, 4294901760
      %v718 = vsub.f32 %v625, %v717
      %v719 = vand.u32 %v718, 4294901760
      %v720 = vsub.f32 %v718, %v719
      %v721 = vand.u32 %v720, 4294901760
      %722 = vmatmul.mubr.f32.gmra.mrb[0].mxu0 %v721
      %v723 = vpop.f32.mrb[0].mxu0
      %v724 = vadd.f32 0.0, %v723
      %v725 = vpop.f32.mrb[0].mxu0
      %726 = vmatprep.mubr.f32.mxu0 0.0
      %v727 = vand.u32 %v628, 4294901760
      %v728 = vsub.f32 %v628, %v727
      %v729 = vand.u32 %v728, 4294901760
      %v730 = vsub.f32 %v728, %v729
      %v731 = vand.u32 %v730, 4294901760
      %732 = vmatmul.mubr.f32.gmra.mrb[0].mxu0 %v731
      %v733 = vpop.f32.mrb[0].mxu0
      %v734 = vadd.f32 0.0, %v733
      %v735 = vpop.f32.mrb[0].mxu0
      %736 = vmatprep.mubr.f32.mxu0 0.0
      %v737 = vand.u32 %v631, 4294901760
      %v738 = vsub.f32 %v631, %v737
      %v739 = vand.u32 %v738, 4294901760
      %v740 = vsub.f32 %v738, %v739
      %v741 = vand.u32 %v740, 4294901760
      %742 = vmatmul.mubr.f32.gmra.mrb[0].mxu0 %v741
      %v743 = vpop.f32.mrb[0].mxu0
      %v744 = vadd.f32 0.0, %v743
      %v745 = vpop.f32.mrb[0].mxu0
      %746 = vmatprep.mubr.f32.mxu0 0.0
      %v747 = vand.u32 %v634, 4294901760
      %v748 = vsub.f32 %v634, %v747
      %v749 = vand.u32 %v748, 4294901760
      %v750 = vsub.f32 %v748, %v749
      %v751 = vand.u32 %v750, 4294901760
      %752 = vmatmul.mubr.f32.gmra.mrb[0].mxu0 %v751
      %v753 = vpop.f32.mrb[0].mxu0
      %v754 = vadd.f32 0.0, %v753
      %v755 = vpop.f32.mrb[0].mxu0
      %756 = vmatprep.mubr.f32.mxu0 0.0
      %v757 = vand.u32 %v637, 4294901760
      %v758 = vsub.f32 %v637, %v757
      %v759 = vand.u32 %v758, 4294901760
      %v760 = vsub.f32 %v758, %v759
      %v761 = vand.u32 %v760, 4294901760
      %762 = vmatmul.mubr.f32.gmra.mrb[0].mxu0 %v761
      %v763 = vpop.f32.mrb[0].mxu0
      %v764 = vadd.f32 0.0, %v763
      %v765 = vpop.f32.mrb[0].mxu0
      %766 = vmatprep.mubr.f32.mxu0 0.0
      %v767 = vand.u32 %v640, 4294901760
      %v768 = vsub.f32 %v640, %v767
      %v769 = vand.u32 %v768, 4294901760
      %v770 = vsub.f32 %v768, %v769
      %v771 = vand.u32 %v770, 4294901760
      %772 = vmatmul.mubr.f32.gmra.mrb[0].mxu0 %v771
      %v773 = vpop.f32.mrb[0].mxu0
      %v774 = vadd.f32 0.0, %v773
      %v775 = vpop.f32.mrb[0].mxu0
      %776 = vmatprep.mubr.f32.mxu0 0.0
      %v777 = vand.u32 %v643, 4294901760
      %v778 = vsub.f32 %v643, %v777
      %v779 = vand.u32 %v778, 4294901760
      %v780 = vsub.f32 %v778, %v779
      %v781 = vand.u32 %v780, 4294901760
      %782 = vmatmul.mubr.f32.gmra.mrb[0].mxu0 %v781
      %v783 = vpop.f32.mrb[0].mxu0
      %v784 = vadd.f32 0.0, %v783
      %v785 = vpop.f32.mrb[0].mxu0
      %786 = vmatprep.mubr.f32.mxu0 0.0
      %v787 = vand.u32 %v646, 4294901760
      %v788 = vsub.f32 %v646, %v787
      %v789 = vand.u32 %v788, 4294901760
      %v790 = vsub.f32 %v788, %v789
      %v791 = vand.u32 %v790, 4294901760
      %792 = vmatmul.mubr.f32.gmra.mrb[0].mxu0 %v791
      %v793 = vpop.f32.mrb[0].mxu0
      %v794 = vadd.f32 0.0, %v793
      %v795 = vpop.f32.mrb[0].mxu0
      %796 = vdwg.mxu0
      %797 = vmatprep.subr.mxu0 0.0
      %v798 = vand.u32 %v649, 4294901760
      %v799 = vsub.f32 %v649, %v798
      %v800 = vand.u32 %v799, 4294901760
      %v801 = vsub.f32 %v799, %v800
      %v802 = vand.u32 %v801, 4294901760
      %803 = vmatpush1.xpose.msra.mxu0 %v802
      %804 = vmatprep.subr.mxu0 0.0
      %805 = vmatpush1.xpose.msra.mxu0 0.0
      %806 = vmatprep.subr.mxu0 0.0
      %807 = vmatpush1.xpose.msra.mxu0 0.0
      %808 = vmatprep.subr.mxu0 0.0
      %809 = vmatpush1.xpose.msra.mxu0 0.0
      %810 = vmatprep.subr.mxu0 0.0
      %811 = vmatpush1.xpose.msra.mxu0 0.0
      %812 = vmatprep.subr.mxu0 0.0
      %813 = vmatpush1.xpose.msra.mxu0 0.0
      %814 = vmatprep.subr.mxu0 0.0
      %815 = vmatpush1.xpose.msra.mxu0 0.0
      %816 = vmatprep.subr.mxu0 0.0
      %817 = vmatpush1.xpose.msra.mxu0 0.0
      %818 = vmatprep.subr.mxu0 0.0
      %819 = vmatpush1.xpose.msra.mxu0 0.0
      %820 = vmatprep.subr.mxu0 0.0
      %821 = vmatpush1.xpose.msra.mxu0 0.0
      %822 = vmatprep.subr.mxu0 0.0
      %823 = vmatpush1.xpose.msra.mxu0 0.0
      %824 = vmatprep.subr.mxu0 0.0
      %825 = vmatpush1.xpose.msra.mxu0 0.0
      %826 = vmatprep.subr.mxu0 0.0
      %827 = vmatpush1.xpose.msra.mxu0 0.0
      %828 = vmatprep.subr.mxu0 0.0
      %829 = vmatpush1.xpose.msra.mxu0 0.0
      %830 = vmatprep.subr.mxu0 0.0
      %831 = vmatpush1.xpose.msra.mxu0 0.0
      %832 = vmatprep.subr.mxu0 0.0
      %833 = vmatpush1.xpose.msra.mxu0 0.0
      %834 = vmatprep.subr.mxu0 0.0
      %835 = vmatpush1.xpose.msra.mxu0 0.0
      %836 = vmatprep.subr.mxu0 0.0
      %837 = vmatpush1.xpose.msra.mxu0 0.0
      %838 = vmatprep.subr.mxu0 0.0
      %839 = vmatpush1.xpose.msra.mxu0 0.0
      %840 = vmatprep.subr.mxu0 0.0
      %841 = vmatpush1.xpose.msra.mxu0 0.0
      %842 = vmatprep.subr.mxu0 0.0
      %843 = vmatpush1.xpose.msra.mxu0 0.0
      %844 = vmatprep.subr.mxu0 0.0
      %845 = vmatpush1.xpose.msra.mxu0 0.0
      %846 = vmatprep.subr.mxu0 0.0
      %847 = vmatpush1.xpose.msra.mxu0 0.0
      %848 = vmatprep.subr.mxu0 0.0
      %849 = vmatpush1.xpose.msra.mxu0 0.0
      %850 = vmatprep.subr.mxu0 0.0
      %851 = vmatpush1.xpose.msra.mxu0 0.0
      %852 = vmatprep.subr.mxu0 0.0
      %853 = vmatpush1.xpose.msra.mxu0 0.0
      %854 = vmatprep.subr.mxu0 0.0
      %855 = vmatpush1.xpose.msra.mxu0 0.0
      %856 = vmatprep.subr.mxu0 0.0
      %857 = vmatpush1.xpose.msra.mxu0 0.0
      %858 = vmatprep.subr.mxu0 0.0
      %859 = vmatpush1.xpose.msra.mxu0 0.0
      %860 = vmatprep.subr.mxu0 0.0
      %861 = vmatpush1.xpose.msra.mxu0 0.0
      %862 = vmatprep.subr.mxu0 0.0
      %863 = vmatpush1.xpose.msra.mxu0 0.0
      %864 = vmatprep.subr.mxu0 0.0
      %865 = vmatpush1.xpose.msra.mxu0 0.0
      %866 = vmatprep.mubr.f32.mxu0 0.0
      %v867 = vand.u32 %v625, 4294901760
      %868 = vmatmul.mubr.f32.gmra.mrb[0].mxu0 %v867
      %v869 = vpop.f32.mrb[0].mxu0
      %v870 = vadd.f32 %v724, %v869
      %v871 = vpop.f32.mrb[0].mxu0
      %872 = vmatprep.mubr.f32.mxu0 0.0
      %v873 = vand.u32 %v628, 4294901760
      %874 = vmatmul.mubr.f32.gmra.mrb[0].mxu0 %v873
      %v875 = vpop.f32.mrb[0].mxu0
      %v876 = vadd.f32 %v734, %v875
      %v877 = vpop.f32.mrb[0].mxu0
      %878 = vmatprep.mubr.f32.mxu0 0.0
      %v879 = vand.u32 %v631, 4294901760
      %880 = vmatmul.mubr.f32.gmra.mrb[0].mxu0 %v879
      %v881 = vpop.f32.mrb[0].mxu0
      %v882 = vadd.f32 %v744, %v881
      %v883 = vpop.f32.mrb[0].mxu0
      %884 = vmatprep.mubr.f32.mxu0 0.0
      %v885 = vand.u32 %v634, 4294901760
      %886 = vmatmul.mubr.f32.gmra.mrb[0].mxu0 %v885
      %v887 = vpop.f32.mrb[0].mxu0
      %v888 = vadd.f32 %v754, %v887
      %v889 = vpop.f32.mrb[0].mxu0
      %890 = vmatprep.mubr.f32.mxu0 0.0
      %v891 = vand.u32 %v637, 4294901760
      %892 = vmatmul.mubr.f32.gmra.mrb[0].mxu0 %v891
      %v893 = vpop.f32.mrb[0].mxu0
      %v894 = vadd.f32 %v764, %v893
      %v895 = vpop.f32.mrb[0].mxu0
      %896 = vmatprep.mubr.f32.mxu0 0.0
      %v897 = vand.u32 %v640, 4294901760
      %898 = vmatmul.mubr.f32.gmra.mrb[0].mxu0 %v897
      %v899 = vpop.f32.mrb[0].mxu0
      %v900 = vadd.f32 %v774, %v899
      %v901 = vpop.f32.mrb[0].mxu0
      %902 = vmatprep.mubr.f32.mxu0 0.0
      %v903 = vand.u32 %v643, 4294901760
      %904 = vmatmul.mubr.f32.gmra.mrb[0].mxu0 %v903
      %v905 = vpop.f32.mrb[0].mxu0
      %v906 = vadd.f32 %v784, %v905
      %v907 = vpop.f32.mrb[0].mxu0
      %908 = vmatprep.mubr.f32.mxu0 0.0
      %v909 = vand.u32 %v646, 4294901760
      %910 = vmatmul.mubr.f32.gmra.mrb[0].mxu0 %v909
      %v911 = vpop.f32.mrb[0].mxu0
      %v912 = vadd.f32 %v794, %v911
      %v913 = vpop.f32.mrb[0].mxu0
      %914 = vdwg.mxu0
      %915 = vmatprep.subr.mxu0 0.0
      %v916 = vand.u32 %v649, 4294901760
      %v917 = vsub.f32 %v649, %v916
      %918 = vmatpush1.xpose.msra.mxu0 %v917
      %919 = vmatprep.subr.mxu0 0.0
      %920 = vmatpush1.xpose.msra.mxu0 0.0
      %921 = vmatprep.subr.mxu0 0.0
      %922 = vmatpush1.xpose.msra.mxu0 0.0
      %923 = vmatprep.subr.mxu0 0.0
      %924 = vmatpush1.xpose.msra.mxu0 0.0
      %925 = vmatprep.subr.mxu0 0.0
      %926 = vmatpush1.xpose.msra.mxu0 0.0
      %927 = vmatprep.subr.mxu0 0.0
      %928 = vmatpush1.xpose.msra.mxu0 0.0
      %929 = vmatprep.subr.mxu0 0.0
      %930 = vmatpush1.xpose.msra.mxu0 0.0
      %931 = vmatprep.subr.mxu0 0.0
      %932 = vmatpush1.xpose.msra.mxu0 0.0
      %933 = vmatprep.subr.mxu0 0.0
      %934 = vmatpush1.xpose.msra.mxu0 0.0
      %935 = vmatprep.subr.mxu0 0.0
      %936 = vmatpush1.xpose.msra.mxu0 0.0
      %937 = vmatprep.subr.mxu0 0.0
      %938 = vmatpush1.xpose.msra.mxu0 0.0
      %939 = vmatprep.subr.mxu0 0.0
      %940 = vmatpush1.xpose.msra.mxu0 0.0
      %941 = vmatprep.subr.mxu0 0.0
      %942 = vmatpush1.xpose.msra.mxu0 0.0
      %943 = vmatprep.subr.mxu0 0.0
      %944 = vmatpush1.xpose.msra.mxu0 0.0
      %945 = vmatprep.subr.mxu0 0.0
      %946 = vmatpush1.xpose.msra.mxu0 0.0
      %947 = vmatprep.subr.mxu0 0.0
      %948 = vmatpush1.xpose.msra.mxu0 0.0
      %949 = vmatprep.subr.mxu0 0.0
      %950 = vmatpush1.xpose.msra.mxu0 0.0
      %951 = vmatprep.subr.mxu0 0.0
      %952 = vmatpush1.xpose.msra.mxu0 0.0
      %953 = vmatprep.subr.mxu0 0.0
      %954 = vmatpush1.xpose.msra.mxu0 0.0
      %955 = vmatprep.subr.mxu0 0.0
      %956 = vmatpush1.xpose.msra.mxu0 0.0
      %957 = vmatprep.subr.mxu0 0.0
      %958 = vmatpush1.xpose.msra.mxu0 0.0
      %959 = vmatprep.subr.mxu0 0.0
      %960 = vmatpush1.xpose.msra.mxu0 0.0
      %961 = vmatprep.subr.mxu0 0.0
      %962 = vmatpush1.xpose.msra.mxu0 0.0
      %963 = vmatprep.subr.mxu0 0.0
      %964 = vmatpush1.xpose.msra.mxu0 0.0
      %965 = vmatprep.subr.mxu0 0.0
      %966 = vmatpush1.xpose.msra.mxu0 0.0
      %967 = vmatprep.subr.mxu0 0.0
      %968 = vmatpush1.xpose.msra.mxu0 0.0
      %969 = vmatprep.subr.mxu0 0.0
      %970 = vmatpush1.xpose.msra.mxu0 0.0
      %971 = vmatprep.subr.mxu0 0.0
      %972 = vmatpush1.xpose.msra.mxu0 0.0
      %973 = vmatprep.subr.mxu0 0.0
      %974 = vmatpush1.xpose.msra.mxu0 0.0
      %975 = vmatprep.subr.mxu0 0.0
      %976 = vmatpush1.xpose.msra.mxu0 0.0
      %977 = vmatprep.subr.mxu0 0.0
      %978 = vmatpush1.xpose.msra.mxu0 0.0
      %979 = vmatprep.subr.mxu0 0.0
      %980 = vmatpush1.xpose.msra.mxu0 0.0
      %981 = vmatprep.mubr.f32.mxu0 0.0
      %v982 = vand.u32 %v625, 4294901760
      %v983 = vsub.f32 %v625, %v982
      %984 = vmatmul.mubr.f32.gmra.mrb[0].mxu0 %v983
      %v985 = vpop.f32.mrb[0].mxu0
      %v986 = vadd.f32 %v870, %v985
      %v987 = vpop.f32.mrb[0].mxu0
      %988 = vmatprep.mubr.f32.mxu0 0.0
      %v989 = vand.u32 %v628, 4294901760
      %v990 = vsub.f32 %v628, %v989
      %991 = vmatmul.mubr.f32.gmra.mrb[0].mxu0 %v990
      %v992 = vpop.f32.mrb[0].mxu0
      %v993 = vadd.f32 %v876, %v992
      %v994 = vpop.f32.mrb[0].mxu0
      %995 = vmatprep.mubr.f32.mxu0 0.0
      %v996 = vand.u32 %v631, 4294901760
      %v997 = vsub.f32 %v631, %v996
      %998 = vmatmul.mubr.f32.gmra.mrb[0].mxu0 %v997
      %v999 = vpop.f32.mrb[0].mxu0
      %v1000 = vadd.f32 %v882, %v999
      %v1001 = vpop.f32.mrb[0].mxu0
      %1002 = vmatprep.mubr.f32.mxu0 0.0
      %v1003 = vand.u32 %v634, 4294901760
      %v1004 = vsub.f32 %v634, %v1003
      %1005 = vmatmul.mubr.f32.gmra.mrb[0].mxu0 %v1004
      %v1006 = vpop.f32.mrb[0].mxu0
      %v1007 = vadd.f32 %v888, %v1006
      %v1008 = vpop.f32.mrb[0].mxu0
      %1009 = vmatprep.mubr.f32.mxu0 0.0
      %v1010 = vand.u32 %v637, 4294901760
      %v1011 = vsub.f32 %v637, %v1010
      %1012 = vmatmul.mubr.f32.gmra.mrb[0].mxu0 %v1011
      %v1013 = vpop.f32.mrb[0].mxu0
      %v1014 = vadd.f32 %v894, %v1013
      %v1015 = vpop.f32.mrb[0].mxu0
      %1016 = vmatprep.mubr.f32.mxu0 0.0
      %v1017 = vand.u32 %v640, 4294901760
      %v1018 = vsub.f32 %v640, %v1017
      %1019 = vmatmul.mubr.f32.gmra.mrb[0].mxu0 %v1018
      %v1020 = vpop.f32.mrb[0].mxu0
      %v1021 = vadd.f32 %v900, %v1020
      %v1022 = vpop.f32.mrb[0].mxu0
      %1023 = vmatprep.mubr.f32.mxu0 0.0
      %v1024 = vand.u32 %v643, 4294901760
      %v1025 = vsub.f32 %v643, %v1024
      %1026 = vmatmul.mubr.f32.gmra.mrb[0].mxu0 %v1025
      %v1027 = vpop.f32.mrb[0].mxu0
      %v1028 = vadd.f32 %v906, %v1027
      %v1029 = vpop.f32.mrb[0].mxu0
      %1030 = vmatprep.mubr.f32.mxu0 0.0
      %v1031 = vand.u32 %v646, 4294901760
      %v1032 = vsub.f32 %v646, %v1031
      %1033 = vmatmul.mubr.f32.gmra.mrb[0].mxu0 %v1032
      %v1034 = vpop.f32.mrb[0].mxu0
      %v1035 = vadd.f32 %v912, %v1034
      %v1036 = vpop.f32.mrb[0].mxu0
      %1037 = vdwg.mxu0
      %1038 = vmatprep.subr.mxu0 0.0
      %v1039 = vand.u32 %v649, 4294901760
      %1040 = vmatpush1.xpose.msra.mxu0 %v1039
      %1041 = vmatprep.subr.mxu0 0.0
      %1042 = vmatpush1.xpose.msra.mxu0 0.0
      %1043 = vmatprep.subr.mxu0 0.0
      %1044 = vmatpush1.xpose.msra.mxu0 0.0
      %1045 = vmatprep.subr.mxu0 0.0
      %1046 = vmatpush1.xpose.msra.mxu0 0.0
      %1047 = vmatprep.subr.mxu0 0.0
      %1048 = vmatpush1.xpose.msra.mxu0 0.0
      %1049 = vmatprep.subr.mxu0 0.0
      %1050 = vmatpush1.xpose.msra.mxu0 0.0
      %1051 = vmatprep.subr.mxu0 0.0
      %1052 = vmatpush1.xpose.msra.mxu0 0.0
      %1053 = vmatprep.subr.mxu0 0.0
      %1054 = vmatpush1.xpose.msra.mxu0 0.0
      %1055 = vmatprep.subr.mxu0 0.0
      %1056 = vmatpush1.xpose.msra.mxu0 0.0
      %1057 = vmatprep.subr.mxu0 0.0
      %1058 = vmatpush1.xpose.msra.mxu0 0.0
      %1059 = vmatprep.subr.mxu0 0.0
      %1060 = vmatpush1.xpose.msra.mxu0 0.0
      %1061 = vmatprep.subr.mxu0 0.0
      %1062 = vmatpush1.xpose.msra.mxu0 0.0
      %1063 = vmatprep.subr.mxu0 0.0
      %1064 = vmatpush1.xpose.msra.mxu0 0.0
      %1065 = vmatprep.subr.mxu0 0.0
      %1066 = vmatpush1.xpose.msra.mxu0 0.0
      %1067 = vmatprep.subr.mxu0 0.0
      %1068 = vmatpush1.xpose.msra.mxu0 0.0
      %1069 = vmatprep.subr.mxu0 0.0
      %1070 = vmatpush1.xpose.msra.mxu0 0.0
      %1071 = vmatprep.subr.mxu0 0.0
      %1072 = vmatpush1.xpose.msra.mxu0 0.0
      %1073 = vmatprep.subr.mxu0 0.0
      %1074 = vmatpush1.xpose.msra.mxu0 0.0
      %1075 = vmatprep.subr.mxu0 0.0
      %1076 = vmatpush1.xpose.msra.mxu0 0.0
      %1077 = vmatprep.subr.mxu0 0.0
      %1078 = vmatpush1.xpose.msra.mxu0 0.0
      %1079 = vmatprep.subr.mxu0 0.0
      %1080 = vmatpush1.xpose.msra.mxu0 0.0
      %1081 = vmatprep.subr.mxu0 0.0
      %1082 = vmatpush1.xpose.msra.mxu0 0.0
      %1083 = vmatprep.subr.mxu0 0.0
      %1084 = vmatpush1.xpose.msra.mxu0 0.0
      %1085 = vmatprep.subr.mxu0 0.0
      %1086 = vmatpush1.xpose.msra.mxu0 0.0
      %1087 = vmatprep.subr.mxu0 0.0
      %1088 = vmatpush1.xpose.msra.mxu0 0.0
      %1089 = vmatprep.subr.mxu0 0.0
      %1090 = vmatpush1.xpose.msra.mxu0 0.0
      %1091 = vmatprep.subr.mxu0 0.0
      %1092 = vmatpush1.xpose.msra.mxu0 0.0
      %1093 = vmatprep.subr.mxu0 0.0
      %1094 = vmatpush1.xpose.msra.mxu0 0.0
      %1095 = vmatprep.subr.mxu0 0.0
      %1096 = vmatpush1.xpose.msra.mxu0 0.0
      %1097 = vmatprep.subr.mxu0 0.0
      %1098 = vmatpush1.xpose.msra.mxu0 0.0
      %1099 = vmatprep.subr.mxu0 0.0
      %1100 = vmatpush1.xpose.msra.mxu0 0.0
      %1101 = vmatprep.subr.mxu0 0.0
      %1102 = vmatpush1.xpose.msra.mxu0 0.0
      %1103 = vmatprep.mubr.f32.mxu0 0.0
      %v1104 = vand.u32 %v625, 4294901760
      %v1105 = vsub.f32 %v625, %v1104
      %v1106 = vand.u32 %v1105, 4294901760
      %1107 = vmatmul.mubr.f32.gmra.mrb[0].mxu0 %v1106
      %v1108 = vpop.f32.mrb[0].mxu0
      %v1109 = vadd.f32 %v986, %v1108
      %v1110 = vpop.f32.mrb[0].mxu0
      %1111 = vmatprep.mubr.f32.mxu0 0.0
      %v1112 = vand.u32 %v628, 4294901760
      %v1113 = vsub.f32 %v628, %v1112
      %v1114 = vand.u32 %v1113, 4294901760
      %1115 = vmatmul.mubr.f32.gmra.mrb[0].mxu0 %v1114
      %v1116 = vpop.f32.mrb[0].mxu0
      %v1117 = vadd.f32 %v993, %v1116
      %v1118 = vpop.f32.mrb[0].mxu0
      %1119 = vmatprep.mubr.f32.mxu0 0.0
      %v1120 = vand.u32 %v631, 4294901760
      %v1121 = vsub.f32 %v631, %v1120
      %v1122 = vand.u32 %v1121, 4294901760
      %1123 = vmatmul.mubr.f32.gmra.mrb[0].mxu0 %v1122
      %v1124 = vpop.f32.mrb[0].mxu0
      %v1125 = vadd.f32 %v1000, %v1124
      %v1126 = vpop.f32.mrb[0].mxu0
      %1127 = vmatprep.mubr.f32.mxu0 0.0
      %v1128 = vand.u32 %v634, 4294901760
      %v1129 = vsub.f32 %v634, %v1128
      %v1130 = vand.u32 %v1129, 4294901760
      %1131 = vmatmul.mubr.f32.gmra.mrb[0].mxu0 %v1130
      %v1132 = vpop.f32.mrb[0].mxu0
      %v1133 = vadd.f32 %v1007, %v1132
      %v1134 = vpop.f32.mrb[0].mxu0
      %1135 = vmatprep.mubr.f32.mxu0 0.0
      %v1136 = vand.u32 %v637, 4294901760
      %v1137 = vsub.f32 %v637, %v1136
      %v1138 = vand.u32 %v1137, 4294901760
      %1139 = vmatmul.mubr.f32.gmra.mrb[0].mxu0 %v1138
      %v1140 = vpop.f32.mrb[0].mxu0
      %v1141 = vadd.f32 %v1014, %v1140
      %v1142 = vpop.f32.mrb[0].mxu0
      %1143 = vmatprep.mubr.f32.mxu0 0.0
      %v1144 = vand.u32 %v640, 4294901760
      %v1145 = vsub.f32 %v640, %v1144
      %v1146 = vand.u32 %v1145, 4294901760
      %1147 = vmatmul.mubr.f32.gmra.mrb[0].mxu0 %v1146
      %v1148 = vpop.f32.mrb[0].mxu0
      %v1149 = vadd.f32 %v1021, %v1148
      %v1150 = vpop.f32.mrb[0].mxu0
      %1151 = vmatprep.mubr.f32.mxu0 0.0
      %v1152 = vand.u32 %v643, 4294901760
      %v1153 = vsub.f32 %v643, %v1152
      %v1154 = vand.u32 %v1153, 4294901760
      %1155 = vmatmul.mubr.f32.gmra.mrb[0].mxu0 %v1154
      %v1156 = vpop.f32.mrb[0].mxu0
      %v1157 = vadd.f32 %v1028, %v1156
      %v1158 = vpop.f32.mrb[0].mxu0
      %1159 = vmatprep.mubr.f32.mxu0 0.0
      %v1160 = vand.u32 %v646, 4294901760
      %v1161 = vsub.f32 %v646, %v1160
      %v1162 = vand.u32 %v1161, 4294901760
      %1163 = vmatmul.mubr.f32.gmra.mrb[0].mxu0 %v1162
      %v1164 = vpop.f32.mrb[0].mxu0
      %v1165 = vadd.f32 %v1035, %v1164
      %v1166 = vpop.f32.mrb[0].mxu0
      %1167 = vdwg.mxu0
      %1168 = vmatprep.subr.mxu0 0.0
      %v1169 = vand.u32 %v649, 4294901760
      %v1170 = vsub.f32 %v649, %v1169
      %v1171 = vand.u32 %v1170, 4294901760
      %1172 = vmatpush1.xpose.msra.mxu0 %v1171
      %1173 = vmatprep.subr.mxu0 0.0
      %1174 = vmatpush1.xpose.msra.mxu0 0.0
      %1175 = vmatprep.subr.mxu0 0.0
      %1176 = vmatpush1.xpose.msra.mxu0 0.0
      %1177 = vmatprep.subr.mxu0 0.0
      %1178 = vmatpush1.xpose.msra.mxu0 0.0
      %1179 = vmatprep.subr.mxu0 0.0
      %1180 = vmatpush1.xpose.msra.mxu0 0.0
      %1181 = vmatprep.subr.mxu0 0.0
      %1182 = vmatpush1.xpose.msra.mxu0 0.0
      %1183 = vmatprep.subr.mxu0 0.0
      %1184 = vmatpush1.xpose.msra.mxu0 0.0
      %1185 = vmatprep.subr.mxu0 0.0
      %1186 = vmatpush1.xpose.msra.mxu0 0.0
      %1187 = vmatprep.subr.mxu0 0.0
      %1188 = vmatpush1.xpose.msra.mxu0 0.0
      %1189 = vmatprep.subr.mxu0 0.0
      %1190 = vmatpush1.xpose.msra.mxu0 0.0
      %1191 = vmatprep.subr.mxu0 0.0
      %1192 = vmatpush1.xpose.msra.mxu0 0.0
      %1193 = vmatprep.subr.mxu0 0.0
      %1194 = vmatpush1.xpose.msra.mxu0 0.0
      %1195 = vmatprep.subr.mxu0 0.0
      %1196 = vmatpush1.xpose.msra.mxu0 0.0
      %1197 = vmatprep.subr.mxu0 0.0
      %1198 = vmatpush1.xpose.msra.mxu0 0.0
      %1199 = vmatprep.subr.mxu0 0.0
      %1200 = vmatpush1.xpose.msra.mxu0 0.0
      %1201 = vmatprep.subr.mxu0 0.0
      %1202 = vmatpush1.xpose.msra.mxu0 0.0
      %1203 = vmatprep.subr.mxu0 0.0
      %1204 = vmatpush1.xpose.msra.mxu0 0.0
      %1205 = vmatprep.subr.mxu0 0.0
      %1206 = vmatpush1.xpose.msra.mxu0 0.0
      %1207 = vmatprep.subr.mxu0 0.0
      %1208 = vmatpush1.xpose.msra.mxu0 0.0
      %1209 = vmatprep.subr.mxu0 0.0
      %1210 = vmatpush1.xpose.msra.mxu0 0.0
      %1211 = vmatprep.subr.mxu0 0.0
      %1212 = vmatpush1.xpose.msra.mxu0 0.0
      %1213 = vmatprep.subr.mxu0 0.0
      %1214 = vmatpush1.xpose.msra.mxu0 0.0
      %1215 = vmatprep.subr.mxu0 0.0
      %1216 = vmatpush1.xpose.msra.mxu0 0.0
      %1217 = vmatprep.subr.mxu0 0.0
      %1218 = vmatpush1.xpose.msra.mxu0 0.0
      %1219 = vmatprep.subr.mxu0 0.0
      %1220 = vmatpush1.xpose.msra.mxu0 0.0
      %1221 = vmatprep.subr.mxu0 0.0
      %1222 = vmatpush1.xpose.msra.mxu0 0.0
      %1223 = vmatprep.subr.mxu0 0.0
      %1224 = vmatpush1.xpose.msra.mxu0 0.0
      %1225 = vmatprep.subr.mxu0 0.0
      %1226 = vmatpush1.xpose.msra.mxu0 0.0
      %1227 = vmatprep.subr.mxu0 0.0
      %1228 = vmatpush1.xpose.msra.mxu0 0.0
      %1229 = vmatprep.subr.mxu0 0.0
      %1230 = vmatpush1.xpose.msra.mxu0 0.0
      %1231 = vmatprep.subr.mxu0 0.0
      %1232 = vmatpush1.xpose.msra.mxu0 0.0
      %1233 = vmatprep.subr.mxu0 0.0
      %1234 = vmatpush1.xpose.msra.mxu0 0.0
      %1235 = vmatprep.mubr.f32.mxu0 0.0
      %v1236 = vand.u32 %v625, 4294901760
      %1237 = vmatmul.mubr.f32.gmra.mrb[0].mxu0 %v1236
      %v1238 = vpop.f32.mrb[0].mxu0
      %v1239 = vadd.f32 %v1109, %v1238
      %v1240 = vpop.f32.mrb[0].mxu0
      %1241 = vmatprep.mubr.f32.mxu0 0.0
      %v1242 = vand.u32 %v628, 4294901760
      %1243 = vmatmul.mubr.f32.gmra.mrb[0].mxu0 %v1242
      %v1244 = vpop.f32.mrb[0].mxu0
      %v1245 = vadd.f32 %v1117, %v1244
      %v1246 = vpop.f32.mrb[0].mxu0
      %1247 = vmatprep.mubr.f32.mxu0 0.0
      %v1248 = vand.u32 %v631, 4294901760
      %1249 = vmatmul.mubr.f32.gmra.mrb[0].mxu0 %v1248
      %v1250 = vpop.f32.mrb[0].mxu0
      %v1251 = vadd.f32 %v1125, %v1250
      %v1252 = vpop.f32.mrb[0].mxu0
      %1253 = vmatprep.mubr.f32.mxu0 0.0
      %v1254 = vand.u32 %v634, 4294901760
      %1255 = vmatmul.mubr.f32.gmra.mrb[0].mxu0 %v1254
      %v1256 = vpop.f32.mrb[0].mxu0
      %v1257 = vadd.f32 %v1133, %v1256
      %v1258 = vpop.f32.mrb[0].mxu0
      %1259 = vmatprep.mubr.f32.mxu0 0.0
      %v1260 = vand.u32 %v637, 4294901760
      %1261 = vmatmul.mubr.f32.gmra.mrb[0].mxu0 %v1260
      %v1262 = vpop.f32.mrb[0].mxu0
      %v1263 = vadd.f32 %v1141, %v1262
      %v1264 = vpop.f32.mrb[0].mxu0
      %1265 = vmatprep.mubr.f32.mxu0 0.0
      %v1266 = vand.u32 %v640, 4294901760
      %1267 = vmatmul.mubr.f32.gmra.mrb[0].mxu0 %v1266
      %v1268 = vpop.f32.mrb[0].mxu0
      %v1269 = vadd.f32 %v1149, %v1268
      %v1270 = vpop.f32.mrb[0].mxu0
      %1271 = vmatprep.mubr.f32.mxu0 0.0
      %v1272 = vand.u32 %v643, 4294901760
      %1273 = vmatmul.mubr.f32.gmra.mrb[0].mxu0 %v1272
      %v1274 = vpop.f32.mrb[0].mxu0
      %v1275 = vadd.f32 %v1157, %v1274
      %v1276 = vpop.f32.mrb[0].mxu0
      %1277 = vmatprep.mubr.f32.mxu0 0.0
      %v1278 = vand.u32 %v646, 4294901760
      %1279 = vmatmul.mubr.f32.gmra.mrb[0].mxu0 %v1278
      %v1280 = vpop.f32.mrb[0].mxu0
      %v1281 = vadd.f32 %v1165, %v1280
      %v1282 = vpop.f32.mrb[0].mxu0
      %1283 = vdwg.mxu0
      %1284 = vmatprep.subr.mxu0 0.0
      %v1285 = vand.u32 %v649, 4294901760
      %1286 = vmatpush1.xpose.msra.mxu0 %v1285
      %1287 = vmatprep.subr.mxu0 0.0
      %1288 = vmatpush1.xpose.msra.mxu0 0.0
      %1289 = vmatprep.subr.mxu0 0.0
      %1290 = vmatpush1.xpose.msra.mxu0 0.0
      %1291 = vmatprep.subr.mxu0 0.0
      %1292 = vmatpush1.xpose.msra.mxu0 0.0
      %1293 = vmatprep.subr.mxu0 0.0
      %1294 = vmatpush1.xpose.msra.mxu0 0.0
      %1295 = vmatprep.subr.mxu0 0.0
      %1296 = vmatpush1.xpose.msra.mxu0 0.0
      %1297 = vmatprep.subr.mxu0 0.0
      %1298 = vmatpush1.xpose.msra.mxu0 0.0
      %1299 = vmatprep.subr.mxu0 0.0
      %1300 = vmatpush1.xpose.msra.mxu0 0.0
      %1301 = vmatprep.subr.mxu0 0.0
      %1302 = vmatpush1.xpose.msra.mxu0 0.0
      %1303 = vmatprep.subr.mxu0 0.0
      %1304 = vmatpush1.xpose.msra.mxu0 0.0
      %1305 = vmatprep.subr.mxu0 0.0
      %1306 = vmatpush1.xpose.msra.mxu0 0.0
      %1307 = vmatprep.subr.mxu0 0.0
      %1308 = vmatpush1.xpose.msra.mxu0 0.0
      %1309 = vmatprep.subr.mxu0 0.0
      %1310 = vmatpush1.xpose.msra.mxu0 0.0
      %1311 = vmatprep.subr.mxu0 0.0
      %1312 = vmatpush1.xpose.msra.mxu0 0.0
      %1313 = vmatprep.subr.mxu0 0.0
      %1314 = vmatpush1.xpose.msra.mxu0 0.0
      %1315 = vmatprep.subr.mxu0 0.0
      %1316 = vmatpush1.xpose.msra.mxu0 0.0
      %1317 = vmatprep.subr.mxu0 0.0
      %1318 = vmatpush1.xpose.msra.mxu0 0.0
      %1319 = vmatprep.subr.mxu0 0.0
      %1320 = vmatpush1.xpose.msra.mxu0 0.0
      %1321 = vmatprep.subr.mxu0 0.0
      %1322 = vmatpush1.xpose.msra.mxu0 0.0
      %1323 = vmatprep.subr.mxu0 0.0
      %1324 = vmatpush1.xpose.msra.mxu0 0.0
      %1325 = vmatprep.subr.mxu0 0.0
      %1326 = vmatpush1.xpose.msra.mxu0 0.0
      %1327 = vmatprep.subr.mxu0 0.0
      %1328 = vmatpush1.xpose.msra.mxu0 0.0
      %1329 = vmatprep.subr.mxu0 0.0
      %1330 = vmatpush1.xpose.msra.mxu0 0.0
      %1331 = vmatprep.subr.mxu0 0.0
      %1332 = vmatpush1.xpose.msra.mxu0 0.0
      %1333 = vmatprep.subr.mxu0 0.0
      %1334 = vmatpush1.xpose.msra.mxu0 0.0
      %1335 = vmatprep.subr.mxu0 0.0
      %1336 = vmatpush1.xpose.msra.mxu0 0.0
      %1337 = vmatprep.subr.mxu0 0.0
      %1338 = vmatpush1.xpose.msra.mxu0 0.0
      %1339 = vmatprep.subr.mxu0 0.0
      %1340 = vmatpush1.xpose.msra.mxu0 0.0
      %1341 = vmatprep.subr.mxu0 0.0
      %1342 = vmatpush1.xpose.msra.mxu0 0.0
      %1343 = vmatprep.subr.mxu0 0.0
      %1344 = vmatpush1.xpose.msra.mxu0 0.0
      %1345 = vmatprep.subr.mxu0 0.0
      %1346 = vmatpush1.xpose.msra.mxu0 0.0
      %1347 = vmatprep.subr.mxu0 0.0
      %1348 = vmatpush1.xpose.msra.mxu0 0.0
      %1349 = vmatprep.mubr.f32.mxu0 0.0
      %v1350 = vand.u32 %v625, 4294901760
      %1351 = vmatmul.mubr.f32.gmra.mrb[0].mxu0 %v1350
      %v1352 = vpop.f32.mrb[0].mxu0
      %v1353 = vadd.f32 %v1239, %v1352
      %v1354 = vpop.f32.mrb[0].mxu0
      %1355 = vmatprep.mubr.f32.mxu0 0.0
      %v1356 = vand.u32 %v628, 4294901760
      %1357 = vmatmul.mubr.f32.gmra.mrb[0].mxu0 %v1356
      %v1358 = vpop.f32.mrb[0].mxu0
      %v1359 = vadd.f32 %v1245, %v1358
      %v1360 = vpop.f32.mrb[0].mxu0
      %1361 = vmatprep.mubr.f32.mxu0 0.0
      %v1362 = vand.u32 %v631, 4294901760
      %1363 = vmatmul.mubr.f32.gmra.mrb[0].mxu0 %v1362
      %v1364 = vpop.f32.mrb[0].mxu0
      %v1365 = vadd.f32 %v1251, %v1364
      %v1366 = vpop.f32.mrb[0].mxu0
      %1367 = vmatprep.mubr.f32.mxu0 0.0
      %v1368 = vand.u32 %v634, 4294901760
      %1369 = vmatmul.mubr.f32.gmra.mrb[0].mxu0 %v1368
      %v1370 = vpop.f32.mrb[0].mxu0
      %v1371 = vadd.f32 %v1257, %v1370
      %v1372 = vpop.f32.mrb[0].mxu0
      %1373 = vmatprep.mubr.f32.mxu0 0.0
      %v1374 = vand.u32 %v637, 4294901760
      %1375 = vmatmul.mubr.f32.gmra.mrb[0].mxu0 %v1374
      %v1376 = vpop.f32.mrb[0].mxu0
      %v1377 = vadd.f32 %v1263, %v1376
      %v1378 = vpop.f32.mrb[0].mxu0
      %1379 = vmatprep.mubr.f32.mxu0 0.0
      %v1380 = vand.u32 %v640, 4294901760
      %1381 = vmatmul.mubr.f32.gmra.mrb[0].mxu0 %v1380
      %v1382 = vpop.f32.mrb[0].mxu0
      %v1383 = vadd.f32 %v1269, %v1382
      %v1384 = vpop.f32.mrb[0].mxu0
      %1385 = vmatprep.mubr.f32.mxu0 0.0
      %v1386 = vand.u32 %v643, 4294901760
      %1387 = vmatmul.mubr.f32.gmra.mrb[0].mxu0 %v1386
      %v1388 = vpop.f32.mrb[0].mxu0
      %v1389 = vadd.f32 %v1275, %v1388
      %v1390 = vpop.f32.mrb[0].mxu0
      %1391 = vmatprep.mubr.f32.mxu0 0.0
      %v1392 = vand.u32 %v646, 4294901760
      %1393 = vmatmul.mubr.f32.gmra.mrb[0].mxu0 %v1392
      %v1394 = vpop.f32.mrb[0].mxu0
      %v1395 = vadd.f32 %v1281, %v1394
      %v1396 = vpop.f32.mrb[0].mxu0
      %1397 = vdwg.mxu0
      %vm1398 = vcmp.ne.s32.totalorder %v113, %v115
      %vm1399 = vcmp.ne.s32.totalorder %v113, %v116
      %vm1400 = vcmp.ne.s32.totalorder %v113, %v117
      %vm1401 = vcmp.ne.s32.totalorder %v113, %v118
      %vm1402 = vcmp.ne.s32.totalorder %v113, %v119
      %vm1403 = vcmp.ne.s32.totalorder %v113, %v120
      %vm1404 = vcmp.ne.s32.totalorder %v113, %v121
      %vm1405 = vcmp.ne.s32.totalorder %v113, %v122
      %vm1406 = vcmp.lt.s32.totalorder %v113, %v115
      %vm1407 = vcmp.lt.s32.totalorder %v113, %v116
      %vm1408 = vcmp.lt.s32.totalorder %v113, %v117
      %vm1409 = vcmp.lt.s32.totalorder %v113, %v118
      %vm1410 = vcmp.lt.s32.totalorder %v113, %v119
      %vm1411 = vcmp.lt.s32.totalorder %v113, %v120
      %vm1412 = vcmp.lt.s32.totalorder %v113, %v121
      %vm1413 = vcmp.lt.s32.totalorder %v113, %v122
      %vm1414 = vcmp.ge.s32.totalorder %v113, 8
      %v1415 = vsel %vm1414, 1, 0
      %vm1416 = vcmp.ge.s32.totalorder %v113, 16
      %v1417 = vsel %vm1416, 1, 0
      %v1418 = vadd.s32 %v1415, %v1417
      %vm1419 = vcmp.ge.s32.totalorder %v113, 24
      %v1420 = vsel %vm1419, 1, 0
      %v1421 = vadd.s32 %v1418, %v1420
      %vm1422 = vcmp.ge.s32.totalorder %v113, 32
      %v1423 = vsel %vm1422, 1, 0
      %v1424 = vadd.s32 %v1421, %v1423
      %vm1425 = vcmp.ge.s32.totalorder %v113, 40
      %v1426 = vsel %vm1425, 1, 0
      %v1427 = vadd.s32 %v1424, %v1426
      %vm1428 = vcmp.ge.s32.totalorder %v113, 48
      %v1429 = vsel %vm1428, 1, 0
      %v1430 = vadd.s32 %v1427, %v1429
      %vm1431 = vcmp.ge.s32.totalorder %v113, 56
      %v1432 = vsel %vm1431, 1, 0
      %v1433 = vadd.s32 %v1430, %v1432
      %vm1434 = vcmp.ge.s32.totalorder %v113, 64
      %v1435 = vsel %vm1434, 1, 0
      %v1436 = vadd.s32 %v1433, %v1435
      %vm1437 = vcmp.ge.s32.totalorder %v113, 72
      %v1438 = vsel %vm1437, 1, 0
      %v1439 = vadd.s32 %v1436, %v1438
      %vm1440 = vcmp.ge.s32.totalorder %v113, 80
      %v1441 = vsel %vm1440, 1, 0
      %v1442 = vadd.s32 %v1439, %v1441
      %vm1443 = vcmp.ge.s32.totalorder %v113, 88
      %v1444 = vsel %vm1443, 1, 0
      %v1445 = vadd.s32 %v1442, %v1444
      %vm1446 = vcmp.ge.s32.totalorder %v113, 96
      %v1447 = vsel %vm1446, 1, 0
      %v1448 = vadd.s32 %v1445, %v1447
      %vm1449 = vcmp.ge.s32.totalorder %v113, 104
      %v1450 = vsel %vm1449, 1, 0
      %v1451 = vadd.s32 %v1448, %v1450
      %vm1452 = vcmp.ge.s32.totalorder %v113, 112
      %v1453 = vsel %vm1452, 1, 0
      %v1454 = vadd.s32 %v1451, %v1453
      %vm1455 = vcmp.ge.s32.totalorder %v113, 120
      %v1456 = vsel %vm1455, 1, 0
      %v1457 = vadd.s32 %v1454, %v1456
      %v1458 = vmul.u32 %v1457, 8
      %v1459 = vsub.s32 %v113, %v1458
      %v1460 = vcvt.s32.f32 %v1457
      %1462 = vset.pattern.permute.xlu0 0
      %1463 = vperm.xlu0 %1462, %v1353
      %v1464 = vpop.permute.xlu0 %1463
      %1467 = vset.pattern.permute.xlu0 0
      %1468 = vperm.xlu0 %1467, %v1359
      %v1469 = vpop.permute.xlu0 %1468
      %1472 = vset.pattern.permute.xlu0 0
      %1473 = vperm.xlu0 %1472, %v1365
      %v1474 = vpop.permute.xlu0 %1473
      %1477 = vset.pattern.permute.xlu0 0
      %1478 = vperm.xlu0 %1477, %v1371
      %v1479 = vpop.permute.xlu0 %1478
      %1482 = vset.pattern.permute.xlu0 0
      %1483 = vperm.xlu0 %1482, %v1377
      %v1484 = vpop.permute.xlu0 %1483
      %1487 = vset.pattern.permute.xlu0 0
      %1488 = vperm.xlu0 %1487, %v1383
      %v1489 = vpop.permute.xlu0 %1488
      %1492 = vset.pattern.permute.xlu0 0
      %1493 = vperm.xlu0 %1492, %v1389
      %v1494 = vpop.permute.xlu0 %1493
      %1497 = vset.pattern.permute.xlu0 0
      %1498 = vperm.xlu0 %1497, %v1395
      %v1499 = vpop.permute.xlu0 %1498
      %vm1501 = vcmp.lt.f32.partialorder %v565, %v1464
      %vm1502 = vcmp.lt.f32.partialorder %v565, %v1469
      %vm1503 = vcmp.lt.f32.partialorder %v565, %v1474
      %vm1504 = vcmp.lt.f32.partialorder %v565, %v1479
      %vm1505 = vcmp.lt.f32.partialorder %v565, %v1484
      %vm1506 = vcmp.lt.f32.partialorder %v565, %v1489
      %vm1507 = vcmp.lt.f32.partialorder %v565, %v1494
      %vm1508 = vcmp.lt.f32.partialorder %v565, %v1499
      %vm1509 = vcmp.eq.f32.partialorder %v565, %v1464
      %vm1510 = vcmp.eq.f32.partialorder %v565, %v1469
      %vm1511 = vcmp.eq.f32.partialorder %v565, %v1474
      %vm1512 = vcmp.eq.f32.partialorder %v565, %v1479
      %vm1513 = vcmp.eq.f32.partialorder %v565, %v1484
      %vm1514 = vcmp.eq.f32.partialorder %v565, %v1489
      %vm1515 = vcmp.eq.f32.partialorder %v565, %v1494
      %vm1516 = vcmp.eq.f32.partialorder %v565, %v1499
      %vm1517 = vmand %vm1509, %vm1406
      %vm1518 = vmand %vm1510, %vm1407
      %vm1519 = vmand %vm1511, %vm1408
      %vm1520 = vmand %vm1512, %vm1409
      %vm1521 = vmand %vm1513, %vm1410
      %vm1522 = vmand %vm1514, %vm1411
      %vm1523 = vmand %vm1515, %vm1412
      %vm1524 = vmand %vm1516, %vm1413
      %vm1525 = vmor %vm1501, %vm1517
      %vm1526 = vmor %vm1502, %vm1518
      %vm1527 = vmor %vm1503, %vm1519
      %vm1528 = vmor %vm1504, %vm1520
      %vm1529 = vmor %vm1505, %vm1521
      %vm1530 = vmor %vm1506, %vm1522
      %vm1531 = vmor %vm1507, %vm1523
      %vm1532 = vmor %vm1508, %vm1524
      %vm1533 = vmand %vm1398, %vm1525
      %vm1534 = vmand %vm1399, %vm1526
      %vm1535 = vmand %vm1400, %vm1527
      %vm1536 = vmand %vm1401, %vm1528
      %vm1537 = vmand %vm1402, %vm1529
      %vm1538 = vmand %vm1403, %vm1530
      %vm1539 = vmand %vm1404, %vm1531
      %vm1540 = vmand %vm1405, %vm1532
      %v1541 = vsel %vm1533, 1, 0
      %v1542 = vsel %vm1534, 1, 0
      %v1543 = vsel %vm1535, 1, 0
      %v1544 = vsel %vm1536, 1, 0
      %v1545 = vsel %vm1537, 1, 0
      %v1546 = vsel %vm1538, 1, 0
      %v1547 = vsel %vm1539, 1, 0
      %v1548 = vsel %vm1540, 1, 0
      %v1549 = vcvt.s32.f32 %v1541
      %v1550 = vcvt.s32.f32 %v1542
      %v1551 = vcvt.s32.f32 %v1543
      %v1552 = vcvt.s32.f32 %v1544
      %v1553 = vcvt.s32.f32 %v1545
      %v1554 = vcvt.s32.f32 %v1546
      %v1555 = vcvt.s32.f32 %v1547
      %v1556 = vcvt.s32.f32 %v1548
      %v1557 = vsel %vm623, %v1549, 0.0
      %1558 = vadd.xlane.f32.xlu0 %v1557
      %v1559 = vpop.xlane.xlu0 %1558
      %v1560 = vsel %vm623, %v1550, 0.0
      %1561 = vadd.xlane.f32.xlu0 %v1560
      %v1562 = vpop.xlane.xlu0 %1561
      %v1563 = vsel %vm623, %v1551, 0.0
      %1564 = vadd.xlane.f32.xlu0 %v1563
      %v1565 = vpop.xlane.xlu0 %1564
      %v1566 = vsel %vm623, %v1552, 0.0
      %1567 = vadd.xlane.f32.xlu0 %v1566
      %v1568 = vpop.xlane.xlu0 %1567
      %v1569 = vsel %vm623, %v1553, 0.0
      %1570 = vadd.xlane.f32.xlu0 %v1569
      %v1571 = vpop.xlane.xlu0 %1570
      %v1572 = vsel %vm623, %v1554, 0.0
      %1573 = vadd.xlane.f32.xlu0 %v1572
      %v1574 = vpop.xlane.xlu0 %1573
      %v1575 = vsel %vm623, %v1555, 0.0
      %1576 = vadd.xlane.f32.xlu0 %v1575
      %v1577 = vpop.xlane.xlu0 %1576
      %v1578 = vsel %vm623, %v1556, 0.0
      %1579 = vadd.xlane.f32.xlu0 %v1578
      %v1580 = vpop.xlane.xlu0 %1579
      %vm1581 = vcmp.eq.s32.totalorder %v1459, 0
      %v1582 = vsel %vm1581, 1, 0
      %vm1583 = vcmp.eq.s32.totalorder %v1582, 1
      %v1584 = vsel %vm1583, %v1559, 0.0
      %v1585 = vsel %vm1583, %v1562, 0.0
      %v1586 = vsel %vm1583, %v1565, 0.0
      %v1587 = vsel %vm1583, %v1568, 0.0
      %v1588 = vsel %vm1583, %v1571, 0.0
      %v1589 = vsel %vm1583, %v1574, 0.0
      %v1590 = vsel %vm1583, %v1577, 0.0
      %v1591 = vsel %vm1583, %v1580, 0.0
      %1592 = vset.pattern.permute.xlu0 1
      %1593 = vperm.xlu0 %1592, %v1353
      %v1594 = vpop.permute.xlu0 %1593
      %1596 = vset.pattern.permute.xlu0 1
      %1597 = vperm.xlu0 %1596, %v1359
      %v1598 = vpop.permute.xlu0 %1597
      %1600 = vset.pattern.permute.xlu0 1
      %1601 = vperm.xlu0 %1600, %v1365
      %v1602 = vpop.permute.xlu0 %1601
      %1604 = vset.pattern.permute.xlu0 1
      %1605 = vperm.xlu0 %1604, %v1371
      %v1606 = vpop.permute.xlu0 %1605
      %1608 = vset.pattern.permute.xlu0 1
      %1609 = vperm.xlu0 %1608, %v1377
      %v1610 = vpop.permute.xlu0 %1609
      %1612 = vset.pattern.permute.xlu0 1
      %1613 = vperm.xlu0 %1612, %v1383
      %v1614 = vpop.permute.xlu0 %1613
      %1616 = vset.pattern.permute.xlu0 1
      %1617 = vperm.xlu0 %1616, %v1389
      %v1618 = vpop.permute.xlu0 %1617
      %1620 = vset.pattern.permute.xlu0 1
      %1621 = vperm.xlu0 %1620, %v1395
      %v1622 = vpop.permute.xlu0 %1621
      %vm1624 = vcmp.lt.f32.partialorder %v573, %v1594
      %vm1625 = vcmp.lt.f32.partialorder %v573, %v1598
      %vm1626 = vcmp.lt.f32.partialorder %v573, %v1602
      %vm1627 = vcmp.lt.f32.partialorder %v573, %v1606
      %vm1628 = vcmp.lt.f32.partialorder %v573, %v1610
      %vm1629 = vcmp.lt.f32.partialorder %v573, %v1614
      %vm1630 = vcmp.lt.f32.partialorder %v573, %v1618
      %vm1631 = vcmp.lt.f32.partialorder %v573, %v1622
      %vm1632 = vcmp.eq.f32.partialorder %v573, %v1594
      %vm1633 = vcmp.eq.f32.partialorder %v573, %v1598
      %vm1634 = vcmp.eq.f32.partialorder %v573, %v1602
      %vm1635 = vcmp.eq.f32.partialorder %v573, %v1606
      %vm1636 = vcmp.eq.f32.partialorder %v573, %v1610
      %vm1637 = vcmp.eq.f32.partialorder %v573, %v1614
      %vm1638 = vcmp.eq.f32.partialorder %v573, %v1618
      %vm1639 = vcmp.eq.f32.partialorder %v573, %v1622
      %vm1640 = vmand %vm1632, %vm1406
      %vm1641 = vmand %vm1633, %vm1407
      %vm1642 = vmand %vm1634, %vm1408
      %vm1643 = vmand %vm1635, %vm1409
      %vm1644 = vmand %vm1636, %vm1410
      %vm1645 = vmand %vm1637, %vm1411
      %vm1646 = vmand %vm1638, %vm1412
      %vm1647 = vmand %vm1639, %vm1413
      %vm1648 = vmor %vm1624, %vm1640
      %vm1649 = vmor %vm1625, %vm1641
      %vm1650 = vmor %vm1626, %vm1642
      %vm1651 = vmor %vm1627, %vm1643
      %vm1652 = vmor %vm1628, %vm1644
      %vm1653 = vmor %vm1629, %vm1645
      %vm1654 = vmor %vm1630, %vm1646
      %vm1655 = vmor %vm1631, %vm1647
      %vm1656 = vmand %vm1398, %vm1648
      %vm1657 = vmand %vm1399, %vm1649
      %vm1658 = vmand %vm1400, %vm1650
      %vm1659 = vmand %vm1401, %vm1651
      %vm1660 = vmand %vm1402, %vm1652
      %vm1661 = vmand %vm1403, %vm1653
      %vm1662 = vmand %vm1404, %vm1654
      %vm1663 = vmand %vm1405, %vm1655
      %v1664 = vsel %vm1656, 1, 0
      %v1665 = vsel %vm1657, 1, 0
      %v1666 = vsel %vm1658, 1, 0
      %v1667 = vsel %vm1659, 1, 0
      %v1668 = vsel %vm1660, 1, 0
      %v1669 = vsel %vm1661, 1, 0
      %v1670 = vsel %vm1662, 1, 0
      %v1671 = vsel %vm1663, 1, 0
      %v1672 = vcvt.s32.f32 %v1664
      %v1673 = vcvt.s32.f32 %v1665
      %v1674 = vcvt.s32.f32 %v1666
      %v1675 = vcvt.s32.f32 %v1667
      %v1676 = vcvt.s32.f32 %v1668
      %v1677 = vcvt.s32.f32 %v1669
      %v1678 = vcvt.s32.f32 %v1670
      %v1679 = vcvt.s32.f32 %v1671
      %v1680 = vsel %vm623, %v1672, 0.0
      %1681 = vadd.xlane.f32.xlu0 %v1680
      %v1682 = vpop.xlane.xlu0 %1681
      %v1683 = vsel %vm623, %v1673, 0.0
      %1684 = vadd.xlane.f32.xlu0 %v1683
      %v1685 = vpop.xlane.xlu0 %1684
      %v1686 = vsel %vm623, %v1674, 0.0
      %1687 = vadd.xlane.f32.xlu0 %v1686
      %v1688 = vpop.xlane.xlu0 %1687
      %v1689 = vsel %vm623, %v1675, 0.0
      %1690 = vadd.xlane.f32.xlu0 %v1689
      %v1691 = vpop.xlane.xlu0 %1690
      %v1692 = vsel %vm623, %v1676, 0.0
      %1693 = vadd.xlane.f32.xlu0 %v1692
      %v1694 = vpop.xlane.xlu0 %1693
      %v1695 = vsel %vm623, %v1677, 0.0
      %1696 = vadd.xlane.f32.xlu0 %v1695
      %v1697 = vpop.xlane.xlu0 %1696
      %v1698 = vsel %vm623, %v1678, 0.0
      %1699 = vadd.xlane.f32.xlu0 %v1698
      %v1700 = vpop.xlane.xlu0 %1699
      %v1701 = vsel %vm623, %v1679, 0.0
      %1702 = vadd.xlane.f32.xlu0 %v1701
      %v1703 = vpop.xlane.xlu0 %1702
      %vm1704 = vcmp.eq.s32.totalorder %v1459, 1
      %v1705 = vsel %vm1704, 1, 0
      %vm1706 = vcmp.eq.s32.totalorder %v1705, 1
      %v1707 = vsel %vm1706, %v1682, %v1584
      %v1708 = vsel %vm1706, %v1685, %v1585
      %v1709 = vsel %vm1706, %v1688, %v1586
      %v1710 = vsel %vm1706, %v1691, %v1587
      %v1711 = vsel %vm1706, %v1694, %v1588
      %v1712 = vsel %vm1706, %v1697, %v1589
      %v1713 = vsel %vm1706, %v1700, %v1590
      %v1714 = vsel %vm1706, %v1703, %v1591
      %1715 = vset.pattern.permute.xlu0 2
      %1716 = vperm.xlu0 %1715, %v1353
      %v1717 = vpop.permute.xlu0 %1716
      %1719 = vset.pattern.permute.xlu0 2
      %1720 = vperm.xlu0 %1719, %v1359
      %v1721 = vpop.permute.xlu0 %1720
      %1723 = vset.pattern.permute.xlu0 2
      %1724 = vperm.xlu0 %1723, %v1365
      %v1725 = vpop.permute.xlu0 %1724
      %1727 = vset.pattern.permute.xlu0 2
      %1728 = vperm.xlu0 %1727, %v1371
      %v1729 = vpop.permute.xlu0 %1728
      %1731 = vset.pattern.permute.xlu0 2
      %1732 = vperm.xlu0 %1731, %v1377
      %v1733 = vpop.permute.xlu0 %1732
      %1735 = vset.pattern.permute.xlu0 2
      %1736 = vperm.xlu0 %1735, %v1383
      %v1737 = vpop.permute.xlu0 %1736
      %1739 = vset.pattern.permute.xlu0 2
      %1740 = vperm.xlu0 %1739, %v1389
      %v1741 = vpop.permute.xlu0 %1740
      %1743 = vset.pattern.permute.xlu0 2
      %1744 = vperm.xlu0 %1743, %v1395
      %v1745 = vpop.permute.xlu0 %1744
      %vm1747 = vcmp.lt.f32.partialorder %v581, %v1717
      %vm1748 = vcmp.lt.f32.partialorder %v581, %v1721
      %vm1749 = vcmp.lt.f32.partialorder %v581, %v1725
      %vm1750 = vcmp.lt.f32.partialorder %v581, %v1729
      %vm1751 = vcmp.lt.f32.partialorder %v581, %v1733
      %vm1752 = vcmp.lt.f32.partialorder %v581, %v1737
      %vm1753 = vcmp.lt.f32.partialorder %v581, %v1741
      %vm1754 = vcmp.lt.f32.partialorder %v581, %v1745
      %vm1755 = vcmp.eq.f32.partialorder %v581, %v1717
      %vm1756 = vcmp.eq.f32.partialorder %v581, %v1721
      %vm1757 = vcmp.eq.f32.partialorder %v581, %v1725
      %vm1758 = vcmp.eq.f32.partialorder %v581, %v1729
      %vm1759 = vcmp.eq.f32.partialorder %v581, %v1733
      %vm1760 = vcmp.eq.f32.partialorder %v581, %v1737
      %vm1761 = vcmp.eq.f32.partialorder %v581, %v1741
      %vm1762 = vcmp.eq.f32.partialorder %v581, %v1745
      %vm1763 = vmand %vm1755, %vm1406
      %vm1764 = vmand %vm1756, %vm1407
      %vm1765 = vmand %vm1757, %vm1408
      %vm1766 = vmand %vm1758, %vm1409
      %vm1767 = vmand %vm1759, %vm1410
      %vm1768 = vmand %vm1760, %vm1411
      %vm1769 = vmand %vm1761, %vm1412
      %vm1770 = vmand %vm1762, %vm1413
      %vm1771 = vmor %vm1747, %vm1763
      %vm1772 = vmor %vm1748, %vm1764
      %vm1773 = vmor %vm1749, %vm1765
      %vm1774 = vmor %vm1750, %vm1766
      %vm1775 = vmor %vm1751, %vm1767
      %vm1776 = vmor %vm1752, %vm1768
      %vm1777 = vmor %vm1753, %vm1769
      %vm1778 = vmor %vm1754, %vm1770
      %vm1779 = vmand %vm1398, %vm1771
      %vm1780 = vmand %vm1399, %vm1772
      %vm1781 = vmand %vm1400, %vm1773
      %vm1782 = vmand %vm1401, %vm1774
      %vm1783 = vmand %vm1402, %vm1775
      %vm1784 = vmand %vm1403, %vm1776
      %vm1785 = vmand %vm1404, %vm1777
      %vm1786 = vmand %vm1405, %vm1778
      %v1787 = vsel %vm1779, 1, 0
      %v1788 = vsel %vm1780, 1, 0
      %v1789 = vsel %vm1781, 1, 0
      %v1790 = vsel %vm1782, 1, 0
      %v1791 = vsel %vm1783, 1, 0
      %v1792 = vsel %vm1784, 1, 0
      %v1793 = vsel %vm1785, 1, 0
      %v1794 = vsel %vm1786, 1, 0
      %v1795 = vcvt.s32.f32 %v1787
      %v1796 = vcvt.s32.f32 %v1788
      %v1797 = vcvt.s32.f32 %v1789
      %v1798 = vcvt.s32.f32 %v1790
      %v1799 = vcvt.s32.f32 %v1791
      %v1800 = vcvt.s32.f32 %v1792
      %v1801 = vcvt.s32.f32 %v1793
      %v1802 = vcvt.s32.f32 %v1794
      %v1803 = vsel %vm623, %v1795, 0.0
      %1804 = vadd.xlane.f32.xlu0 %v1803
      %v1805 = vpop.xlane.xlu0 %1804
      %v1806 = vsel %vm623, %v1796, 0.0
      %1807 = vadd.xlane.f32.xlu0 %v1806
      %v1808 = vpop.xlane.xlu0 %1807
      %v1809 = vsel %vm623, %v1797, 0.0
      %1810 = vadd.xlane.f32.xlu0 %v1809
      %v1811 = vpop.xlane.xlu0 %1810
      %v1812 = vsel %vm623, %v1798, 0.0
      %1813 = vadd.xlane.f32.xlu0 %v1812
      %v1814 = vpop.xlane.xlu0 %1813
      %v1815 = vsel %vm623, %v1799, 0.0
      %1816 = vadd.xlane.f32.xlu0 %v1815
      %v1817 = vpop.xlane.xlu0 %1816
      %v1818 = vsel %vm623, %v1800, 0.0
      %1819 = vadd.xlane.f32.xlu0 %v1818
      %v1820 = vpop.xlane.xlu0 %1819
      %v1821 = vsel %vm623, %v1801, 0.0
      %1822 = vadd.xlane.f32.xlu0 %v1821
      %v1823 = vpop.xlane.xlu0 %1822
      %v1824 = vsel %vm623, %v1802, 0.0
      %1825 = vadd.xlane.f32.xlu0 %v1824
      %v1826 = vpop.xlane.xlu0 %1825
      %vm1827 = vcmp.eq.s32.totalorder %v1459, 2
      %v1828 = vsel %vm1827, 1, 0
      %vm1829 = vcmp.eq.s32.totalorder %v1828, 1
      %v1830 = vsel %vm1829, %v1805, %v1707
      %v1831 = vsel %vm1829, %v1808, %v1708
      %v1832 = vsel %vm1829, %v1811, %v1709
      %v1833 = vsel %vm1829, %v1814, %v1710
      %v1834 = vsel %vm1829, %v1817, %v1711
      %v1835 = vsel %vm1829, %v1820, %v1712
      %v1836 = vsel %vm1829, %v1823, %v1713
      %v1837 = vsel %vm1829, %v1826, %v1714
      %1838 = vset.pattern.permute.xlu0 3
      %1839 = vperm.xlu0 %1838, %v1353
      %v1840 = vpop.permute.xlu0 %1839
      %1842 = vset.pattern.permute.xlu0 3
      %1843 = vperm.xlu0 %1842, %v1359
      %v1844 = vpop.permute.xlu0 %1843
      %1846 = vset.pattern.permute.xlu0 3
      %1847 = vperm.xlu0 %1846, %v1365
      %v1848 = vpop.permute.xlu0 %1847
      %1850 = vset.pattern.permute.xlu0 3
      %1851 = vperm.xlu0 %1850, %v1371
      %v1852 = vpop.permute.xlu0 %1851
      %1854 = vset.pattern.permute.xlu0 3
      %1855 = vperm.xlu0 %1854, %v1377
      %v1856 = vpop.permute.xlu0 %1855
      %1858 = vset.pattern.permute.xlu0 3
      %1859 = vperm.xlu0 %1858, %v1383
      %v1860 = vpop.permute.xlu0 %1859
      %1862 = vset.pattern.permute.xlu0 3
      %1863 = vperm.xlu0 %1862, %v1389
      %v1864 = vpop.permute.xlu0 %1863
      %1866 = vset.pattern.permute.xlu0 3
      %1867 = vperm.xlu0 %1866, %v1395
      %v1868 = vpop.permute.xlu0 %1867
      %vm1870 = vcmp.lt.f32.partialorder %v589, %v1840
      %vm1871 = vcmp.lt.f32.partialorder %v589, %v1844
      %vm1872 = vcmp.lt.f32.partialorder %v589, %v1848
      %vm1873 = vcmp.lt.f32.partialorder %v589, %v1852
      %vm1874 = vcmp.lt.f32.partialorder %v589, %v1856
      %vm1875 = vcmp.lt.f32.partialorder %v589, %v1860
      %vm1876 = vcmp.lt.f32.partialorder %v589, %v1864
      %vm1877 = vcmp.lt.f32.partialorder %v589, %v1868
      %vm1878 = vcmp.eq.f32.partialorder %v589, %v1840
      %vm1879 = vcmp.eq.f32.partialorder %v589, %v1844
      %vm1880 = vcmp.eq.f32.partialorder %v589, %v1848
      %vm1881 = vcmp.eq.f32.partialorder %v589, %v1852
      %vm1882 = vcmp.eq.f32.partialorder %v589, %v1856
      %vm1883 = vcmp.eq.f32.partialorder %v589, %v1860
      %vm1884 = vcmp.eq.f32.partialorder %v589, %v1864
      %vm1885 = vcmp.eq.f32.partialorder %v589, %v1868
      %vm1886 = vmand %vm1878, %vm1406
      %vm1887 = vmand %vm1879, %vm1407
      %vm1888 = vmand %vm1880, %vm1408
      %vm1889 = vmand %vm1881, %vm1409
      %vm1890 = vmand %vm1882, %vm1410
      %vm1891 = vmand %vm1883, %vm1411
      %vm1892 = vmand %vm1884, %vm1412
      %vm1893 = vmand %vm1885, %vm1413
      %vm1894 = vmor %vm1870, %vm1886
      %vm1895 = vmor %vm1871, %vm1887
      %vm1896 = vmor %vm1872, %vm1888
      %vm1897 = vmor %vm1873, %vm1889
      %vm1898 = vmor %vm1874, %vm1890
      %vm1899 = vmor %vm1875, %vm1891
      %vm1900 = vmor %vm1876, %vm1892
      %vm1901 = vmor %vm1877, %vm1893
      %vm1902 = vmand %vm1398, %vm1894
      %vm1903 = vmand %vm1399, %vm1895
      %vm1904 = vmand %vm1400, %vm1896
      %vm1905 = vmand %vm1401, %vm1897
      %vm1906 = vmand %vm1402, %vm1898
      %vm1907 = vmand %vm1403, %vm1899
      %vm1908 = vmand %vm1404, %vm1900
      %vm1909 = vmand %vm1405, %vm1901
      %v1910 = vsel %vm1902, 1, 0
      %v1911 = vsel %vm1903, 1, 0
      %v1912 = vsel %vm1904, 1, 0
      %v1913 = vsel %vm1905, 1, 0
      %v1914 = vsel %vm1906, 1, 0
      %v1915 = vsel %vm1907, 1, 0
      %v1916 = vsel %vm1908, 1, 0
      %v1917 = vsel %vm1909, 1, 0
      %v1918 = vcvt.s32.f32 %v1910
      %v1919 = vcvt.s32.f32 %v1911
      %v1920 = vcvt.s32.f32 %v1912
      %v1921 = vcvt.s32.f32 %v1913
      %v1922 = vcvt.s32.f32 %v1914
      %v1923 = vcvt.s32.f32 %v1915
      %v1924 = vcvt.s32.f32 %v1916
      %v1925 = vcvt.s32.f32 %v1917
      %v1926 = vsel %vm623, %v1918, 0.0
      %1927 = vadd.xlane.f32.xlu0 %v1926
      %v1928 = vpop.xlane.xlu0 %1927
      %v1929 = vsel %vm623, %v1919, 0.0
      %1930 = vadd.xlane.f32.xlu0 %v1929
      %v1931 = vpop.xlane.xlu0 %1930
      %v1932 = vsel %vm623, %v1920, 0.0
      %1933 = vadd.xlane.f32.xlu0 %v1932
      %v1934 = vpop.xlane.xlu0 %1933
      %v1935 = vsel %vm623, %v1921, 0.0
      %1936 = vadd.xlane.f32.xlu0 %v1935
      %v1937 = vpop.xlane.xlu0 %1936
      %v1938 = vsel %vm623, %v1922, 0.0
      %1939 = vadd.xlane.f32.xlu0 %v1938
      %v1940 = vpop.xlane.xlu0 %1939
      %v1941 = vsel %vm623, %v1923, 0.0
      %1942 = vadd.xlane.f32.xlu0 %v1941
      %v1943 = vpop.xlane.xlu0 %1942
      %v1944 = vsel %vm623, %v1924, 0.0
      %1945 = vadd.xlane.f32.xlu0 %v1944
      %v1946 = vpop.xlane.xlu0 %1945
      %v1947 = vsel %vm623, %v1925, 0.0
      %1948 = vadd.xlane.f32.xlu0 %v1947
      %v1949 = vpop.xlane.xlu0 %1948
      %vm1950 = vcmp.eq.s32.totalorder %v1459, 3
      %v1951 = vsel %vm1950, 1, 0
      %vm1952 = vcmp.eq.s32.totalorder %v1951, 1
      %v1953 = vsel %vm1952, %v1928, %v1830
      %v1954 = vsel %vm1952, %v1931, %v1831
      %v1955 = vsel %vm1952, %v1934, %v1832
      %v1956 = vsel %vm1952, %v1937, %v1833
      %v1957 = vsel %vm1952, %v1940, %v1834
      %v1958 = vsel %vm1952, %v1943, %v1835
      %v1959 = vsel %vm1952, %v1946, %v1836
      %v1960 = vsel %vm1952, %v1949, %v1837
      %1961 = vset.pattern.permute.xlu0 4
      %1962 = vperm.xlu0 %1961, %v1353
      %v1963 = vpop.permute.xlu0 %1962
      %1965 = vset.pattern.permute.xlu0 4
      %1966 = vperm.xlu0 %1965, %v1359
      %v1967 = vpop.permute.xlu0 %1966
      %1969 = vset.pattern.permute.xlu0 4
      %1970 = vperm.xlu0 %1969, %v1365
      %v1971 = vpop.permute.xlu0 %1970
      %1973 = vset.pattern.permute.xlu0 4
      %1974 = vperm.xlu0 %1973, %v1371
      %v1975 = vpop.permute.xlu0 %1974
      %1977 = vset.pattern.permute.xlu0 4
      %1978 = vperm.xlu0 %1977, %v1377
      %v1979 = vpop.permute.xlu0 %1978
      %1981 = vset.pattern.permute.xlu0 4
      %1982 = vperm.xlu0 %1981, %v1383
      %v1983 = vpop.permute.xlu0 %1982
      %1985 = vset.pattern.permute.xlu0 4
      %1986 = vperm.xlu0 %1985, %v1389
      %v1987 = vpop.permute.xlu0 %1986
      %1989 = vset.pattern.permute.xlu0 4
      %1990 = vperm.xlu0 %1989, %v1395
      %v1991 = vpop.permute.xlu0 %1990
      %vm1993 = vcmp.lt.f32.partialorder %v597, %v1963
      %vm1994 = vcmp.lt.f32.partialorder %v597, %v1967
      %vm1995 = vcmp.lt.f32.partialorder %v597, %v1971
      %vm1996 = vcmp.lt.f32.partialorder %v597, %v1975
      %vm1997 = vcmp.lt.f32.partialorder %v597, %v1979
      %vm1998 = vcmp.lt.f32.partialorder %v597, %v1983
      %vm1999 = vcmp.lt.f32.partialorder %v597, %v1987
      %vm2000 = vcmp.lt.f32.partialorder %v597, %v1991
      %vm2001 = vcmp.eq.f32.partialorder %v597, %v1963
      %vm2002 = vcmp.eq.f32.partialorder %v597, %v1967
      %vm2003 = vcmp.eq.f32.partialorder %v597, %v1971
      %vm2004 = vcmp.eq.f32.partialorder %v597, %v1975
      %vm2005 = vcmp.eq.f32.partialorder %v597, %v1979
      %vm2006 = vcmp.eq.f32.partialorder %v597, %v1983
      %vm2007 = vcmp.eq.f32.partialorder %v597, %v1987
      %vm2008 = vcmp.eq.f32.partialorder %v597, %v1991
      %vm2009 = vmand %vm2001, %vm1406
      %vm2010 = vmand %vm2002, %vm1407
      %vm2011 = vmand %vm2003, %vm1408
      %vm2012 = vmand %vm2004, %vm1409
      %vm2013 = vmand %vm2005, %vm1410
      %vm2014 = vmand %vm2006, %vm1411
      %vm2015 = vmand %vm2007, %vm1412
      %vm2016 = vmand %vm2008, %vm1413
      %vm2017 = vmor %vm1993, %vm2009
      %vm2018 = vmor %vm1994, %vm2010
      %vm2019 = vmor %vm1995, %vm2011
      %vm2020 = vmor %vm1996, %vm2012
      %vm2021 = vmor %vm1997, %vm2013
      %vm2022 = vmor %vm1998, %vm2014
      %vm2023 = vmor %vm1999, %vm2015
      %vm2024 = vmor %vm2000, %vm2016
      %vm2025 = vmand %vm1398, %vm2017
      %vm2026 = vmand %vm1399, %vm2018
      %vm2027 = vmand %vm1400, %vm2019
      %vm2028 = vmand %vm1401, %vm2020
      %vm2029 = vmand %vm1402, %vm2021
      %vm2030 = vmand %vm1403, %vm2022
      %vm2031 = vmand %vm1404, %vm2023
      %vm2032 = vmand %vm1405, %vm2024
      %v2033 = vsel %vm2025, 1, 0
      %v2034 = vsel %vm2026, 1, 0
      %v2035 = vsel %vm2027, 1, 0
      %v2036 = vsel %vm2028, 1, 0
      %v2037 = vsel %vm2029, 1, 0
      %v2038 = vsel %vm2030, 1, 0
      %v2039 = vsel %vm2031, 1, 0
      %v2040 = vsel %vm2032, 1, 0
      %v2041 = vcvt.s32.f32 %v2033
      %v2042 = vcvt.s32.f32 %v2034
      %v2043 = vcvt.s32.f32 %v2035
      %v2044 = vcvt.s32.f32 %v2036
      %v2045 = vcvt.s32.f32 %v2037
      %v2046 = vcvt.s32.f32 %v2038
      %v2047 = vcvt.s32.f32 %v2039
      %v2048 = vcvt.s32.f32 %v2040
      %v2049 = vsel %vm623, %v2041, 0.0
      %2050 = vadd.xlane.f32.xlu0 %v2049
      %v2051 = vpop.xlane.xlu0 %2050
      %v2052 = vsel %vm623, %v2042, 0.0
      %2053 = vadd.xlane.f32.xlu0 %v2052
      %v2054 = vpop.xlane.xlu0 %2053
      %v2055 = vsel %vm623, %v2043, 0.0
      %2056 = vadd.xlane.f32.xlu0 %v2055
      %v2057 = vpop.xlane.xlu0 %2056
      %v2058 = vsel %vm623, %v2044, 0.0
      %2059 = vadd.xlane.f32.xlu0 %v2058
      %v2060 = vpop.xlane.xlu0 %2059
      %v2061 = vsel %vm623, %v2045, 0.0
      %2062 = vadd.xlane.f32.xlu0 %v2061
      %v2063 = vpop.xlane.xlu0 %2062
      %v2064 = vsel %vm623, %v2046, 0.0
      %2065 = vadd.xlane.f32.xlu0 %v2064
      %v2066 = vpop.xlane.xlu0 %2065
      %v2067 = vsel %vm623, %v2047, 0.0
      %2068 = vadd.xlane.f32.xlu0 %v2067
      %v2069 = vpop.xlane.xlu0 %2068
      %v2070 = vsel %vm623, %v2048, 0.0
      %2071 = vadd.xlane.f32.xlu0 %v2070
      %v2072 = vpop.xlane.xlu0 %2071
      %vm2073 = vcmp.eq.s32.totalorder %v1459, 4
      %v2074 = vsel %vm2073, 1, 0
      %vm2075 = vcmp.eq.s32.totalorder %v2074, 1
      %v2076 = vsel %vm2075, %v2051, %v1953
      %v2077 = vsel %vm2075, %v2054, %v1954
      %v2078 = vsel %vm2075, %v2057, %v1955
      %v2079 = vsel %vm2075, %v2060, %v1956
      %v2080 = vsel %vm2075, %v2063, %v1957
      %v2081 = vsel %vm2075, %v2066, %v1958
      %v2082 = vsel %vm2075, %v2069, %v1959
      %v2083 = vsel %vm2075, %v2072, %v1960
      %2084 = vset.pattern.permute.xlu0 5
      %2085 = vperm.xlu0 %2084, %v1353
      %v2086 = vpop.permute.xlu0 %2085
      %2088 = vset.pattern.permute.xlu0 5
      %2089 = vperm.xlu0 %2088, %v1359
      %v2090 = vpop.permute.xlu0 %2089
      %2092 = vset.pattern.permute.xlu0 5
      %2093 = vperm.xlu0 %2092, %v1365
      %v2094 = vpop.permute.xlu0 %2093
      %2096 = vset.pattern.permute.xlu0 5
      %2097 = vperm.xlu0 %2096, %v1371
      %v2098 = vpop.permute.xlu0 %2097
      %2100 = vset.pattern.permute.xlu0 5
      %2101 = vperm.xlu0 %2100, %v1377
      %v2102 = vpop.permute.xlu0 %2101
      %2104 = vset.pattern.permute.xlu0 5
      %2105 = vperm.xlu0 %2104, %v1383
      %v2106 = vpop.permute.xlu0 %2105
      %2108 = vset.pattern.permute.xlu0 5
      %2109 = vperm.xlu0 %2108, %v1389
      %v2110 = vpop.permute.xlu0 %2109
      %2112 = vset.pattern.permute.xlu0 5
      %2113 = vperm.xlu0 %2112, %v1395
      %v2114 = vpop.permute.xlu0 %2113
      %vm2116 = vcmp.lt.f32.partialorder %v605, %v2086
      %vm2117 = vcmp.lt.f32.partialorder %v605, %v2090
      %vm2118 = vcmp.lt.f32.partialorder %v605, %v2094
      %vm2119 = vcmp.lt.f32.partialorder %v605, %v2098
      %vm2120 = vcmp.lt.f32.partialorder %v605, %v2102
      %vm2121 = vcmp.lt.f32.partialorder %v605, %v2106
      %vm2122 = vcmp.lt.f32.partialorder %v605, %v2110
      %vm2123 = vcmp.lt.f32.partialorder %v605, %v2114
      %vm2124 = vcmp.eq.f32.partialorder %v605, %v2086
      %vm2125 = vcmp.eq.f32.partialorder %v605, %v2090
      %vm2126 = vcmp.eq.f32.partialorder %v605, %v2094
      %vm2127 = vcmp.eq.f32.partialorder %v605, %v2098
      %vm2128 = vcmp.eq.f32.partialorder %v605, %v2102
      %vm2129 = vcmp.eq.f32.partialorder %v605, %v2106
      %vm2130 = vcmp.eq.f32.partialorder %v605, %v2110
      %vm2131 = vcmp.eq.f32.partialorder %v605, %v2114
      %vm2132 = vmand %vm2124, %vm1406
      %vm2133 = vmand %vm2125, %vm1407
      %vm2134 = vmand %vm2126, %vm1408
      %vm2135 = vmand %vm2127, %vm1409
      %vm2136 = vmand %vm2128, %vm1410
      %vm2137 = vmand %vm2129, %vm1411
      %vm2138 = vmand %vm2130, %vm1412
      %vm2139 = vmand %vm2131, %vm1413
      %vm2140 = vmor %vm2116, %vm2132
      %vm2141 = vmor %vm2117, %vm2133
      %vm2142 = vmor %vm2118, %vm2134
      %vm2143 = vmor %vm2119, %vm2135
      %vm2144 = vmor %vm2120, %vm2136
      %vm2145 = vmor %vm2121, %vm2137
      %vm2146 = vmor %vm2122, %vm2138
      %vm2147 = vmor %vm2123, %vm2139
      %vm2148 = vmand %vm1398, %vm2140
      %vm2149 = vmand %vm1399, %vm2141
      %vm2150 = vmand %vm1400, %vm2142
      %vm2151 = vmand %vm1401, %vm2143
      %vm2152 = vmand %vm1402, %vm2144
      %vm2153 = vmand %vm1403, %vm2145
      %vm2154 = vmand %vm1404, %vm2146
      %vm2155 = vmand %vm1405, %vm2147
      %v2156 = vsel %vm2148, 1, 0
      %v2157 = vsel %vm2149, 1, 0
      %v2158 = vsel %vm2150, 1, 0
      %v2159 = vsel %vm2151, 1, 0
      %v2160 = vsel %vm2152, 1, 0
      %v2161 = vsel %vm2153, 1, 0
      %v2162 = vsel %vm2154, 1, 0
      %v2163 = vsel %vm2155, 1, 0
      %v2164 = vcvt.s32.f32 %v2156
      %v2165 = vcvt.s32.f32 %v2157
      %v2166 = vcvt.s32.f32 %v2158
      %v2167 = vcvt.s32.f32 %v2159
      %v2168 = vcvt.s32.f32 %v2160
      %v2169 = vcvt.s32.f32 %v2161
      %v2170 = vcvt.s32.f32 %v2162
      %v2171 = vcvt.s32.f32 %v2163
      %v2172 = vsel %vm623, %v2164, 0.0
      %2173 = vadd.xlane.f32.xlu0 %v2172
      %v2174 = vpop.xlane.xlu0 %2173
      %v2175 = vsel %vm623, %v2165, 0.0
      %2176 = vadd.xlane.f32.xlu0 %v2175
      %v2177 = vpop.xlane.xlu0 %2176
      %v2178 = vsel %vm623, %v2166, 0.0
      %2179 = vadd.xlane.f32.xlu0 %v2178
      %v2180 = vpop.xlane.xlu0 %2179
      %v2181 = vsel %vm623, %v2167, 0.0
      %2182 = vadd.xlane.f32.xlu0 %v2181
      %v2183 = vpop.xlane.xlu0 %2182
      %v2184 = vsel %vm623, %v2168, 0.0
      %2185 = vadd.xlane.f32.xlu0 %v2184
      %v2186 = vpop.xlane.xlu0 %2185
      %v2187 = vsel %vm623, %v2169, 0.0
      %2188 = vadd.xlane.f32.xlu0 %v2187
      %v2189 = vpop.xlane.xlu0 %2188
      %v2190 = vsel %vm623, %v2170, 0.0
      %2191 = vadd.xlane.f32.xlu0 %v2190
      %v2192 = vpop.xlane.xlu0 %2191
      %v2193 = vsel %vm623, %v2171, 0.0
      %2194 = vadd.xlane.f32.xlu0 %v2193
      %v2195 = vpop.xlane.xlu0 %2194
      %vm2196 = vcmp.eq.s32.totalorder %v1459, 5
      %v2197 = vsel %vm2196, 1, 0
      %vm2198 = vcmp.eq.s32.totalorder %v2197, 1
      %v2199 = vsel %vm2198, %v2174, %v2076
      %v2200 = vsel %vm2198, %v2177, %v2077
      %v2201 = vsel %vm2198, %v2180, %v2078
      %v2202 = vsel %vm2198, %v2183, %v2079
      %v2203 = vsel %vm2198, %v2186, %v2080
      %v2204 = vsel %vm2198, %v2189, %v2081
      %v2205 = vsel %vm2198, %v2192, %v2082
      %v2206 = vsel %vm2198, %v2195, %v2083
      %2207 = vset.pattern.permute.xlu0 6
      %2208 = vperm.xlu0 %2207, %v1353
      %v2209 = vpop.permute.xlu0 %2208
      %2211 = vset.pattern.permute.xlu0 6
      %2212 = vperm.xlu0 %2211, %v1359
      %v2213 = vpop.permute.xlu0 %2212
      %2215 = vset.pattern.permute.xlu0 6
      %2216 = vperm.xlu0 %2215, %v1365
      %v2217 = vpop.permute.xlu0 %2216
      %2219 = vset.pattern.permute.xlu0 6
      %2220 = vperm.xlu0 %2219, %v1371
      %v2221 = vpop.permute.xlu0 %2220
      %2223 = vset.pattern.permute.xlu0 6
      %2224 = vperm.xlu0 %2223, %v1377
      %v2225 = vpop.permute.xlu0 %2224
      %2227 = vset.pattern.permute.xlu0 6
      %2228 = vperm.xlu0 %2227, %v1383
      %v2229 = vpop.permute.xlu0 %2228
      %2231 = vset.pattern.permute.xlu0 6
      %2232 = vperm.xlu0 %2231, %v1389
      %v2233 = vpop.permute.xlu0 %2232
      %2235 = vset.pattern.permute.xlu0 6
      %2236 = vperm.xlu0 %2235, %v1395
      %v2237 = vpop.permute.xlu0 %2236
      %vm2239 = vcmp.lt.f32.partialorder %v613, %v2209
      %vm2240 = vcmp.lt.f32.partialorder %v613, %v2213
      %vm2241 = vcmp.lt.f32.partialorder %v613, %v2217
      %vm2242 = vcmp.lt.f32.partialorder %v613, %v2221
      %vm2243 = vcmp.lt.f32.partialorder %v613, %v2225
      %vm2244 = vcmp.lt.f32.partialorder %v613, %v2229
      %vm2245 = vcmp.lt.f32.partialorder %v613, %v2233
      %vm2246 = vcmp.lt.f32.partialorder %v613, %v2237
      %vm2247 = vcmp.eq.f32.partialorder %v613, %v2209
      %vm2248 = vcmp.eq.f32.partialorder %v613, %v2213
      %vm2249 = vcmp.eq.f32.partialorder %v613, %v2217
      %vm2250 = vcmp.eq.f32.partialorder %v613, %v2221
      %vm2251 = vcmp.eq.f32.partialorder %v613, %v2225
      %vm2252 = vcmp.eq.f32.partialorder %v613, %v2229
      %vm2253 = vcmp.eq.f32.partialorder %v613, %v2233
      %vm2254 = vcmp.eq.f32.partialorder %v613, %v2237
      %vm2255 = vmand %vm2247, %vm1406
      %vm2256 = vmand %vm2248, %vm1407
      %vm2257 = vmand %vm2249, %vm1408
      %vm2258 = vmand %vm2250, %vm1409
      %vm2259 = vmand %vm2251, %vm1410
      %vm2260 = vmand %vm2252, %vm1411
      %vm2261 = vmand %vm2253, %vm1412
      %vm2262 = vmand %vm2254, %vm1413
      %vm2263 = vmor %vm2239, %vm2255
      %vm2264 = vmor %vm2240, %vm2256
      %vm2265 = vmor %vm2241, %vm2257
      %vm2266 = vmor %vm2242, %vm2258
      %vm2267 = vmor %vm2243, %vm2259
      %vm2268 = vmor %vm2244, %vm2260
      %vm2269 = vmor %vm2245, %vm2261
      %vm2270 = vmor %vm2246, %vm2262
      %vm2271 = vmand %vm1398, %vm2263
      %vm2272 = vmand %vm1399, %vm2264
      %vm2273 = vmand %vm1400, %vm2265
      %vm2274 = vmand %vm1401, %vm2266
      %vm2275 = vmand %vm1402, %vm2267
      %vm2276 = vmand %vm1403, %vm2268
      %vm2277 = vmand %vm1404, %vm2269
      %vm2278 = vmand %vm1405, %vm2270
      %v2279 = vsel %vm2271, 1, 0
      %v2280 = vsel %vm2272, 1, 0
      %v2281 = vsel %vm2273, 1, 0
      %v2282 = vsel %vm2274, 1, 0
      %v2283 = vsel %vm2275, 1, 0
      %v2284 = vsel %vm2276, 1, 0
      %v2285 = vsel %vm2277, 1, 0
      %v2286 = vsel %vm2278, 1, 0
      %v2287 = vcvt.s32.f32 %v2279
      %v2288 = vcvt.s32.f32 %v2280
      %v2289 = vcvt.s32.f32 %v2281
      %v2290 = vcvt.s32.f32 %v2282
      %v2291 = vcvt.s32.f32 %v2283
      %v2292 = vcvt.s32.f32 %v2284
      %v2293 = vcvt.s32.f32 %v2285
      %v2294 = vcvt.s32.f32 %v2286
      %v2295 = vsel %vm623, %v2287, 0.0
      %2296 = vadd.xlane.f32.xlu0 %v2295
      %v2297 = vpop.xlane.xlu0 %2296
      %v2298 = vsel %vm623, %v2288, 0.0
      %2299 = vadd.xlane.f32.xlu0 %v2298
      %v2300 = vpop.xlane.xlu0 %2299
      %v2301 = vsel %vm623, %v2289, 0.0
      %2302 = vadd.xlane.f32.xlu0 %v2301
      %v2303 = vpop.xlane.xlu0 %2302
      %v2304 = vsel %vm623, %v2290, 0.0
      %2305 = vadd.xlane.f32.xlu0 %v2304
      %v2306 = vpop.xlane.xlu0 %2305
      %v2307 = vsel %vm623, %v2291, 0.0
      %2308 = vadd.xlane.f32.xlu0 %v2307
      %v2309 = vpop.xlane.xlu0 %2308
      %v2310 = vsel %vm623, %v2292, 0.0
      %2311 = vadd.xlane.f32.xlu0 %v2310
      %v2312 = vpop.xlane.xlu0 %2311
      %v2313 = vsel %vm623, %v2293, 0.0
      %2314 = vadd.xlane.f32.xlu0 %v2313
      %v2315 = vpop.xlane.xlu0 %2314
      %v2316 = vsel %vm623, %v2294, 0.0
      %2317 = vadd.xlane.f32.xlu0 %v2316
      %v2318 = vpop.xlane.xlu0 %2317
      %vm2319 = vcmp.eq.s32.totalorder %v1459, 6
      %v2320 = vsel %vm2319, 1, 0
      %vm2321 = vcmp.eq.s32.totalorder %v2320, 1
      %v2322 = vsel %vm2321, %v2297, %v2199
      %v2323 = vsel %vm2321, %v2300, %v2200
      %v2324 = vsel %vm2321, %v2303, %v2201
      %v2325 = vsel %vm2321, %v2306, %v2202
      %v2326 = vsel %vm2321, %v2309, %v2203
      %v2327 = vsel %vm2321, %v2312, %v2204
      %v2328 = vsel %vm2321, %v2315, %v2205
      %v2329 = vsel %vm2321, %v2318, %v2206
      %2330 = vset.pattern.permute.xlu0 7
      %2331 = vperm.xlu0 %2330, %v1353
      %v2332 = vpop.permute.xlu0 %2331
      %2334 = vset.pattern.permute.xlu0 7
      %2335 = vperm.xlu0 %2334, %v1359
      %v2336 = vpop.permute.xlu0 %2335
      %2338 = vset.pattern.permute.xlu0 7
      %2339 = vperm.xlu0 %2338, %v1365
      %v2340 = vpop.permute.xlu0 %2339
      %2342 = vset.pattern.permute.xlu0 7
      %2343 = vperm.xlu0 %2342, %v1371
      %v2344 = vpop.permute.xlu0 %2343
      %2346 = vset.pattern.permute.xlu0 7
      %2347 = vperm.xlu0 %2346, %v1377
      %v2348 = vpop.permute.xlu0 %2347
      %2350 = vset.pattern.permute.xlu0 7
      %2351 = vperm.xlu0 %2350, %v1383
      %v2352 = vpop.permute.xlu0 %2351
      %2354 = vset.pattern.permute.xlu0 7
      %2355 = vperm.xlu0 %2354, %v1389
      %v2356 = vpop.permute.xlu0 %2355
      %2358 = vset.pattern.permute.xlu0 7
      %2359 = vperm.xlu0 %2358, %v1395
      %v2360 = vpop.permute.xlu0 %2359
      %vm2362 = vcmp.lt.f32.partialorder %v621, %v2332
      %vm2363 = vcmp.lt.f32.partialorder %v621, %v2336
      %vm2364 = vcmp.lt.f32.partialorder %v621, %v2340
      %vm2365 = vcmp.lt.f32.partialorder %v621, %v2344
      %vm2366 = vcmp.lt.f32.partialorder %v621, %v2348
      %vm2367 = vcmp.lt.f32.partialorder %v621, %v2352
      %vm2368 = vcmp.lt.f32.partialorder %v621, %v2356
      %vm2369 = vcmp.lt.f32.partialorder %v621, %v2360
      %vm2370 = vcmp.eq.f32.partialorder %v621, %v2332
      %vm2371 = vcmp.eq.f32.partialorder %v621, %v2336
      %vm2372 = vcmp.eq.f32.partialorder %v621, %v2340
      %vm2373 = vcmp.eq.f32.partialorder %v621, %v2344
      %vm2374 = vcmp.eq.f32.partialorder %v621, %v2348
      %vm2375 = vcmp.eq.f32.partialorder %v621, %v2352
      %vm2376 = vcmp.eq.f32.partialorder %v621, %v2356
      %vm2377 = vcmp.eq.f32.partialorder %v621, %v2360
      %vm2378 = vmand %vm2370, %vm1406
      %vm2379 = vmand %vm2371, %vm1407
      %vm2380 = vmand %vm2372, %vm1408
      %vm2381 = vmand %vm2373, %vm1409
      %vm2382 = vmand %vm2374, %vm1410
      %vm2383 = vmand %vm2375, %vm1411
      %vm2384 = vmand %vm2376, %vm1412
      %vm2385 = vmand %vm2377, %vm1413
      %vm2386 = vmor %vm2362, %vm2378
      %vm2387 = vmor %vm2363, %vm2379
      %vm2388 = vmor %vm2364, %vm2380
      %vm2389 = vmor %vm2365, %vm2381
      %vm2390 = vmor %vm2366, %vm2382
      %vm2391 = vmor %vm2367, %vm2383
      %vm2392 = vmor %vm2368, %vm2384
      %vm2393 = vmor %vm2369, %vm2385
      %vm2394 = vmand %vm1398, %vm2386
      %vm2395 = vmand %vm1399, %vm2387
      %vm2396 = vmand %vm1400, %vm2388
      %vm2397 = vmand %vm1401, %vm2389
      %vm2398 = vmand %vm1402, %vm2390
      %vm2399 = vmand %vm1403, %vm2391
      %vm2400 = vmand %vm1404, %vm2392
      %vm2401 = vmand %vm1405, %vm2393
      %v2402 = vsel %vm2394, 1, 0
      %v2403 = vsel %vm2395, 1, 0
      %v2404 = vsel %vm2396, 1, 0
      %v2405 = vsel %vm2397, 1, 0
      %v2406 = vsel %vm2398, 1, 0
      %v2407 = vsel %vm2399, 1, 0
      %v2408 = vsel %vm2400, 1, 0
      %v2409 = vsel %vm2401, 1, 0
      %v2410 = vcvt.s32.f32 %v2402
      %v2411 = vcvt.s32.f32 %v2403
      %v2412 = vcvt.s32.f32 %v2404
      %v2413 = vcvt.s32.f32 %v2405
      %v2414 = vcvt.s32.f32 %v2406
      %v2415 = vcvt.s32.f32 %v2407
      %v2416 = vcvt.s32.f32 %v2408
      %v2417 = vcvt.s32.f32 %v2409
      %v2418 = vsel %vm623, %v2410, 0.0
      %2419 = vadd.xlane.f32.xlu0 %v2418
      %v2420 = vpop.xlane.xlu0 %2419
      %v2421 = vsel %vm623, %v2411, 0.0
      %2422 = vadd.xlane.f32.xlu0 %v2421
      %v2423 = vpop.xlane.xlu0 %2422
      %v2424 = vsel %vm623, %v2412, 0.0
      %2425 = vadd.xlane.f32.xlu0 %v2424
      %v2426 = vpop.xlane.xlu0 %2425
      %v2427 = vsel %vm623, %v2413, 0.0
      %2428 = vadd.xlane.f32.xlu0 %v2427
      %v2429 = vpop.xlane.xlu0 %2428
      %v2430 = vsel %vm623, %v2414, 0.0
      %2431 = vadd.xlane.f32.xlu0 %v2430
      %v2432 = vpop.xlane.xlu0 %2431
      %v2433 = vsel %vm623, %v2415, 0.0
      %2434 = vadd.xlane.f32.xlu0 %v2433
      %v2435 = vpop.xlane.xlu0 %2434
      %v2436 = vsel %vm623, %v2416, 0.0
      %2437 = vadd.xlane.f32.xlu0 %v2436
      %v2438 = vpop.xlane.xlu0 %2437
      %v2439 = vsel %vm623, %v2417, 0.0
      %2440 = vadd.xlane.f32.xlu0 %v2439
      %v2441 = vpop.xlane.xlu0 %2440
      %vm2442 = vcmp.eq.s32.totalorder %v1459, 7
      %v2443 = vsel %vm2442, 1, 0
      %vm2444 = vcmp.eq.s32.totalorder %v2443, 1
      %v2445 = vsel %vm2444, %v2420, %v2322
      %v2446 = vsel %vm2444, %v2423, %v2323
      %v2447 = vsel %vm2444, %v2426, %v2324
      %v2448 = vsel %vm2444, %v2429, %v2325
      %v2449 = vsel %vm2444, %v2432, %v2326
      %v2450 = vsel %vm2444, %v2435, %v2327
      %v2451 = vsel %vm2444, %v2438, %v2328
      %v2452 = vsel %vm2444, %v2441, %v2329
      %vm2453 = vcmp.eq.f32.partialorder %v2445, %v1460
      %vm2454 = vcmp.eq.f32.partialorder %v2446, %v1460
      %vm2455 = vcmp.eq.f32.partialorder %v2447, %v1460
      %vm2456 = vcmp.eq.f32.partialorder %v2448, %v1460
      %vm2457 = vcmp.eq.f32.partialorder %v2449, %v1460
      %vm2458 = vcmp.eq.f32.partialorder %v2450, %v1460
      %vm2459 = vcmp.eq.f32.partialorder %v2451, %v1460
      %vm2460 = vcmp.eq.f32.partialorder %v2452, %v1460
      %v2461 = vsel %vm2453, 1, 0
      %v2462 = vsel %vm2454, 1, 0
      %v2463 = vsel %vm2455, 1, 0
      %v2464 = vsel %vm2456, 1, 0
      %v2465 = vsel %vm2457, 1, 0
      %v2466 = vsel %vm2458, 1, 0
      %v2467 = vsel %vm2459, 1, 0
      %v2468 = vsel %vm2460, 1, 0
      %v2469 = vcvt.s32.f32 %v2461
      %v2470 = vcvt.s32.f32 %v2462
      %v2471 = vcvt.s32.f32 %v2463
      %v2472 = vcvt.s32.f32 %v2464
      %v2473 = vcvt.s32.f32 %v2465
      %v2474 = vcvt.s32.f32 %v2466
      %v2475 = vcvt.s32.f32 %v2467
      %v2476 = vcvt.s32.f32 %v2468
      %v2477 = vsel %vm623, %v123, 0
      %2479 = vmatprep.subr.mxu0 0.0
      %v2480 = vand.u32 %v2469, 4294901760
      %2481 = vmatpush1.msra.mxu0 %v2480
      %2482 = vmatprep.subr.mxu0 0.0
      %v2483 = vand.u32 %v2470, 4294901760
      %2484 = vmatpush1.msra.mxu0 %v2483
      %2485 = vmatprep.subr.mxu0 0.0
      %v2486 = vand.u32 %v2471, 4294901760
      %2487 = vmatpush1.msra.mxu0 %v2486
      %2488 = vmatprep.subr.mxu0 0.0
      %v2489 = vand.u32 %v2472, 4294901760
      %2490 = vmatpush1.msra.mxu0 %v2489
      %2491 = vmatprep.subr.mxu0 0.0
      %v2492 = vand.u32 %v2473, 4294901760
      %2493 = vmatpush1.msra.mxu0 %v2492
      %2494 = vmatprep.subr.mxu0 0.0
      %v2495 = vand.u32 %v2474, 4294901760
      %2496 = vmatpush1.msra.mxu0 %v2495
      %2497 = vmatprep.subr.mxu0 0.0
      %v2498 = vand.u32 %v2475, 4294901760
      %2499 = vmatpush1.msra.mxu0 %v2498
      %2500 = vmatprep.subr.mxu0 0.0
      %v2501 = vand.u32 %v2476, 4294901760
      %2502 = vmatpush1.msra.mxu0 %v2501
      %2503 = vmatprep.subr.mxu0 0.0
      %2504 = vmatpush1.msra.mxu0 0.0
      %2505 = vmatprep.subr.mxu0 0.0
      %2506 = vmatpush1.msra.mxu0 0.0
      %2507 = vmatprep.subr.mxu0 0.0
      %2508 = vmatpush1.msra.mxu0 0.0
      %2509 = vmatprep.subr.mxu0 0.0
      %2510 = vmatpush1.msra.mxu0 0.0
      %2511 = vmatprep.subr.mxu0 0.0
      %2512 = vmatpush1.msra.mxu0 0.0
      %2513 = vmatprep.subr.mxu0 0.0
      %2514 = vmatpush1.msra.mxu0 0.0
      %2515 = vmatprep.subr.mxu0 0.0
      %2516 = vmatpush1.msra.mxu0 0.0
      %2517 = vmatprep.subr.mxu0 0.0
      %2518 = vmatpush1.msra.mxu0 0.0
      %2519 = vmatprep.subr.mxu0 0.0
      %2520 = vmatpush1.msra.mxu0 0.0
      %2521 = vmatprep.subr.mxu0 0.0
      %2522 = vmatpush1.msra.mxu0 0.0
      %2523 = vmatprep.subr.mxu0 0.0
      %2524 = vmatpush1.msra.mxu0 0.0
      %2525 = vmatprep.subr.mxu0 0.0
      %2526 = vmatpush1.msra.mxu0 0.0
      %2527 = vmatprep.subr.mxu0 0.0
      %2528 = vmatpush1.msra.mxu0 0.0
      %2529 = vmatprep.subr.mxu0 0.0
      %2530 = vmatpush1.msra.mxu0 0.0
      %2531 = vmatprep.subr.mxu0 0.0
      %2532 = vmatpush1.msra.mxu0 0.0
      %2533 = vmatprep.subr.mxu0 0.0
      %2534 = vmatpush1.msra.mxu0 0.0
      %2535 = vmatprep.subr.mxu0 0.0
      %2536 = vmatpush1.msra.mxu0 0.0
      %2537 = vmatprep.subr.mxu0 0.0
      %2538 = vmatpush1.msra.mxu0 0.0
      %2539 = vmatprep.subr.mxu0 0.0
      %2540 = vmatpush1.msra.mxu0 0.0
      %2541 = vmatprep.subr.mxu0 0.0
      %2542 = vmatpush1.msra.mxu0 0.0
      %2543 = vmatprep.subr.mxu0 0.0
      %2544 = vmatpush1.msra.mxu0 0.0
      %2545 = vmatprep.subr.mxu0 0.0
      %2546 = vmatpush1.msra.mxu0 0.0
      %2547 = vmatprep.subr.mxu0 0.0
      %2548 = vmatpush1.msra.mxu0 0.0
      %2549 = vmatprep.subr.mxu0 0.0
      %2550 = vmatpush1.msra.mxu0 0.0
      %2551 = vmatprep.mubr.f32.mxu0 0.0
      %v2552 = vand.u32 %v2477, 4294901760
      %v2553 = vsub.f32 %v2477, %v2552
      %v2554 = vand.u32 %v2553, 4294901760
      %v2555 = vsub.f32 %v2553, %v2554
      %v2556 = vand.u32 %v2555, 4294901760
      %2557 = vmatmul.mubr.f32.gmra.mrb[0].mxu0 %v2556
      %v2558 = vpop.f32.mrb[0].mxu0
      %v2559 = vadd.f32 0.0, %v2558
      %v2560 = vpop.f32.mrb[0].mxu0
      %2561 = vdwg.mxu0
      %2562 = vmatprep.subr.mxu0 0.0
      %v2563 = vand.u32 %v2469, 4294901760
      %v2564 = vsub.f32 %v2469, %v2563
      %v2565 = vand.u32 %v2564, 4294901760
      %v2566 = vsub.f32 %v2564, %v2565
      %v2567 = vand.u32 %v2566, 4294901760
      %2568 = vmatpush1.msra.mxu0 %v2567
      %2569 = vmatprep.subr.mxu0 0.0
      %v2570 = vand.u32 %v2470, 4294901760
      %v2571 = vsub.f32 %v2470, %v2570
      %v2572 = vand.u32 %v2571, 4294901760
      %v2573 = vsub.f32 %v2571, %v2572
      %v2574 = vand.u32 %v2573, 4294901760
      %2575 = vmatpush1.msra.mxu0 %v2574
      %2576 = vmatprep.subr.mxu0 0.0
      %v2577 = vand.u32 %v2471, 4294901760
      %v2578 = vsub.f32 %v2471, %v2577
      %v2579 = vand.u32 %v2578, 4294901760
      %v2580 = vsub.f32 %v2578, %v2579
      %v2581 = vand.u32 %v2580, 4294901760
      %2582 = vmatpush1.msra.mxu0 %v2581
      %2583 = vmatprep.subr.mxu0 0.0
      %v2584 = vand.u32 %v2472, 4294901760
      %v2585 = vsub.f32 %v2472, %v2584
      %v2586 = vand.u32 %v2585, 4294901760
      %v2587 = vsub.f32 %v2585, %v2586
      %v2588 = vand.u32 %v2587, 4294901760
      %2589 = vmatpush1.msra.mxu0 %v2588
      %2590 = vmatprep.subr.mxu0 0.0
      %v2591 = vand.u32 %v2473, 4294901760
      %v2592 = vsub.f32 %v2473, %v2591
      %v2593 = vand.u32 %v2592, 4294901760
      %v2594 = vsub.f32 %v2592, %v2593
      %v2595 = vand.u32 %v2594, 4294901760
      %2596 = vmatpush1.msra.mxu0 %v2595
      %2597 = vmatprep.subr.mxu0 0.0
      %v2598 = vand.u32 %v2474, 4294901760
      %v2599 = vsub.f32 %v2474, %v2598
      %v2600 = vand.u32 %v2599, 4294901760
      %v2601 = vsub.f32 %v2599, %v2600
      %v2602 = vand.u32 %v2601, 4294901760
      %2603 = vmatpush1.msra.mxu0 %v2602
      %2604 = vmatprep.subr.mxu0 0.0
      %v2605 = vand.u32 %v2475, 4294901760
      %v2606 = vsub.f32 %v2475, %v2605
      %v2607 = vand.u32 %v2606, 4294901760
      %v2608 = vsub.f32 %v2606, %v2607
      %v2609 = vand.u32 %v2608, 4294901760
      %2610 = vmatpush1.msra.mxu0 %v2609
      %2611 = vmatprep.subr.mxu0 0.0
      %v2612 = vand.u32 %v2476, 4294901760
      %v2613 = vsub.f32 %v2476, %v2612
      %v2614 = vand.u32 %v2613, 4294901760
      %v2615 = vsub.f32 %v2613, %v2614
      %v2616 = vand.u32 %v2615, 4294901760
      %2617 = vmatpush1.msra.mxu0 %v2616
      %2618 = vmatprep.subr.mxu0 0.0
      %2619 = vmatpush1.msra.mxu0 0.0
      %2620 = vmatprep.subr.mxu0 0.0
      %2621 = vmatpush1.msra.mxu0 0.0
      %2622 = vmatprep.subr.mxu0 0.0
      %2623 = vmatpush1.msra.mxu0 0.0
      %2624 = vmatprep.subr.mxu0 0.0
      %2625 = vmatpush1.msra.mxu0 0.0
      %2626 = vmatprep.subr.mxu0 0.0
      %2627 = vmatpush1.msra.mxu0 0.0
      %2628 = vmatprep.subr.mxu0 0.0
      %2629 = vmatpush1.msra.mxu0 0.0
      %2630 = vmatprep.subr.mxu0 0.0
      %2631 = vmatpush1.msra.mxu0 0.0
      %2632 = vmatprep.subr.mxu0 0.0
      %2633 = vmatpush1.msra.mxu0 0.0
      %2634 = vmatprep.subr.mxu0 0.0
      %2635 = vmatpush1.msra.mxu0 0.0
      %2636 = vmatprep.subr.mxu0 0.0
      %2637 = vmatpush1.msra.mxu0 0.0
      %2638 = vmatprep.subr.mxu0 0.0
      %2639 = vmatpush1.msra.mxu0 0.0
      %2640 = vmatprep.subr.mxu0 0.0
      %2641 = vmatpush1.msra.mxu0 0.0
      %2642 = vmatprep.subr.mxu0 0.0
      %2643 = vmatpush1.msra.mxu0 0.0
      %2644 = vmatprep.subr.mxu0 0.0
      %2645 = vmatpush1.msra.mxu0 0.0
      %2646 = vmatprep.subr.mxu0 0.0
      %2647 = vmatpush1.msra.mxu0 0.0
      %2648 = vmatprep.subr.mxu0 0.0
      %2649 = vmatpush1.msra.mxu0 0.0
      %2650 = vmatprep.subr.mxu0 0.0
      %2651 = vmatpush1.msra.mxu0 0.0
      %2652 = vmatprep.subr.mxu0 0.0
      %2653 = vmatpush1.msra.mxu0 0.0
      %2654 = vmatprep.subr.mxu0 0.0
      %2655 = vmatpush1.msra.mxu0 0.0
      %2656 = vmatprep.subr.mxu0 0.0
      %2657 = vmatpush1.msra.mxu0 0.0
      %2658 = vmatprep.subr.mxu0 0.0
      %2659 = vmatpush1.msra.mxu0 0.0
      %2660 = vmatprep.subr.mxu0 0.0
      %2661 = vmatpush1.msra.mxu0 0.0
      %2662 = vmatprep.subr.mxu0 0.0
      %2663 = vmatpush1.msra.mxu0 0.0
      %2664 = vmatprep.subr.mxu0 0.0
      %2665 = vmatpush1.msra.mxu0 0.0
      %2666 = vmatprep.mubr.f32.mxu0 0.0
      %v2667 = vand.u32 %v2477, 4294901760
      %2668 = vmatmul.mubr.f32.gmra.mrb[0].mxu0 %v2667
      %v2669 = vpop.f32.mrb[0].mxu0
      %v2670 = vadd.f32 %v2559, %v2669
      %v2671 = vpop.f32.mrb[0].mxu0
      %2672 = vdwg.mxu0
      %2673 = vmatprep.subr.mxu0 0.0
      %v2674 = vand.u32 %v2469, 4294901760
      %v2675 = vsub.f32 %v2469, %v2674
      %2676 = vmatpush1.msra.mxu0 %v2675
      %2677 = vmatprep.subr.mxu0 0.0
      %v2678 = vand.u32 %v2470, 4294901760
      %v2679 = vsub.f32 %v2470, %v2678
      %2680 = vmatpush1.msra.mxu0 %v2679
      %2681 = vmatprep.subr.mxu0 0.0
      %v2682 = vand.u32 %v2471, 4294901760
      %v2683 = vsub.f32 %v2471, %v2682
      %2684 = vmatpush1.msra.mxu0 %v2683
      %2685 = vmatprep.subr.mxu0 0.0
      %v2686 = vand.u32 %v2472, 4294901760
      %v2687 = vsub.f32 %v2472, %v2686
      %2688 = vmatpush1.msra.mxu0 %v2687
      %2689 = vmatprep.subr.mxu0 0.0
      %v2690 = vand.u32 %v2473, 4294901760
      %v2691 = vsub.f32 %v2473, %v2690
      %2692 = vmatpush1.msra.mxu0 %v2691
      %2693 = vmatprep.subr.mxu0 0.0
      %v2694 = vand.u32 %v2474, 4294901760
      %v2695 = vsub.f32 %v2474, %v2694
      %2696 = vmatpush1.msra.mxu0 %v2695
      %2697 = vmatprep.subr.mxu0 0.0
      %v2698 = vand.u32 %v2475, 4294901760
      %v2699 = vsub.f32 %v2475, %v2698
      %2700 = vmatpush1.msra.mxu0 %v2699
      %2701 = vmatprep.subr.mxu0 0.0
      %v2702 = vand.u32 %v2476, 4294901760
      %v2703 = vsub.f32 %v2476, %v2702
      %2704 = vmatpush1.msra.mxu0 %v2703
      %2705 = vmatprep.subr.mxu0 0.0
      %2706 = vmatpush1.msra.mxu0 0.0
      %2707 = vmatprep.subr.mxu0 0.0
      %2708 = vmatpush1.msra.mxu0 0.0
      %2709 = vmatprep.subr.mxu0 0.0
      %2710 = vmatpush1.msra.mxu0 0.0
      %2711 = vmatprep.subr.mxu0 0.0
      %2712 = vmatpush1.msra.mxu0 0.0
      %2713 = vmatprep.subr.mxu0 0.0
      %2714 = vmatpush1.msra.mxu0 0.0
      %2715 = vmatprep.subr.mxu0 0.0
      %2716 = vmatpush1.msra.mxu0 0.0
      %2717 = vmatprep.subr.mxu0 0.0
      %2718 = vmatpush1.msra.mxu0 0.0
      %2719 = vmatprep.subr.mxu0 0.0
      %2720 = vmatpush1.msra.mxu0 0.0
      %2721 = vmatprep.subr.mxu0 0.0
      %2722 = vmatpush1.msra.mxu0 0.0
      %2723 = vmatprep.subr.mxu0 0.0
      %2724 = vmatpush1.msra.mxu0 0.0
      %2725 = vmatprep.subr.mxu0 0.0
      %2726 = vmatpush1.msra.mxu0 0.0
      %2727 = vmatprep.subr.mxu0 0.0
      %2728 = vmatpush1.msra.mxu0 0.0
      %2729 = vmatprep.subr.mxu0 0.0
      %2730 = vmatpush1.msra.mxu0 0.0
      %2731 = vmatprep.subr.mxu0 0.0
      %2732 = vmatpush1.msra.mxu0 0.0
      %2733 = vmatprep.subr.mxu0 0.0
      %2734 = vmatpush1.msra.mxu0 0.0
      %2735 = vmatprep.subr.mxu0 0.0
      %2736 = vmatpush1.msra.mxu0 0.0
      %2737 = vmatprep.subr.mxu0 0.0
      %2738 = vmatpush1.msra.mxu0 0.0
      %2739 = vmatprep.subr.mxu0 0.0
      %2740 = vmatpush1.msra.mxu0 0.0
      %2741 = vmatprep.subr.mxu0 0.0
      %2742 = vmatpush1.msra.mxu0 0.0
      %2743 = vmatprep.subr.mxu0 0.0
      %2744 = vmatpush1.msra.mxu0 0.0
      %2745 = vmatprep.subr.mxu0 0.0
      %2746 = vmatpush1.msra.mxu0 0.0
      %2747 = vmatprep.subr.mxu0 0.0
      %2748 = vmatpush1.msra.mxu0 0.0
      %2749 = vmatprep.subr.mxu0 0.0
      %2750 = vmatpush1.msra.mxu0 0.0
      %2751 = vmatprep.subr.mxu0 0.0
      %2752 = vmatpush1.msra.mxu0 0.0
      %2753 = vmatprep.mubr.f32.mxu0 0.0
      %v2754 = vand.u32 %v2477, 4294901760
      %v2755 = vsub.f32 %v2477, %v2754
      %2756 = vmatmul.mubr.f32.gmra.mrb[0].mxu0 %v2755
      %v2757 = vpop.f32.mrb[0].mxu0
      %v2758 = vadd.f32 %v2670, %v2757
      %v2759 = vpop.f32.mrb[0].mxu0
      %2760 = vdwg.mxu0
      %2761 = vmatprep.subr.mxu0 0.0
      %v2762 = vand.u32 %v2469, 4294901760
      %2763 = vmatpush1.msra.mxu0 %v2762
      %2764 = vmatprep.subr.mxu0 0.0
      %v2765 = vand.u32 %v2470, 4294901760
      %2766 = vmatpush1.msra.mxu0 %v2765
      %2767 = vmatprep.subr.mxu0 0.0
      %v2768 = vand.u32 %v2471, 4294901760
      %2769 = vmatpush1.msra.mxu0 %v2768
      %2770 = vmatprep.subr.mxu0 0.0
      %v2771 = vand.u32 %v2472, 4294901760
      %2772 = vmatpush1.msra.mxu0 %v2771
      %2773 = vmatprep.subr.mxu0 0.0
      %v2774 = vand.u32 %v2473, 4294901760
      %2775 = vmatpush1.msra.mxu0 %v2774
      %2776 = vmatprep.subr.mxu0 0.0
      %v2777 = vand.u32 %v2474, 4294901760
      %2778 = vmatpush1.msra.mxu0 %v2777
      %2779 = vmatprep.subr.mxu0 0.0
      %v2780 = vand.u32 %v2475, 4294901760
      %2781 = vmatpush1.msra.mxu0 %v2780
      %2782 = vmatprep.subr.mxu0 0.0
      %v2783 = vand.u32 %v2476, 4294901760
      %2784 = vmatpush1.msra.mxu0 %v2783
      %2785 = vmatprep.subr.mxu0 0.0
      %2786 = vmatpush1.msra.mxu0 0.0
      %2787 = vmatprep.subr.mxu0 0.0
      %2788 = vmatpush1.msra.mxu0 0.0
      %2789 = vmatprep.subr.mxu0 0.0
      %2790 = vmatpush1.msra.mxu0 0.0
      %2791 = vmatprep.subr.mxu0 0.0
      %2792 = vmatpush1.msra.mxu0 0.0
      %2793 = vmatprep.subr.mxu0 0.0
      %2794 = vmatpush1.msra.mxu0 0.0
      %2795 = vmatprep.subr.mxu0 0.0
      %2796 = vmatpush1.msra.mxu0 0.0
      %2797 = vmatprep.subr.mxu0 0.0
      %2798 = vmatpush1.msra.mxu0 0.0
      %2799 = vmatprep.subr.mxu0 0.0
      %2800 = vmatpush1.msra.mxu0 0.0
      %2801 = vmatprep.subr.mxu0 0.0
      %2802 = vmatpush1.msra.mxu0 0.0
      %2803 = vmatprep.subr.mxu0 0.0
      %2804 = vmatpush1.msra.mxu0 0.0
      %2805 = vmatprep.subr.mxu0 0.0
      %2806 = vmatpush1.msra.mxu0 0.0
      %2807 = vmatprep.subr.mxu0 0.0
      %2808 = vmatpush1.msra.mxu0 0.0
      %2809 = vmatprep.subr.mxu0 0.0
      %2810 = vmatpush1.msra.mxu0 0.0
      %2811 = vmatprep.subr.mxu0 0.0
      %2812 = vmatpush1.msra.mxu0 0.0
      %2813 = vmatprep.subr.mxu0 0.0
      %2814 = vmatpush1.msra.mxu0 0.0
      %2815 = vmatprep.subr.mxu0 0.0
      %2816 = vmatpush1.msra.mxu0 0.0
      %2817 = vmatprep.subr.mxu0 0.0
      %2818 = vmatpush1.msra.mxu0 0.0
      %2819 = vmatprep.subr.mxu0 0.0
      %2820 = vmatpush1.msra.mxu0 0.0
      %2821 = vmatprep.subr.mxu0 0.0
      %2822 = vmatpush1.msra.mxu0 0.0
      %2823 = vmatprep.subr.mxu0 0.0
      %2824 = vmatpush1.msra.mxu0 0.0
      %2825 = vmatprep.subr.mxu0 0.0
      %2826 = vmatpush1.msra.mxu0 0.0
      %2827 = vmatprep.subr.mxu0 0.0
      %2828 = vmatpush1.msra.mxu0 0.0
      %2829 = vmatprep.subr.mxu0 0.0
      %2830 = vmatpush1.msra.mxu0 0.0
      %2831 = vmatprep.subr.mxu0 0.0
      %2832 = vmatpush1.msra.mxu0 0.0
      %2833 = vmatprep.mubr.f32.mxu0 0.0
      %v2834 = vand.u32 %v2477, 4294901760
      %v2835 = vsub.f32 %v2477, %v2834
      %v2836 = vand.u32 %v2835, 4294901760
      %2837 = vmatmul.mubr.f32.gmra.mrb[0].mxu0 %v2836
      %v2838 = vpop.f32.mrb[0].mxu0
      %v2839 = vadd.f32 %v2758, %v2838
      %v2840 = vpop.f32.mrb[0].mxu0
      %2841 = vdwg.mxu0
      %2842 = vmatprep.subr.mxu0 0.0
      %v2843 = vand.u32 %v2469, 4294901760
      %v2844 = vsub.f32 %v2469, %v2843
      %v2845 = vand.u32 %v2844, 4294901760
      %2846 = vmatpush1.msra.mxu0 %v2845
      %2847 = vmatprep.subr.mxu0 0.0
      %v2848 = vand.u32 %v2470, 4294901760
      %v2849 = vsub.f32 %v2470, %v2848
      %v2850 = vand.u32 %v2849, 4294901760
      %2851 = vmatpush1.msra.mxu0 %v2850
      %2852 = vmatprep.subr.mxu0 0.0
      %v2853 = vand.u32 %v2471, 4294901760
      %v2854 = vsub.f32 %v2471, %v2853
      %v2855 = vand.u32 %v2854, 4294901760
      %2856 = vmatpush1.msra.mxu0 %v2855
      %2857 = vmatprep.subr.mxu0 0.0
      %v2858 = vand.u32 %v2472, 4294901760
      %v2859 = vsub.f32 %v2472, %v2858
      %v2860 = vand.u32 %v2859, 4294901760
      %2861 = vmatpush1.msra.mxu0 %v2860
      %2862 = vmatprep.subr.mxu0 0.0
      %v2863 = vand.u32 %v2473, 4294901760
      %v2864 = vsub.f32 %v2473, %v2863
      %v2865 = vand.u32 %v2864, 4294901760
      %2866 = vmatpush1.msra.mxu0 %v2865
      %2867 = vmatprep.subr.mxu0 0.0
      %v2868 = vand.u32 %v2474, 4294901760
      %v2869 = vsub.f32 %v2474, %v2868
      %v2870 = vand.u32 %v2869, 4294901760
      %2871 = vmatpush1.msra.mxu0 %v2870
      %2872 = vmatprep.subr.mxu0 0.0
      %v2873 = vand.u32 %v2475, 4294901760
      %v2874 = vsub.f32 %v2475, %v2873
      %v2875 = vand.u32 %v2874, 4294901760
      %2876 = vmatpush1.msra.mxu0 %v2875
      %2877 = vmatprep.subr.mxu0 0.0
      %v2878 = vand.u32 %v2476, 4294901760
      %v2879 = vsub.f32 %v2476, %v2878
      %v2880 = vand.u32 %v2879, 4294901760
      %2881 = vmatpush1.msra.mxu0 %v2880
      %2882 = vmatprep.subr.mxu0 0.0
      %2883 = vmatpush1.msra.mxu0 0.0
      %2884 = vmatprep.subr.mxu0 0.0
      %2885 = vmatpush1.msra.mxu0 0.0
      %2886 = vmatprep.subr.mxu0 0.0
      %2887 = vmatpush1.msra.mxu0 0.0
      %2888 = vmatprep.subr.mxu0 0.0
      %2889 = vmatpush1.msra.mxu0 0.0
      %2890 = vmatprep.subr.mxu0 0.0
      %2891 = vmatpush1.msra.mxu0 0.0
      %2892 = vmatprep.subr.mxu0 0.0
      %2893 = vmatpush1.msra.mxu0 0.0
      %2894 = vmatprep.subr.mxu0 0.0
      %2895 = vmatpush1.msra.mxu0 0.0
      %2896 = vmatprep.subr.mxu0 0.0
      %2897 = vmatpush1.msra.mxu0 0.0
      %2898 = vmatprep.subr.mxu0 0.0
      %2899 = vmatpush1.msra.mxu0 0.0
      %2900 = vmatprep.subr.mxu0 0.0
      %2901 = vmatpush1.msra.mxu0 0.0
      %2902 = vmatprep.subr.mxu0 0.0
      %2903 = vmatpush1.msra.mxu0 0.0
      %2904 = vmatprep.subr.mxu0 0.0
      %2905 = vmatpush1.msra.mxu0 0.0
      %2906 = vmatprep.subr.mxu0 0.0
      %2907 = vmatpush1.msra.mxu0 0.0
      %2908 = vmatprep.subr.mxu0 0.0
      %2909 = vmatpush1.msra.mxu0 0.0
      %2910 = vmatprep.subr.mxu0 0.0
      %2911 = vmatpush1.msra.mxu0 0.0
      %2912 = vmatprep.subr.mxu0 0.0
      %2913 = vmatpush1.msra.mxu0 0.0
      %2914 = vmatprep.subr.mxu0 0.0
      %2915 = vmatpush1.msra.mxu0 0.0
      %2916 = vmatprep.subr.mxu0 0.0
      %2917 = vmatpush1.msra.mxu0 0.0
      %2918 = vmatprep.subr.mxu0 0.0
      %2919 = vmatpush1.msra.mxu0 0.0
      %2920 = vmatprep.subr.mxu0 0.0
      %2921 = vmatpush1.msra.mxu0 0.0
      %2922 = vmatprep.subr.mxu0 0.0
      %2923 = vmatpush1.msra.mxu0 0.0
      %2924 = vmatprep.subr.mxu0 0.0
      %2925 = vmatpush1.msra.mxu0 0.0
      %2926 = vmatprep.subr.mxu0 0.0
      %2927 = vmatpush1.msra.mxu0 0.0
      %2928 = vmatprep.subr.mxu0 0.0
      %2929 = vmatpush1.msra.mxu0 0.0
      %2930 = vmatprep.mubr.f32.mxu0 0.0
      %v2931 = vand.u32 %v2477, 4294901760
      %2932 = vmatmul.mubr.f32.gmra.mrb[0].mxu0 %v2931
      %v2933 = vpop.f32.mrb[0].mxu0
      %v2934 = vadd.f32 %v2839, %v2933
      %v2935 = vpop.f32.mrb[0].mxu0
      %2936 = vdwg.mxu0
      %2937 = vmatprep.subr.mxu0 0.0
      %v2938 = vand.u32 %v2469, 4294901760
      %2939 = vmatpush1.msra.mxu0 %v2938
      %2940 = vmatprep.subr.mxu0 0.0
      %v2941 = vand.u32 %v2470, 4294901760
      %2942 = vmatpush1.msra.mxu0 %v2941
      %2943 = vmatprep.subr.mxu0 0.0
      %v2944 = vand.u32 %v2471, 4294901760
      %2945 = vmatpush1.msra.mxu0 %v2944
      %2946 = vmatprep.subr.mxu0 0.0
      %v2947 = vand.u32 %v2472, 4294901760
      %2948 = vmatpush1.msra.mxu0 %v2947
      %2949 = vmatprep.subr.mxu0 0.0
      %v2950 = vand.u32 %v2473, 4294901760
      %2951 = vmatpush1.msra.mxu0 %v2950
      %2952 = vmatprep.subr.mxu0 0.0
      %v2953 = vand.u32 %v2474, 4294901760
      %2954 = vmatpush1.msra.mxu0 %v2953
      %2955 = vmatprep.subr.mxu0 0.0
      %v2956 = vand.u32 %v2475, 4294901760
      %2957 = vmatpush1.msra.mxu0 %v2956
      %2958 = vmatprep.subr.mxu0 0.0
      %v2959 = vand.u32 %v2476, 4294901760
      %2960 = vmatpush1.msra.mxu0 %v2959
      %2961 = vmatprep.subr.mxu0 0.0
      %2962 = vmatpush1.msra.mxu0 0.0
      %2963 = vmatprep.subr.mxu0 0.0
      %2964 = vmatpush1.msra.mxu0 0.0
      %2965 = vmatprep.subr.mxu0 0.0
      %2966 = vmatpush1.msra.mxu0 0.0
      %2967 = vmatprep.subr.mxu0 0.0
      %2968 = vmatpush1.msra.mxu0 0.0
      %2969 = vmatprep.subr.mxu0 0.0
      %2970 = vmatpush1.msra.mxu0 0.0
      %2971 = vmatprep.subr.mxu0 0.0
      %2972 = vmatpush1.msra.mxu0 0.0
      %2973 = vmatprep.subr.mxu0 0.0
      %2974 = vmatpush1.msra.mxu0 0.0
      %2975 = vmatprep.subr.mxu0 0.0
      %2976 = vmatpush1.msra.mxu0 0.0
      %2977 = vmatprep.subr.mxu0 0.0
      %2978 = vmatpush1.msra.mxu0 0.0
      %2979 = vmatprep.subr.mxu0 0.0
      %2980 = vmatpush1.msra.mxu0 0.0
      %2981 = vmatprep.subr.mxu0 0.0
      %2982 = vmatpush1.msra.mxu0 0.0
      %2983 = vmatprep.subr.mxu0 0.0
      %2984 = vmatpush1.msra.mxu0 0.0
      %2985 = vmatprep.subr.mxu0 0.0
      %2986 = vmatpush1.msra.mxu0 0.0
      %2987 = vmatprep.subr.mxu0 0.0
      %2988 = vmatpush1.msra.mxu0 0.0
      %2989 = vmatprep.subr.mxu0 0.0
      %2990 = vmatpush1.msra.mxu0 0.0
      %2991 = vmatprep.subr.mxu0 0.0
      %2992 = vmatpush1.msra.mxu0 0.0
      %2993 = vmatprep.subr.mxu0 0.0
      %2994 = vmatpush1.msra.mxu0 0.0
      %2995 = vmatprep.subr.mxu0 0.0
      %2996 = vmatpush1.msra.mxu0 0.0
      %2997 = vmatprep.subr.mxu0 0.0
      %2998 = vmatpush1.msra.mxu0 0.0
      %2999 = vmatprep.subr.mxu0 0.0
      %3000 = vmatpush1.msra.mxu0 0.0
      %3001 = vmatprep.subr.mxu0 0.0
      %3002 = vmatpush1.msra.mxu0 0.0
      %3003 = vmatprep.subr.mxu0 0.0
      %3004 = vmatpush1.msra.mxu0 0.0
      %3005 = vmatprep.subr.mxu0 0.0
      %3006 = vmatpush1.msra.mxu0 0.0
      %3007 = vmatprep.subr.mxu0 0.0
      %3008 = vmatpush1.msra.mxu0 0.0
      %3009 = vmatprep.mubr.f32.mxu0 0.0
      %v3010 = vand.u32 %v2477, 4294901760
      %3011 = vmatmul.mubr.f32.gmra.mrb[0].mxu0 %v3010
      %v3012 = vpop.f32.mrb[0].mxu0
      %v3013 = vadd.f32 %v2934, %v3012
      %v3014 = vpop.f32.mrb[0].mxu0
      %3015 = vdwg.mxu0
      %3016 = vst [vmem:[%s111] sm:$0x7f] %v3013
      %p3017 = scmp.lt.s32.totalorder %s12, 1
      %s3018 = scalar_select %p3017, %s12, 1
      %s3019 = smul.addr %s3018, 8
      %s3020 = scalar_lea.vmem %s1, %s3019
      // Predicated region
      $region25: #{tpu_custom_call.1} parent=23 // pred_check
        %p3021 = pneg %p56
      $region26: #{tpu_custom_call.1} parent=23 // pred_check_branch
        %3023 = sbr.rel (%p3021) target = $region28
      $region27: #{tpu_custom_call.1} parent=23 // pred_region
        _
      $region28: #{tpu_custom_call.1} parent=23 // pred_fallthru
        _
    $region24: #{tpu_custom_call.1} parent=5 // pred_fallthru
      _
    %p3024 = scmp.le.s32.totalorder 2, %s7
    // Predicated region
    $region29: #{tpu_custom_call.1} parent=5 // pred_check
      %p3025 = pneg %p3024
    $region30: #{tpu_custom_call.1} parent=5 // pred_check_branch
      %3027 = sbr.rel (%p3025) target = $region32
    $region31: #{tpu_custom_call.1} parent=5 // pred_region
      %s3028 = ssub.s32 %s7, 2
      // Predicated region
      $region33: #{tpu_custom_call.1} parent=31 // pred_check
        %p3029 = pneg %p62
      $region34: #{tpu_custom_call.1} parent=31 // pred_check_branch
        %3031 = sbr.rel (%p3029) target = $region36
      $region35: #{tpu_custom_call.1} parent=31 // pred_region
        %p3032 = scmp.lt.s32.totalorder %s13, 1
        %s3033 = scalar_select %p3032, %s13, 1
        %s3034 = smul.addr %s3033, 8
        %s3035 = scalar_lea.vmem %s1, %s3034
      $region36: #{tpu_custom_call.1} parent=31 // pred_fallthru
        _
    $region32: #{tpu_custom_call.1} parent=5 // pred_fallthru
      _
  $region6: #{tpu_custom_call.1} parent=0 // loop_footer
    %s11 = sadd.s32 1, %s7
  $region7: #{tpu_custom_call.1} parent=0 // loop_footer_branch
    %6 = sbr.rel target = $region3
  $region8: #{tpu_custom_call.1} parent=0 // loop_exit
    _

</llo_original>
